<compile_context>
chip_gen: v7x
topology: tpu7x:2x2x1
jax: 0.10.0
libtpu: 0.0.40
codegen_flags: <defaults>
</compile_context>

<pallas_src>
import functools

import jax
import jax.numpy as jnp
from jax.experimental import pallas as pl
from jax.experimental.pallas import tpu as pltpu


# ----------------------------- in-kernel math -------------------------------

def _layernorm(x, gamma, beta, eps=1e-5):
    mu = jnp.mean(x, axis=-1, keepdims=True)
    var = jnp.mean((x - mu) ** 2, axis=-1, keepdims=True)
    return (x - mu) * jax.lax.rsqrt(var + eps) * gamma + beta


def _attend(q, k, v, bias_ref, nb, tq, tk, num_heads):
    """Head-batched scaled-dot attention (scale already folded into q).

    q:        (nb*tq, D) f32      k, v: (nb*tk, D) f32
    bias_ref: (nb, 1|tq, tk) f32 ref, additive mask bias (0 keep / -1e9 masked)
    returns   (nb*tq, D) bf16 context (heads re-merged), ready for W_o.
    """
    d = q.shape[-1]
    dk = d // num_heads
    q4 = q.reshape(nb, tq, num_heads, dk)
    k4 = k.reshape(nb, tk, num_heads, dk)
    v4 = v.reshape(nb, tk, num_heads, dk)

    ctx_rows = []
    for i in range(nb):                          # static; nb = block_b is tiny
        qh = pltpu.einshape("qhd->hqd", q4[i]).astype(jnp.bfloat16)
        kh = pltpu.einshape("khd->hkd", k4[i]).astype(jnp.bfloat16)
        vh = pltpu.einshape("khd->hkd", v4[i]).astype(jnp.bfloat16)

        # (H, tq, tk) scores, all heads in one batched contraction.
        s = jnp.einsum("hqd,hkd->hqk", qh, kh,
                       preferred_element_type=jnp.float32)
        s = s + bias_ref[i]                      # head-invariant additive mask

        # Softmax in f32.  A fully-masked query row degenerates to a uniform
        # distribution (same as the -1e9 masked_fill reference).
        m = jnp.max(s, axis=-1, keepdims=True)
        p = jnp.exp(s - m)
        l = jnp.sum(p, axis=-1, keepdims=True)
        p = p * pl.reciprocal(l, approx=True)    # EUP divide, VALU stays free

        # (H, tq, dk) context, heads batched again; fold back to (tq, D).
        ctx = jnp.einsum("hqk,hkd->hqd", p.astype(jnp.bfloat16), vh,
                         preferred_element_type=jnp.float32)
        ctx = pltpu.einshape("hqd->qhd", ctx).reshape(tq, d)
        ctx_rows.append(ctx)

    ctx_all = ctx_rows[0] if nb == 1 else jnp.concatenate(ctx_rows, axis=0)
    return ctx_all.astype(jnp.bfloat16)


def decoder_layer_kernel(src_ref, tgt_ref, src_bias_ref, tgt_bias_ref,
                         w_self_qkv_ref, b_self_qkv_ref,
                         w_self_o_ref, b_self_o_ref,
                         w_cross_q_ref, b_cross_q_ref,
                         w_cross_kv_ref, b_cross_kv_ref,
                         w_cross_o_ref, b_cross_o_ref,
                         w_ffn1_ref, b_ffn1_ref, w_ffn2_ref, b_ffn2_ref,
                         ln_gamma_ref, ln_beta_ref,
                         out_ref, *, num_heads):
    nb, t, d = tgt_ref.shape
    _, s_len, _ = src_ref.shape

    x = tgt_ref[...].reshape(nb * t, d)                  # (nb*T, D) f32
    src16 = src_ref[...].reshape(nb * s_len, d)          # (nb*S, D) bf16

    # --- masked self-attention, pre-norm residual ---------------------------
    y = _layernorm(x, ln_gamma_ref[0], ln_beta_ref[0]).astype(jnp.bfloat16)
    qkv = jnp.dot(y, w_self_qkv_ref[...],
                  preferred_element_type=jnp.float32) + b_self_qkv_ref[...]
    q, k, v = qkv[:, :d], qkv[:, d:2 * d], qkv[:, 2 * d:]   # lane-aligned slices
    ctx = _attend(q, k, v, tgt_bias_ref, nb, t, t, num_heads)
    x = x + (jnp.dot(ctx, w_self_o_ref[...],
                     preferred_element_type=jnp.float32) + b_self_o_ref[...])

    # --- cross-attention (keys/values from encoder output) ------------------
    y = _layernorm(x, ln_gamma_ref[1], ln_beta_ref[1]).astype(jnp.bfloat16)
    q = jnp.dot(y, w_cross_q_ref[...],
                preferred_element_type=jnp.float32) + b_cross_q_ref[...]
    kv = jnp.dot(src16, w_cross_kv_ref[...],
                 preferred_element_type=jnp.float32) + b_cross_kv_ref[...]
    k, v = kv[:, :d], kv[:, d:]
    ctx = _attend(q, k, v, src_bias_ref, nb, t, s_len, num_heads)
    x = x + (jnp.dot(ctx, w_cross_o_ref[...],
                     preferred_element_type=jnp.float32) + b_cross_o_ref[...])

    # --- position-wise feed-forward ------------------------------------------
    y = _layernorm(x, ln_gamma_ref[2], ln_beta_ref[2]).astype(jnp.bfloat16)
    h = jnp.maximum(
        jnp.dot(y, w_ffn1_ref[...],
                preferred_element_type=jnp.float32) + b_ffn1_ref[...], 0.0)
    x = x + (jnp.dot(h.astype(jnp.bfloat16), w_ffn2_ref[...],
                     preferred_element_type=jnp.float32) + b_ffn2_ref[...])

    # TODO(synk): dropout layers are identity here (inference semantics).
    out_ref[...] = x.reshape(nb, t, d).astype(out_ref.dtype)


# ------------------------------ host wrapper ---------------------------------

def decoder_layer(src, target, src_mask, target_mask, params, *,
                  num_heads, block_b=1):
    B, S, D = src.shape
    _, T, _ = target.shape
    F = params["w_ffn1"].shape[-1]
    assert B % block_b == 0, "block_b must divide the batch size"
    assert D % num_heads == 0

    f32, bf16 = jnp.float32, jnp.bfloat16
    dk = D // num_heads
    scale = jnp.float32(1.0 / (dk ** 0.5))

    w_self = params["w_self"].astype(f32)
    b_self = params["b_self"].astype(f32)
    w_cross = params["w_cross"].astype(f32)
    b_cross = params["b_cross"].astype(f32)

    # Fused projection weights; attention scale folded into Wq / bq
    # (zero in-kernel cost).  MXU weights cast to bf16, biases stay f32.
    w_self_qkv = jnp.concatenate(
        [w_self[0] * scale, w_self[1], w_self[2]], axis=1).astype(bf16)   # (D, 3D)
    b_self_qkv = jnp.concatenate(
        [b_self[0] * scale, b_self[1], b_self[2]])[None, :]               # (1, 3D)
    w_self_o = w_self[3].astype(bf16)
    b_self_o = b_self[3][None, :]

    w_cross_q = (w_cross[0] * scale).astype(bf16)
    b_cross_q = (b_cross[0] * scale)[None, :]
    w_cross_kv = jnp.concatenate([w_cross[1], w_cross[2]], axis=1).astype(bf16)  # (D, 2D)
    b_cross_kv = jnp.concatenate([b_cross[1], b_cross[2]])[None, :]              # (1, 2D)
    w_cross_o = w_cross[3].astype(bf16)
    b_cross_o = b_cross[3][None, :]

    w_ffn1 = params["w_ffn1"].astype(bf16)
    b_ffn1 = params["b_ffn1"].astype(f32).reshape(1, F)
    w_ffn2 = params["w_ffn2"].astype(bf16)
    b_ffn2 = params["b_ffn2"].astype(f32).reshape(1, D)

    ln_g = params["ln_gamma"].astype(f32)
    ln_b = params["ln_beta"].astype(f32)

    src_bf = src.astype(bf16)            # only feeds the cross K/V projection

    # Head-invariant additive mask biases, computed once on the host.
    src_bias = jnp.where(src_mask.reshape(B, 1, S) > 0,
                         0.0, -1e9).astype(f32)
    tgt_bias = jnp.where(target_mask.reshape(B, T, T) > 0,
                         0.0, -1e9).astype(f32)

    def _full(shape):
        zeros = (0,) * len(shape)
        return pl.BlockSpec(shape, lambda b, _z=zeros: _z)

    grid_spec = pltpu.PrefetchScalarGridSpec(
        num_scalar_prefetch=0,
        grid=(B // block_b,),
        in_specs=[
            pl.BlockSpec((block_b, S, D), lambda b: (b, 0, 0)),   # src (bf16)
            pl.BlockSpec((block_b, T, D), lambda b: (b, 0, 0)),   # target (f32)
            pl.BlockSpec((block_b, 1, S), lambda b: (b, 0, 0)),   # src mask bias
            pl.BlockSpec((block_b, T, T), lambda b: (b, 0, 0)),   # tgt mask bias
            _full((D, 3 * D)), _full((1, 3 * D)),                 # self QKV
            _full((D, D)), _full((1, D)),                         # self Wo
            _full((D, D)), _full((1, D)),                         # cross Wq
            _full((D, 2 * D)), _full((1, 2 * D)),                 # cross KV
            _full((D, D)), _full((1, D)),                         # cross Wo
            _full((D, F)), _full((1, F)),                         # ffn layer 1
            _full((F, D)), _full((1, D)),                         # ffn layer 2
            _full((3, D)), _full((3, D)),                         # layernorm g/b
        ],
        out_specs=pl.BlockSpec((block_b, T, D), lambda b: (b, 0, 0)),
    )

    kernel = functools.partial(decoder_layer_kernel, num_heads=num_heads)
    return pl.pallas_call(
        kernel,
        out_shape=jax.ShapeDtypeStruct((B, T, D), jnp.float32),
        grid_spec=grid_spec,
        compiler_params=pltpu.CompilerParams(
            dimension_semantics=("parallel",)),
    )(src_bf, target.astype(f32), src_bias, tgt_bias,
      w_self_qkv, b_self_qkv, w_self_o, b_self_o,
      w_cross_q, b_cross_q, w_cross_kv, b_cross_kv, w_cross_o, b_cross_o,
      w_ffn1, b_ffn1, w_ffn2, b_ffn2,
      ln_g, ln_b)


# ------------------------------ pure-JAX reference ---------------------------

def decoder_layer_ref(src, target, src_mask, target_mask, params, *, num_heads):
    B, S, D = src.shape
    _, T, _ = target.shape
    src_m = src_mask.reshape(B, 1, 1, S).astype(jnp.float32)
    tgt_m = target_mask.reshape(B, 1, T, T).astype(jnp.float32)

    def ln(x, g, b):
        mu = jnp.mean(x, axis=-1, keepdims=True)
        var = jnp.mean((x - mu) ** 2, axis=-1, keepdims=True)
        return (x - mu) * jax.lax.rsqrt(var + 1e-5) * g + b

    def mha(q_in, kv_in, w, b, mask):
        dk = D // num_heads
        q = q_in @ w[0] + b[0]
        k = kv_in @ w[1] + b[1]
        v = kv_in @ w[2] + b[2]
        def split(x):
            return x.reshape(B, -1, num_heads, dk).transpose(0, 2, 1, 3)
        qh, kh, vh = split(q), split(k), split(v)
        s = jnp.einsum("bhqd,bhkd->bhqk", qh, kh) / (dk ** 0.5)
        s = jnp.where(mask > 0, s, -1e9)
        p = jax.nn.softmax(s, axis=-1)
        ctx = jnp.einsum("bhqk,bhkd->bhqd", p, vh)
        ctx = ctx.transpose(0, 2, 1, 3).reshape(B, -1, D)
        return ctx @ w[3] + b[3]

    x = target
    x = x + mha(ln(x, params["ln_gamma"][0], params["ln_beta"][0]),
                ln(x, params["ln_gamma"][0], params["ln_beta"][0]),
                params["w_self"], params["b_self"], tgt_m)
    y = ln(x, params["ln_gamma"][1], params["ln_beta"][1])
    x = x + mha(y, src, params["w_cross"], params["b_cross"], src_m)
    y = ln(x, params["ln_gamma"][2], params["ln_beta"][2])
    h = jnp.maximum(y @ params["w_ffn1"] + params["b_ffn1"][0], 0.0)
    return x + (h @ params["w_ffn2"] + params["b_ffn2"][0])


# ----------------------------------- main ------------------------------------

if __name__ == "__main__":
    # D, F multiples of 128 -> lane-dense activations and an unmasked output vst.
    B, S, T, D, H, F = 2, 8, 8, 128, 4, 256

    key = jax.random.PRNGKey(0)
    ks = jax.random.split(key, 12)
    wscale = 0.1
    params = {
        "w_self":  wscale * jax.random.normal(ks[0], (4, D, D), jnp.float32),
        "b_self":  wscale * jax.random.normal(ks[1], (4, D), jnp.float32),
        "w_cross": wscale * jax.random.normal(ks[2], (4, D, D), jnp.float32),
        "b_cross": wscale * jax.random.normal(ks[3], (4, D), jnp.float32),
        "w_ffn1":  wscale * jax.random.normal(ks[4], (D, F), jnp.float32),
        "b_ffn1":  wscale * jax.random.normal(ks[5], (1, F), jnp.float32),
        "w_ffn2":  wscale * jax.random.normal(ks[6], (F, D), jnp.float32),
        "b_ffn2":  wscale * jax.random.normal(ks[7], (1, D), jnp.float32),
        "ln_gamma": jnp.ones((3, D), jnp.float32),
        "ln_beta":  jnp.zeros((3, D), jnp.float32),
    }

    src = jax.random.normal(ks[8], (B, S, D), jnp.float32)
    target = jax.random.normal(ks[9], (B, T, D), jnp.float32)
    src_mask = jnp.ones((B, 1, 1, S), jnp.float32)                 # all valid
    causal = jnp.tril(jnp.ones((T, T), jnp.float32))
    target_mask = jnp.broadcast_to(causal, (B, 1, T, T))           # causal mask

    out = decoder_layer(src, target, src_mask, target_mask, params,
                        num_heads=H, block_b=1)
    out = jax.block_until_ready(out)

    ref = decoder_layer_ref(src, target, src_mask, target_mask, params,
                            num_heads=H)
    assert out.shape == (B, T, D)
    err = float(jnp.max(jnp.abs(out - ref)))
    # bf16 MXU inputs (f32 accumulation) -> looser tolerance than pure f32.
    assert jnp.allclose(out, ref, rtol=5e-2, atol=5e-2), err

    print("KERNEL_OK")
</pallas_src>

<mosaic_0001>
module attributes {stable_mosaic.version = 11 : i64} {
  func.func @decoder_layer_kernel(%arg0: i32, %arg1: memref<1x8x128xbf16, #tpu.memory_space<vmem>>, %arg2: memref<1x8x128xf32, #tpu.memory_space<vmem>>, %arg3: memref<1x1x8xf32, #tpu.memory_space<vmem>>, %arg4: memref<1x8x8xf32, #tpu.memory_space<vmem>>, %arg5: memref<128x384xbf16, #tpu.memory_space<vmem>>, %arg6: memref<1x384xf32, #tpu.memory_space<vmem>>, %arg7: memref<128x128xbf16, #tpu.memory_space<vmem>>, %arg8: memref<1x128xf32, #tpu.memory_space<vmem>>, %arg9: memref<128x128xbf16, #tpu.memory_space<vmem>>, %arg10: memref<1x128xf32, #tpu.memory_space<vmem>>, %arg11: memref<128x256xbf16, #tpu.memory_space<vmem>>, %arg12: memref<1x256xf32, #tpu.memory_space<vmem>>, %arg13: memref<128x128xbf16, #tpu.memory_space<vmem>>, %arg14: memref<1x128xf32, #tpu.memory_space<vmem>>, %arg15: memref<128x256xbf16, #tpu.memory_space<vmem>>, %arg16: memref<1x256xf32, #tpu.memory_space<vmem>>, %arg17: memref<256x128xbf16, #tpu.memory_space<vmem>>, %arg18: memref<1x128xf32, #tpu.memory_space<vmem>>, %arg19: memref<3x128xf32, #tpu.memory_space<vmem>>, %arg20: memref<3x128xf32, #tpu.memory_space<vmem>>, %arg21: memref<1x8x128xf32, #tpu.memory_space<vmem>>) attributes {dimension_semantics = [#tpu.dimension_semantics<parallel>], iteration_bounds = array<i64: 2>, scalar_prefetch = 0 : i64, scratch_operands = 0 : i64, tpu.core_type = #tpu.core_type<tc>, window_params = [{transform_indices = @transform_0, window_bounds = array<i64: 1, 8, 128>}, {transform_indices = @transform_1, window_bounds = array<i64: 1, 8, 128>}, {transform_indices = @transform_2, window_bounds = array<i64: 1, 1, 8>}, {transform_indices = @transform_3, window_bounds = array<i64: 1, 8, 8>}, {pipeline_mode = #tpu.pipeline_mode<synchronous>, transform_indices = @transform_4, window_bounds = array<i64: 128, 384>}, {pipeline_mode = #tpu.pipeline_mode<synchronous>, transform_indices = @transform_5, window_bounds = array<i64: 1, 384>}, {pipeline_mode = #tpu.pipeline_mode<synchronous>, transform_indices = @transform_6, window_bounds = array<i64: 128, 128>}, {pipeline_mode = #tpu.pipeline_mode<synchronous>, transform_indices = @transform_7, window_bounds = array<i64: 1, 128>}, {pipeline_mode = #tpu.pipeline_mode<synchronous>, transform_indices = @transform_8, window_bounds = array<i64: 128, 128>}, {pipeline_mode = #tpu.pipeline_mode<synchronous>, transform_indices = @transform_9, window_bounds = array<i64: 1, 128>}, {pipeline_mode = #tpu.pipeline_mode<synchronous>, transform_indices = @transform_10, window_bounds = array<i64: 128, 256>}, {pipeline_mode = #tpu.pipeline_mode<synchronous>, transform_indices = @transform_11, window_bounds = array<i64: 1, 256>}, {pipeline_mode = #tpu.pipeline_mode<synchronous>, transform_indices = @transform_12, window_bounds = array<i64: 128, 128>}, {pipeline_mode = #tpu.pipeline_mode<synchronous>, transform_indices = @transform_13, window_bounds = array<i64: 1, 128>}, {pipeline_mode = #tpu.pipeline_mode<synchronous>, transform_indices = @transform_14, window_bounds = array<i64: 128, 256>}, {pipeline_mode = #tpu.pipeline_mode<synchronous>, transform_indices = @transform_15, window_bounds = array<i64: 1, 256>}, {pipeline_mode = #tpu.pipeline_mode<synchronous>, transform_indices = @transform_16, window_bounds = array<i64: 256, 128>}, {pipeline_mode = #tpu.pipeline_mode<synchronous>, transform_indices = @transform_17, window_bounds = array<i64: 1, 128>}, {pipeline_mode = #tpu.pipeline_mode<synchronous>, transform_indices = @transform_18, window_bounds = array<i64: 3, 128>}, {pipeline_mode = #tpu.pipeline_mode<synchronous>, transform_indices = @transform_19, window_bounds = array<i64: 3, 128>}, {transform_indices = @transform_20, window_bounds = array<i64: 1, 8, 128>}]} {
    %c0 = arith.constant 0 : index
    %c0_0 = arith.constant 0 : index
    %c0_1 = arith.constant 0 : index
    %0 = vector.load %arg2[%c0, %c0_0, %c0_1] : memref<1x8x128xf32, #tpu.memory_space<vmem>>, vector<1x8x128xf32>
    %1 = vector.shape_cast %0 : vector<1x8x128xf32> to vector<8x128xf32>
    %c0_2 = arith.constant 0 : index
    %c0_3 = arith.constant 0 : index
    %c0_4 = arith.constant 0 : index
    %2 = vector.load %arg1[%c0_2, %c0_3, %c0_4] : memref<1x8x128xbf16, #tpu.memory_space<vmem>>, vector<1x8x128xbf16>
    %3 = vector.shape_cast %2 : vector<1x8x128xbf16> to vector<8x128xbf16>
    %c0_5 = arith.constant 0 : index
    %c0_6 = arith.constant 0 : index
    %4 = vector.load %arg19[%c0_5, %c0_6] : memref<3x128xf32, #tpu.memory_space<vmem>>, vector<1x128xf32>
    %5 = vector.shape_cast %4 : vector<1x128xf32> to vector<128xf32>
    %c0_7 = arith.constant 0 : index
    %c0_8 = arith.constant 0 : index
    %6 = vector.load %arg20[%c0_7, %c0_8] : memref<3x128xf32, #tpu.memory_space<vmem>>, vector<1x128xf32>
    %7 = vector.shape_cast %6 : vector<1x128xf32> to vector<128xf32>
    %cst = arith.constant dense<0.000000e+00> : vector<8xf32>
    %8 = vector.multi_reduction <add>, %1, %cst [1] : vector<8x128xf32> to vector<8xf32>
    %9 = vector.shape_cast %8 : vector<8xf32> to vector<8x1xf32>
    %cst_9 = arith.constant 1.280000e+02 : f32
    %10 = vector.broadcast %cst_9 : f32 to vector<8x1xf32>
    %11 = arith.divf %9, %10 : vector<8x1xf32>
    %12 = vector.broadcast %11 : vector<8x1xf32> to vector<8x128xf32>
    %13 = arith.subf %1, %12 : vector<8x128xf32>
    %14 = arith.mulf %13, %13 : vector<8x128xf32>
    %cst_10 = arith.constant dense<0.000000e+00> : vector<8xf32>
    %15 = vector.multi_reduction <add>, %14, %cst_10 [1] : vector<8x128xf32> to vector<8xf32>
    %16 = vector.shape_cast %15 : vector<8xf32> to vector<8x1xf32>
    %cst_11 = arith.constant 1.280000e+02 : f32
    %17 = vector.broadcast %cst_11 : f32 to vector<8x1xf32>
    %18 = arith.divf %16, %17 : vector<8x1xf32>
    %19 = vector.broadcast %11 : vector<8x1xf32> to vector<8x128xf32>
    %20 = arith.subf %1, %19 : vector<8x128xf32>
    %cst_12 = arith.constant 9.99999974E-6 : f32
    %21 = vector.broadcast %cst_12 : f32 to vector<8x1xf32>
    %22 = arith.addf %18, %21 : vector<8x1xf32>
    %23 = math.rsqrt %22 : vector<8x1xf32>
    %24 = vector.broadcast %23 : vector<8x1xf32> to vector<8x128xf32>
    %25 = arith.mulf %20, %24 : vector<8x128xf32>
    %26 = vector.shape_cast %5 : vector<128xf32> to vector<1x128xf32>
    %27 = vector.broadcast %26 : vector<1x128xf32> to vector<8x128xf32>
    %28 = arith.mulf %25, %27 : vector<8x128xf32>
    %29 = vector.shape_cast %7 : vector<128xf32> to vector<1x128xf32>
    %30 = vector.broadcast %29 : vector<1x128xf32> to vector<8x128xf32>
    %31 = arith.addf %28, %30 : vector<8x128xf32>
    %32 = arith.truncf %31 : vector<8x128xf32> to vector<8x128xbf16>
    %c0_13 = arith.constant 0 : index
    %c0_14 = arith.constant 0 : index
    %33 = vector.load %arg5[%c0_13, %c0_14] : memref<128x384xbf16, #tpu.memory_space<vmem>>, vector<128x384xbf16>
    %cst_15 = arith.constant dense<0.000000e+00> : vector<8x384xf32>
    %34 = tpu.matmul %32, %33, %cst_15 {dimension_numbers = #tpu.dot_dimension_numbers<[1], [0], [0], [1], [0, 0, 1, 1], [], []>} : vector<8x128xbf16>, vector<128x384xbf16>, vector<8x384xf32> -> vector<8x384xf32>
    %c0_16 = arith.constant 0 : index
    %c0_17 = arith.constant 0 : index
    %35 = vector.load %arg6[%c0_16, %c0_17] : memref<1x384xf32, #tpu.memory_space<vmem>>, vector<1x384xf32>
    %36 = vector.broadcast %35 : vector<1x384xf32> to vector<8x384xf32>
    %37 = arith.addf %34, %36 : vector<8x384xf32>
    %38 = vector.extract_strided_slice %37 {offsets = [0, 0], sizes = [8, 128], strides = [1, 1]} : vector<8x384xf32> to vector<8x128xf32>
    %39 = vector.extract_strided_slice %37 {offsets = [0, 128], sizes = [8, 128], strides = [1, 1]} : vector<8x384xf32> to vector<8x128xf32>
    %40 = vector.extract_strided_slice %37 {offsets = [0, 256], sizes = [8, 128], strides = [1, 1]} : vector<8x384xf32> to vector<8x128xf32>
    %41 = vector.shape_cast %38 : vector<8x128xf32> to vector<1x8x4x32xf32>
    %42 = vector.shape_cast %39 : vector<8x128xf32> to vector<1x8x4x32xf32>
    %43 = vector.shape_cast %40 : vector<8x128xf32> to vector<1x8x4x32xf32>
    %44 = vector.shape_cast %41 : vector<1x8x4x32xf32> to vector<8x4x32xf32>
    %45 = tpu.transpose %44, [1, 0, 2] : vector<8x4x32xf32> -> vector<4x8x32xf32>
    %46 = arith.truncf %45 : vector<4x8x32xf32> to vector<4x8x32xbf16>
    %47 = vector.shape_cast %42 : vector<1x8x4x32xf32> to vector<8x4x32xf32>
    %48 = tpu.transpose %47, [1, 0, 2] : vector<8x4x32xf32> -> vector<4x8x32xf32>
    %49 = arith.truncf %48 : vector<4x8x32xf32> to vector<4x8x32xbf16>
    %50 = vector.shape_cast %43 : vector<1x8x4x32xf32> to vector<8x4x32xf32>
    %51 = tpu.transpose %50, [1, 0, 2] : vector<8x4x32xf32> -> vector<4x8x32xf32>
    %52 = arith.truncf %51 : vector<4x8x32xf32> to vector<4x8x32xbf16>
    "tpu.trace_start"() <{level = 10 : i32, message = "hqd,hkd->hqk"}> : () -> ()
    %cst_18 = arith.constant dense<0.000000e+00> : vector<4x8x8xf32>
    %53 = tpu.matmul %46, %49, %cst_18 {dimension_numbers = #tpu.dot_dimension_numbers<[2], [2], [1], [1], [0, 0, 0, 1, 1, 1], [0], [0]>} : vector<4x8x32xbf16>, vector<4x8x32xbf16>, vector<4x8x8xf32> -> vector<4x8x8xf32>
    "tpu.trace_stop"() : () -> ()
    %c0_19 = arith.constant 0 : index
    %c0_20 = arith.constant 0 : index
    %c0_21 = arith.constant 0 : index
    %54 = vector.load %arg4[%c0_19, %c0_20, %c0_21] : memref<1x8x8xf32, #tpu.memory_space<vmem>>, vector<1x8x8xf32>
    %55 = vector.shape_cast %54 : vector<1x8x8xf32> to vector<8x8xf32>
    %56 = vector.shape_cast %55 : vector<8x8xf32> to vector<1x8x8xf32>
    %57 = vector.broadcast %56 : vector<1x8x8xf32> to vector<4x8x8xf32>
    %58 = arith.addf %53, %57 : vector<4x8x8xf32>
    %cst_22 = arith.constant dense<0xFF800000> : vector<4x8xf32>
    %59 = vector.multi_reduction <maximumf>, %58, %cst_22 [2] : vector<4x8x8xf32> to vector<4x8xf32>
    %60 = vector.shape_cast %59 : vector<4x8xf32> to vector<4x8x1xf32>
    %61 = vector.broadcast %60 : vector<4x8x1xf32> to vector<4x8x8xf32>
    %62 = arith.subf %58, %61 : vector<4x8x8xf32>
    %63 = math.exp %62 : vector<4x8x8xf32>
    %cst_23 = arith.constant dense<0.000000e+00> : vector<4x8xf32>
    %64 = vector.multi_reduction <add>, %63, %cst_23 [2] : vector<4x8x8xf32> to vector<4x8xf32>
    %65 = vector.shape_cast %64 : vector<4x8xf32> to vector<4x8x1xf32>
    %66 = tpu.reciprocal %65 {approx = true} : vector<4x8x1xf32> -> vector<4x8x1xf32>
    %67 = vector.broadcast %66 : vector<4x8x1xf32> to vector<4x8x8xf32>
    %68 = arith.mulf %63, %67 : vector<4x8x8xf32>
    %69 = arith.truncf %68 : vector<4x8x8xf32> to vector<4x8x8xbf16>
    "tpu.trace_start"() <{level = 10 : i32, message = "hqk,hkd->hqd"}> : () -> ()
    %cst_24 = arith.constant dense<0.000000e+00> : vector<4x8x32xf32>
    %70 = tpu.matmul %69, %52, %cst_24 {dimension_numbers = #tpu.dot_dimension_numbers<[2], [1], [1], [2], [0, 0, 0, 1, 1, 2], [0], [0]>} : vector<4x8x8xbf16>, vector<4x8x32xbf16>, vector<4x8x32xf32> -> vector<4x8x32xf32>
    "tpu.trace_stop"() : () -> ()
    %71 = tpu.transpose %70, [1, 0, 2] : vector<4x8x32xf32> -> vector<8x4x32xf32>
    %72 = vector.shape_cast %71 : vector<8x4x32xf32> to vector<8x128xf32>
    %73 = arith.truncf %72 : vector<8x128xf32> to vector<8x128xbf16>
    %c0_25 = arith.constant 0 : index
    %c0_26 = arith.constant 0 : index
    %74 = vector.load %arg7[%c0_25, %c0_26] : memref<128x128xbf16, #tpu.memory_space<vmem>>, vector<128x128xbf16>
    %cst_27 = arith.constant dense<0.000000e+00> : vector<8x128xf32>
    %75 = tpu.matmul %73, %74, %cst_27 {dimension_numbers = #tpu.dot_dimension_numbers<[1], [0], [0], [1], [0, 0, 1, 1], [], []>} : vector<8x128xbf16>, vector<128x128xbf16>, vector<8x128xf32> -> vector<8x128xf32>
    %c0_28 = arith.constant 0 : index
    %c0_29 = arith.constant 0 : index
    %76 = vector.load %arg8[%c0_28, %c0_29] : memref<1x128xf32, #tpu.memory_space<vmem>>, vector<1x128xf32>
    %77 = vector.broadcast %76 : vector<1x128xf32> to vector<8x128xf32>
    %78 = arith.addf %75, %77 : vector<8x128xf32>
    %79 = arith.addf %1, %78 : vector<8x128xf32>
    %c1 = arith.constant 1 : index
    %c0_30 = arith.constant 0 : index
    %80 = vector.load %arg19[%c1, %c0_30] : memref<3x128xf32, #tpu.memory_space<vmem>>, vector<1x128xf32>
    %81 = vector.shape_cast %80 : vector<1x128xf32> to vector<128xf32>
    %c1_31 = arith.constant 1 : index
    %c0_32 = arith.constant 0 : index
    %82 = vector.load %arg20[%c1_31, %c0_32] : memref<3x128xf32, #tpu.memory_space<vmem>>, vector<1x128xf32>
    %83 = vector.shape_cast %82 : vector<1x128xf32> to vector<128xf32>
    %cst_33 = arith.constant dense<0.000000e+00> : vector<8xf32>
    %84 = vector.multi_reduction <add>, %79, %cst_33 [1] : vector<8x128xf32> to vector<8xf32>
    %85 = vector.shape_cast %84 : vector<8xf32> to vector<8x1xf32>
    %cst_34 = arith.constant 1.280000e+02 : f32
    %86 = vector.broadcast %cst_34 : f32 to vector<8x1xf32>
    %87 = arith.divf %85, %86 : vector<8x1xf32>
    %88 = vector.broadcast %87 : vector<8x1xf32> to vector<8x128xf32>
    %89 = arith.subf %79, %88 : vector<8x128xf32>
    %90 = arith.mulf %89, %89 : vector<8x128xf32>
    %cst_35 = arith.constant dense<0.000000e+00> : vector<8xf32>
    %91 = vector.multi_reduction <add>, %90, %cst_35 [1] : vector<8x128xf32> to vector<8xf32>
    %92 = vector.shape_cast %91 : vector<8xf32> to vector<8x1xf32>
    %cst_36 = arith.constant 1.280000e+02 : f32
    %93 = vector.broadcast %cst_36 : f32 to vector<8x1xf32>
    %94 = arith.divf %92, %93 : vector<8x1xf32>
    %95 = vector.broadcast %87 : vector<8x1xf32> to vector<8x128xf32>
    %96 = arith.subf %79, %95 : vector<8x128xf32>
    %cst_37 = arith.constant 9.99999974E-6 : f32
    %97 = vector.broadcast %cst_37 : f32 to vector<8x1xf32>
    %98 = arith.addf %94, %97 : vector<8x1xf32>
    %99 = math.rsqrt %98 : vector<8x1xf32>
    %100 = vector.broadcast %99 : vector<8x1xf32> to vector<8x128xf32>
    %101 = arith.mulf %96, %100 : vector<8x128xf32>
    %102 = vector.shape_cast %81 : vector<128xf32> to vector<1x128xf32>
    %103 = vector.broadcast %102 : vector<1x128xf32> to vector<8x128xf32>
    %104 = arith.mulf %101, %103 : vector<8x128xf32>
    %105 = vector.shape_cast %83 : vector<128xf32> to vector<1x128xf32>
    %106 = vector.broadcast %105 : vector<1x128xf32> to vector<8x128xf32>
    %107 = arith.addf %104, %106 : vector<8x128xf32>
    %108 = arith.truncf %107 : vector<8x128xf32> to vector<8x128xbf16>
    %c0_38 = arith.constant 0 : index
    %c0_39 = arith.constant 0 : index
    %109 = vector.load %arg9[%c0_38, %c0_39] : memref<128x128xbf16, #tpu.memory_space<vmem>>, vector<128x128xbf16>
    %cst_40 = arith.constant dense<0.000000e+00> : vector<8x128xf32>
    %110 = tpu.matmul %108, %109, %cst_40 {dimension_numbers = #tpu.dot_dimension_numbers<[1], [0], [0], [1], [0, 0, 1, 1], [], []>} : vector<8x128xbf16>, vector<128x128xbf16>, vector<8x128xf32> -> vector<8x128xf32>
    %c0_41 = arith.constant 0 : index
    %c0_42 = arith.constant 0 : index
    %111 = vector.load %arg10[%c0_41, %c0_42] : memref<1x128xf32, #tpu.memory_space<vmem>>, vector<1x128xf32>
    %112 = vector.broadcast %111 : vector<1x128xf32> to vector<8x128xf32>
    %113 = arith.addf %110, %112 : vector<8x128xf32>
    %c0_43 = arith.constant 0 : index
    %c0_44 = arith.constant 0 : index
    %114 = vector.load %arg11[%c0_43, %c0_44] : memref<128x256xbf16, #tpu.memory_space<vmem>>, vector<128x256xbf16>
    %cst_45 = arith.constant dense<0.000000e+00> : vector<8x256xf32>
    %115 = tpu.matmul %3, %114, %cst_45 {dimension_numbers = #tpu.dot_dimension_numbers<[1], [0], [0], [1], [0, 0, 1, 1], [], []>} : vector<8x128xbf16>, vector<128x256xbf16>, vector<8x256xf32> -> vector<8x256xf32>
    %c0_46 = arith.constant 0 : index
    %c0_47 = arith.constant 0 : index
    %116 = vector.load %arg12[%c0_46, %c0_47] : memref<1x256xf32, #tpu.memory_space<vmem>>, vector<1x256xf32>
    %117 = vector.broadcast %116 : vector<1x256xf32> to vector<8x256xf32>
    %118 = arith.addf %115, %117 : vector<8x256xf32>
    %119 = vector.extract_strided_slice %118 {offsets = [0, 0], sizes = [8, 128], strides = [1, 1]} : vector<8x256xf32> to vector<8x128xf32>
    %120 = vector.extract_strided_slice %118 {offsets = [0, 128], sizes = [8, 128], strides = [1, 1]} : vector<8x256xf32> to vector<8x128xf32>
    %121 = vector.shape_cast %113 : vector<8x128xf32> to vector<1x8x4x32xf32>
    %122 = vector.shape_cast %119 : vector<8x128xf32> to vector<1x8x4x32xf32>
    %123 = vector.shape_cast %120 : vector<8x128xf32> to vector<1x8x4x32xf32>
    %124 = vector.shape_cast %121 : vector<1x8x4x32xf32> to vector<8x4x32xf32>
    %125 = tpu.transpose %124, [1, 0, 2] : vector<8x4x32xf32> -> vector<4x8x32xf32>
    %126 = arith.truncf %125 : vector<4x8x32xf32> to vector<4x8x32xbf16>
    %127 = vector.shape_cast %122 : vector<1x8x4x32xf32> to vector<8x4x32xf32>
    %128 = tpu.transpose %127, [1, 0, 2] : vector<8x4x32xf32> -> vector<4x8x32xf32>
    %129 = arith.truncf %128 : vector<4x8x32xf32> to vector<4x8x32xbf16>
    %130 = vector.shape_cast %123 : vector<1x8x4x32xf32> to vector<8x4x32xf32>
    %131 = tpu.transpose %130, [1, 0, 2] : vector<8x4x32xf32> -> vector<4x8x32xf32>
    %132 = arith.truncf %131 : vector<4x8x32xf32> to vector<4x8x32xbf16>
    "tpu.trace_start"() <{level = 10 : i32, message = "hqd,hkd->hqk"}> : () -> ()
    %cst_48 = arith.constant dense<0.000000e+00> : vector<4x8x8xf32>
    %133 = tpu.matmul %126, %129, %cst_48 {dimension_numbers = #tpu.dot_dimension_numbers<[2], [2], [1], [1], [0, 0, 0, 1, 1, 1], [0], [0]>} : vector<4x8x32xbf16>, vector<4x8x32xbf16>, vector<4x8x8xf32> -> vector<4x8x8xf32>
    "tpu.trace_stop"() : () -> ()
    %c0_49 = arith.constant 0 : index
    %c0_50 = arith.constant 0 : index
    %c0_51 = arith.constant 0 : index
    %134 = vector.load %arg3[%c0_49, %c0_50, %c0_51] : memref<1x1x8xf32, #tpu.memory_space<vmem>>, vector<1x1x8xf32>
    %135 = vector.shape_cast %134 : vector<1x1x8xf32> to vector<1x8xf32>
    %136 = vector.shape_cast %135 : vector<1x8xf32> to vector<1x1x8xf32>
    %137 = vector.broadcast %136 : vector<1x1x8xf32> to vector<4x8x8xf32>
    %138 = arith.addf %133, %137 : vector<4x8x8xf32>
    %cst_52 = arith.constant dense<0xFF800000> : vector<4x8xf32>
    %139 = vector.multi_reduction <maximumf>, %138, %cst_52 [2] : vector<4x8x8xf32> to vector<4x8xf32>
    %140 = vector.shape_cast %139 : vector<4x8xf32> to vector<4x8x1xf32>
    %141 = vector.broadcast %140 : vector<4x8x1xf32> to vector<4x8x8xf32>
    %142 = arith.subf %138, %141 : vector<4x8x8xf32>
    %143 = math.exp %142 : vector<4x8x8xf32>
    %cst_53 = arith.constant dense<0.000000e+00> : vector<4x8xf32>
    %144 = vector.multi_reduction <add>, %143, %cst_53 [2] : vector<4x8x8xf32> to vector<4x8xf32>
    %145 = vector.shape_cast %144 : vector<4x8xf32> to vector<4x8x1xf32>
    %146 = tpu.reciprocal %145 {approx = true} : vector<4x8x1xf32> -> vector<4x8x1xf32>
    %147 = vector.broadcast %146 : vector<4x8x1xf32> to vector<4x8x8xf32>
    %148 = arith.mulf %143, %147 : vector<4x8x8xf32>
    %149 = arith.truncf %148 : vector<4x8x8xf32> to vector<4x8x8xbf16>
    "tpu.trace_start"() <{level = 10 : i32, message = "hqk,hkd->hqd"}> : () -> ()
    %cst_54 = arith.constant dense<0.000000e+00> : vector<4x8x32xf32>
    %150 = tpu.matmul %149, %132, %cst_54 {dimension_numbers = #tpu.dot_dimension_numbers<[2], [1], [1], [2], [0, 0, 0, 1, 1, 2], [0], [0]>} : vector<4x8x8xbf16>, vector<4x8x32xbf16>, vector<4x8x32xf32> -> vector<4x8x32xf32>
    "tpu.trace_stop"() : () -> ()
    %151 = tpu.transpose %150, [1, 0, 2] : vector<4x8x32xf32> -> vector<8x4x32xf32>
    %152 = vector.shape_cast %151 : vector<8x4x32xf32> to vector<8x128xf32>
    %153 = arith.truncf %152 : vector<8x128xf32> to vector<8x128xbf16>
    %c0_55 = arith.constant 0 : index
    %c0_56 = arith.constant 0 : index
    %154 = vector.load %arg13[%c0_55, %c0_56] : memref<128x128xbf16, #tpu.memory_space<vmem>>, vector<128x128xbf16>
    %cst_57 = arith.constant dense<0.000000e+00> : vector<8x128xf32>
    %155 = tpu.matmul %153, %154, %cst_57 {dimension_numbers = #tpu.dot_dimension_numbers<[1], [0], [0], [1], [0, 0, 1, 1], [], []>} : vector<8x128xbf16>, vector<128x128xbf16>, vector<8x128xf32> -> vector<8x128xf32>
    %c0_58 = arith.constant 0 : index
    %c0_59 = arith.constant 0 : index
    %156 = vector.load %arg14[%c0_58, %c0_59] : memref<1x128xf32, #tpu.memory_space<vmem>>, vector<1x128xf32>
    %157 = vector.broadcast %156 : vector<1x128xf32> to vector<8x128xf32>
    %158 = arith.addf %155, %157 : vector<8x128xf32>
    %159 = arith.addf %79, %158 : vector<8x128xf32>
    %c2 = arith.constant 2 : index
    %c0_60 = arith.constant 0 : index
    %160 = vector.load %arg19[%c2, %c0_60] : memref<3x128xf32, #tpu.memory_space<vmem>>, vector<1x128xf32>
    %161 = vector.shape_cast %160 : vector<1x128xf32> to vector<128xf32>
    %c2_61 = arith.constant 2 : index
    %c0_62 = arith.constant 0 : index
    %162 = vector.load %arg20[%c2_61, %c0_62] : memref<3x128xf32, #tpu.memory_space<vmem>>, vector<1x128xf32>
    %163 = vector.shape_cast %162 : vector<1x128xf32> to vector<128xf32>
    %cst_63 = arith.constant dense<0.000000e+00> : vector<8xf32>
    %164 = vector.multi_reduction <add>, %159, %cst_63 [1] : vector<8x128xf32> to vector<8xf32>
    %165 = vector.shape_cast %164 : vector<8xf32> to vector<8x1xf32>
    %cst_64 = arith.constant 1.280000e+02 : f32
    %166 = vector.broadcast %cst_64 : f32 to vector<8x1xf32>
    %167 = arith.divf %165, %166 : vector<8x1xf32>
    %168 = vector.broadcast %167 : vector<8x1xf32> to vector<8x128xf32>
    %169 = arith.subf %159, %168 : vector<8x128xf32>
    %170 = arith.mulf %169, %169 : vector<8x128xf32>
    %cst_65 = arith.constant dense<0.000000e+00> : vector<8xf32>
    %171 = vector.multi_reduction <add>, %170, %cst_65 [1] : vector<8x128xf32> to vector<8xf32>
    %172 = vector.shape_cast %171 : vector<8xf32> to vector<8x1xf32>
    %cst_66 = arith.constant 1.280000e+02 : f32
    %173 = vector.broadcast %cst_66 : f32 to vector<8x1xf32>
    %174 = arith.divf %172, %173 : vector<8x1xf32>
    %175 = vector.broadcast %167 : vector<8x1xf32> to vector<8x128xf32>
    %176 = arith.subf %159, %175 : vector<8x128xf32>
    %cst_67 = arith.constant 9.99999974E-6 : f32
    %177 = vector.broadcast %cst_67 : f32 to vector<8x1xf32>
    %178 = arith.addf %174, %177 : vector<8x1xf32>
    %179 = math.rsqrt %178 : vector<8x1xf32>
    %180 = vector.broadcast %179 : vector<8x1xf32> to vector<8x128xf32>
    %181 = arith.mulf %176, %180 : vector<8x128xf32>
    %182 = vector.shape_cast %161 : vector<128xf32> to vector<1x128xf32>
    %183 = vector.broadcast %182 : vector<1x128xf32> to vector<8x128xf32>
    %184 = arith.mulf %181, %183 : vector<8x128xf32>
    %185 = vector.shape_cast %163 : vector<128xf32> to vector<1x128xf32>
    %186 = vector.broadcast %185 : vector<1x128xf32> to vector<8x128xf32>
    %187 = arith.addf %184, %186 : vector<8x128xf32>
    %188 = arith.truncf %187 : vector<8x128xf32> to vector<8x128xbf16>
    %c0_68 = arith.constant 0 : index
    %c0_69 = arith.constant 0 : index
    %189 = vector.load %arg15[%c0_68, %c0_69] : memref<128x256xbf16, #tpu.memory_space<vmem>>, vector<128x256xbf16>
    %cst_70 = arith.constant dense<0.000000e+00> : vector<8x256xf32>
    %190 = tpu.matmul %188, %189, %cst_70 {dimension_numbers = #tpu.dot_dimension_numbers<[1], [0], [0], [1], [0, 0, 1, 1], [], []>} : vector<8x128xbf16>, vector<128x256xbf16>, vector<8x256xf32> -> vector<8x256xf32>
    %c0_71 = arith.constant 0 : index
    %c0_72 = arith.constant 0 : index
    %191 = vector.load %arg16[%c0_71, %c0_72] : memref<1x256xf32, #tpu.memory_space<vmem>>, vector<1x256xf32>
    %192 = vector.broadcast %191 : vector<1x256xf32> to vector<8x256xf32>
    %193 = arith.addf %190, %192 : vector<8x256xf32>
    %cst_73 = arith.constant 0.000000e+00 : f32
    %194 = vector.broadcast %cst_73 : f32 to vector<8x256xf32>
    %195 = arith.maximumf %193, %194 : vector<8x256xf32>
    %196 = arith.truncf %195 : vector<8x256xf32> to vector<8x256xbf16>
    %c0_74 = arith.constant 0 : index
    %c0_75 = arith.constant 0 : index
    %197 = vector.load %arg17[%c0_74, %c0_75] : memref<256x128xbf16, #tpu.memory_space<vmem>>, vector<256x128xbf16>
    %cst_76 = arith.constant dense<0.000000e+00> : vector<8x128xf32>
    %198 = tpu.matmul %196, %197, %cst_76 {dimension_numbers = #tpu.dot_dimension_numbers<[1], [0], [0], [1], [0, 0, 1, 1], [], []>} : vector<8x256xbf16>, vector<256x128xbf16>, vector<8x128xf32> -> vector<8x128xf32>
    %c0_77 = arith.constant 0 : index
    %c0_78 = arith.constant 0 : index
    %199 = vector.load %arg18[%c0_77, %c0_78] : memref<1x128xf32, #tpu.memory_space<vmem>>, vector<1x128xf32>
    %200 = vector.broadcast %199 : vector<1x128xf32> to vector<8x128xf32>
    %201 = arith.addf %198, %200 : vector<8x128xf32>
    %202 = arith.addf %159, %201 : vector<8x128xf32>
    %203 = vector.shape_cast %202 : vector<8x128xf32> to vector<1x8x128xf32>
    %c0_79 = arith.constant 0 : index
    %c0_80 = arith.constant 0 : index
    %c0_81 = arith.constant 0 : index
    %204 = vector.load %arg21[%c0_79, %c0_80, %c0_81] : memref<1x8x128xf32, #tpu.memory_space<vmem>>, vector<1x8x128xf32>
    tpu.vector_store %arg21[%c0_79, %c0_80, %c0_81], %203 {strides = array<i32>} : memref<1x8x128xf32, #tpu.memory_space<vmem>>, vector<1x8x128xf32>,
    return
  }
  func.func @transform_0(%arg0: i32) -> (i32, i32, i32) {
    %c0_i32 = arith.constant 0 : i32
    %c0_i32_0 = arith.constant 0 : i32
    %c0_i32_1 = arith.constant 0 : i32
    return %arg0, %c0_i32, %c0_i32_0 : i32, i32, i32
  }
  func.func @transform_1(%arg0: i32) -> (i32, i32, i32) {
    %c0_i32 = arith.constant 0 : i32
    %c0_i32_0 = arith.constant 0 : i32
    %c0_i32_1 = arith.constant 0 : i32
    return %arg0, %c0_i32, %c0_i32_0 : i32, i32, i32
  }
  func.func @transform_2(%arg0: i32) -> (i32, i32, i32) {
    %c0_i32 = arith.constant 0 : i32
    %c0_i32_0 = arith.constant 0 : i32
    %c0_i32_1 = arith.constant 0 : i32
    return %arg0, %c0_i32, %c0_i32_0 : i32, i32, i32
  }
  func.func @transform_3(%arg0: i32) -> (i32, i32, i32) {
    %c0_i32 = arith.constant 0 : i32
    %c0_i32_0 = arith.constant 0 : i32
    %c0_i32_1 = arith.constant 0 : i32
    return %arg0, %c0_i32, %c0_i32_0 : i32, i32, i32
  }
  func.func @transform_4(%arg0: i32) -> (i32, i32) {
    %c0_i32 = arith.constant 0 : i32
    %c0_i32_0 = arith.constant 0 : i32
    %c0_i32_1 = arith.constant 0 : i32
    return %c0_i32, %c0_i32_0 : i32, i32
  }
  func.func @transform_5(%arg0: i32) -> (i32, i32) {
    %c0_i32 = arith.constant 0 : i32
    %c0_i32_0 = arith.constant 0 : i32
    %c0_i32_1 = arith.constant 0 : i32
    return %c0_i32, %c0_i32_0 : i32, i32
  }
  func.func @transform_6(%arg0: i32) -> (i32, i32) {
    %c0_i32 = arith.constant 0 : i32
    %c0_i32_0 = arith.constant 0 : i32
    %c0_i32_1 = arith.constant 0 : i32
    return %c0_i32, %c0_i32_0 : i32, i32
  }
  func.func @transform_7(%arg0: i32) -> (i32, i32) {
    %c0_i32 = arith.constant 0 : i32
    %c0_i32_0 = arith.constant 0 : i32
    %c0_i32_1 = arith.constant 0 : i32
    return %c0_i32, %c0_i32_0 : i32, i32
  }
  func.func @transform_8(%arg0: i32) -> (i32, i32) {
    %c0_i32 = arith.constant 0 : i32
    %c0_i32_0 = arith.constant 0 : i32
    %c0_i32_1 = arith.constant 0 : i32
    return %c0_i32, %c0_i32_0 : i32, i32
  }
  func.func @transform_9(%arg0: i32) -> (i32, i32) {
    %c0_i32 = arith.constant 0 : i32
    %c0_i32_0 = arith.constant 0 : i32
    %c0_i32_1 = arith.constant 0 : i32
    return %c0_i32, %c0_i32_0 : i32, i32
  }
  func.func @transform_10(%arg0: i32) -> (i32, i32) {
    %c0_i32 = arith.constant 0 : i32
    %c0_i32_0 = arith.constant 0 : i32
    %c0_i32_1 = arith.constant 0 : i32
    return %c0_i32, %c0_i32_0 : i32, i32
  }
  func.func @transform_11(%arg0: i32) -> (i32, i32) {
    %c0_i32 = arith.constant 0 : i32
    %c0_i32_0 = arith.constant 0 : i32
    %c0_i32_1 = arith.constant 0 : i32
    return %c0_i32, %c0_i32_0 : i32, i32
  }
  func.func @transform_12(%arg0: i32) -> (i32, i32) {
    %c0_i32 = arith.constant 0 : i32
    %c0_i32_0 = arith.constant 0 : i32
    %c0_i32_1 = arith.constant 0 : i32
    return %c0_i32, %c0_i32_0 : i32, i32
  }
  func.func @transform_13(%arg0: i32) -> (i32, i32) {
    %c0_i32 = arith.constant 0 : i32
    %c0_i32_0 = arith.constant 0 : i32
    %c0_i32_1 = arith.constant 0 : i32
    return %c0_i32, %c0_i32_0 : i32, i32
  }
  func.func @transform_14(%arg0: i32) -> (i32, i32) {
    %c0_i32 = arith.constant 0 : i32
    %c0_i32_0 = arith.constant 0 : i32
    %c0_i32_1 = arith.constant 0 : i32
    return %c0_i32, %c0_i32_0 : i32, i32
  }
  func.func @transform_15(%arg0: i32) -> (i32, i32) {
    %c0_i32 = arith.constant 0 : i32
    %c0_i32_0 = arith.constant 0 : i32
    %c0_i32_1 = arith.constant 0 : i32
    return %c0_i32, %c0_i32_0 : i32, i32
  }
  func.func @transform_16(%arg0: i32) -> (i32, i32) {
    %c0_i32 = arith.constant 0 : i32
    %c0_i32_0 = arith.constant 0 : i32
    %c0_i32_1 = arith.constant 0 : i32
    return %c0_i32, %c0_i32_0 : i32, i32
  }
  func.func @transform_17(%arg0: i32) -> (i32, i32) {
    %c0_i32 = arith.constant 0 : i32
    %c0_i32_0 = arith.constant 0 : i32
    %c0_i32_1 = arith.constant 0 : i32
    return %c0_i32, %c0_i32_0 : i32, i32
  }
  func.func @transform_18(%arg0: i32) -> (i32, i32) {
    %c0_i32 = arith.constant 0 : i32
    %c0_i32_0 = arith.constant 0 : i32
    %c0_i32_1 = arith.constant 0 : i32
    return %c0_i32, %c0_i32_0 : i32, i32
  }
  func.func @transform_19(%arg0: i32) -> (i32, i32) {
    %c0_i32 = arith.constant 0 : i32
    %c0_i32_0 = arith.constant 0 : i32
    %c0_i32_1 = arith.constant 0 : i32
    return %c0_i32, %c0_i32_0 : i32, i32
  }
  func.func @transform_20(%arg0: i32) -> (i32, i32, i32) {
    %c0_i32 = arith.constant 0 : i32
    %c0_i32_0 = arith.constant 0 : i32
    %c0_i32_1 = arith.constant 0 : i32
    return %arg0, %c0_i32, %c0_i32_0 : i32, i32, i32
  }
}

</mosaic_0001>

<llo_original>
// kernel: tpu_custom_call.1
$region0: #{tpu_custom_call.1}
  #allocation0 [shape = 'u32[]', space=smem, size = 0x4, offset = 0x4, fixed_abs, tag = 'smem constant byte address 0x4 - core index']
  #allocation1 [shape = 'u32[144,128]{1,0:T(1,128)}', space=vmem, size = 0x12000, scoped, tag = 'internal scratch']
  %s0 = inlined_call_operand.hbm [shape: bf16[2,8,128], index: 0, kind: input, shape index: {}]
  %s1 = inlined_call_operand.hbm [shape: f32[2,8,128], index: 1, kind: input, shape index: {}]
  %s2 = inlined_call_operand.hbm [shape: f32[2,1,8], index: 2, kind: input, shape index: {}]
  %s3 = inlined_call_operand.hbm [shape: f32[2,8,8], index: 3, kind: input, shape index: {}]
  %s4 = inlined_call_operand.hbm [shape: bf16[128,384], index: 4, kind: input, shape index: {}]
  %s5 = inlined_call_operand.vmem [shape: f32[1,384], index: 5, kind: input, shape index: {}]
  %s6 = inlined_call_operand.hbm [shape: bf16[128,128], index: 6, kind: input, shape index: {}]
  %s7 = inlined_call_operand.vmem [shape: f32[1,128], index: 7, kind: input, shape index: {}]
  %s8 = inlined_call_operand.hbm [shape: bf16[128,128], index: 8, kind: input, shape index: {}]
  %s9 = inlined_call_operand.vmem [shape: f32[1,128], index: 9, kind: input, shape index: {}]
  %s10 = inlined_call_operand.hbm [shape: bf16[128,256], index: 10, kind: input, shape index: {}]
  %s11 = inlined_call_operand.vmem [shape: f32[1,256], index: 11, kind: input, shape index: {}]
  %s12 = inlined_call_operand.hbm [shape: bf16[128,128], index: 12, kind: input, shape index: {}]
  %s13 = inlined_call_operand.vmem [shape: f32[1,128], index: 13, kind: input, shape index: {}]
  %s14 = inlined_call_operand.hbm [shape: bf16[128,256], index: 14, kind: input, shape index: {}]
  %s15 = inlined_call_operand.vmem [shape: f32[1,256], index: 15, kind: input, shape index: {}]
  %s16 = inlined_call_operand.hbm [shape: bf16[256,128], index: 16, kind: input, shape index: {}]
  %s17 = inlined_call_operand.vmem [shape: f32[1,128], index: 17, kind: input, shape index: {}]
  %s18 = inlined_call_operand.vmem [shape: f32[3,128], index: 18, kind: input, shape index: {}]
  %s19 = inlined_call_operand.vmem [shape: f32[3,128], index: 19, kind: input, shape index: {}]
  %s20 = inlined_call_operand.hbm [shape: f32[2,8,128], index: 20, kind: output, shape index: {}]
  %s21 = sld [smem:[#allocation0]]
  $region157: #{tpu_custom_call.1} parent=0
    _
  %s23 = ssub.s32 1, %s21
  %s24 = scalar_select 0, %s23, %s21
  $region1: #{tpu_custom_call.1} parent=0
    #allocation2 [shape = 'u8[4096]{0}', space=vmem, size = 0x1000, scoped, tag = 'input window, operand 0']
    #allocation3 [shape = 's32[2]{0}', space=sflag, size = 0x8, scoped, tag = 'scoped memory for tpu_custom_call.1']
    #allocation4 [shape = 's32[2]{0}', space=sflag, size = 0x8, scoped, tag = 'scoped memory for tpu_custom_call.1']
    #allocation5 [shape = 'u8[8192]{0}', space=vmem, size = 0x2000, scoped, tag = 'input window, operand 1']
    #allocation6 [shape = 's32[2]{0}', space=sflag, size = 0x8, scoped, tag = 'scoped memory for tpu_custom_call.1']
    #allocation7 [shape = 'u8[1024]{0}', space=vmem, size = 0x400, scoped, tag = 'input window, operand 2']
    #allocation8 [shape = 'u8[8192]{0}', space=vmem, size = 0x2000, scoped, tag = 'input window, operand 3']
    #allocation9 [shape = 's32[2]{0}', space=sflag, size = 0x8, scoped, tag = 'scoped memory for tpu_custom_call.1']
    #allocation10 [shape = 'u8[98304]{0}', space=vmem, size = 0x18000, scoped, tag = 'input window, operand 4, single buffered']
    #allocation11 [shape = 'u8[32768]{0}', space=vmem, size = 0x8000, scoped, tag = 'input window, operand 6, single buffered']
    #allocation12 [shape = 's32[1]{0}', space=sflag, size = 0x4, scoped, tag = 'scoped memory for tpu_custom_call.1']
    #allocation13 [shape = 'u8[32768]{0}', space=vmem, size = 0x8000, scoped, tag = 'input window, operand 8, single buffered']
    #allocation14 [shape = 'u8[65536]{0}', space=vmem, size = 0x10000, scoped, tag = 'input window, operand 10, single buffered']
    #allocation15 [shape = 's32[1]{0}', space=sflag, size = 0x4, scoped, tag = 'scoped memory for tpu_custom_call.1']
    #allocation16 [shape = 'u8[32768]{0}', space=vmem, size = 0x8000, scoped, tag = 'input window, operand 12, single buffered']
    #allocation17 [shape = 'u8[65536]{0}', space=vmem, size = 0x10000, scoped, tag = 'input window, operand 14, single buffered']
    #allocation18 [shape = 's32[1]{0}', space=sflag, size = 0x4, scoped, tag = 'scoped memory for tpu_custom_call.1']
    #allocation19 [shape = 'u8[65536]{0}', space=vmem, size = 0x10000, scoped, tag = 'input window, operand 16, single buffered']
    #allocation20 [shape = 'u8[8192]{0}', space=vmem, size = 0x2000, scoped, tag = 'output window, operand 0']
    %25 = vsyncpa [#allocation3], 0
    %s26 = scalar_lea.sflag [#allocation3], 1
    %27 = vsyncpa %s26, 0
    %28 = vsyncpa [#allocation6], 0
    %s29 = scalar_lea.sflag [#allocation6], 1
    %30 = vsyncpa %s29, 0
    %31 = vsyncpa [#allocation9], 0
    %s32 = scalar_lea.sflag [#allocation9], 1
    %33 = vsyncpa %s32, 0
    %34 = vsyncpa [#allocation12], 0
    %35 = vsyncpa [#allocation15], 0
    %36 = vsyncpa [#allocation18], 0
    %37 = vsyncpa [#allocation4], 0
    %s38 = scalar_lea.sflag [#allocation4], 1
    %39 = vsyncpa %s38, 0
    loop: start=0, step=1, limit=4
    $region2: #{tpu_custom_call.1} parent=1 // loop_pre_header
      _
    $region3: #{tpu_custom_call.1} parent=1 // loop_header
      %s41 = sphi 0, %s45
      %p42 = scmp.ge.s32.totalorder %s41, 4
      %s51 = sphi 0, %s53
      %s54 = sphi 0, %s51
      %s55 = sphi 0, %s54
      %s71 = sphi 0, %s55
      %s77 = sphi 0, %s79
      %s80 = sphi 0, %s77
      %s81 = sphi 0, %s80
      %s97 = sphi 0, %s81
      %s103 = sphi 0, %s105
      %s106 = sphi 0, %s103
      %s107 = sphi 0, %s106
      %s123 = sphi 0, %s107
      %s129 = sphi 0, %s131
      %s132 = sphi 0, %s129
      %s133 = sphi 0, %s132
      %s149 = sphi 0, %s133
      %s153 = sphi 0, %s153
      %s155 = sphi 0, %s153
      %s156 = sphi 0, %s155
      %s170 = sphi 0, %s156
      %s174 = sphi 0, %s174
      %s176 = sphi 0, %s174
      %s177 = sphi 0, %s176
      %s191 = sphi 0, %s177
      %s195 = sphi 0, %s195
      %s197 = sphi 0, %s195
      %s198 = sphi 0, %s197
      %s212 = sphi 0, %s198
      %s216 = sphi 0, %s216
      %s218 = sphi 0, %s216
      %s219 = sphi 0, %s218
      %s233 = sphi 0, %s219
      %s237 = sphi 0, %s237
      %s239 = sphi 0, %s237
      %s240 = sphi 0, %s239
      %s254 = sphi 0, %s240
      %s258 = sphi 0, %s258
      %s260 = sphi 0, %s258
      %s261 = sphi 0, %s260
      %s275 = sphi 0, %s261
      %s279 = sphi 0, %s279
      %s281 = sphi 0, %s279
      %s282 = sphi 0, %s281
      %s296 = sphi 0, %s282
      %s300 = sphi 0, %s300
      %s302 = sphi 0, %s300
      %s303 = sphi 0, %s302
      %s317 = sphi 0, %s303
      %s321 = sphi 0, %s321
      %s323 = sphi 0, %s321
      %s324 = sphi 0, %s323
      %s338 = sphi 0, %s324
      %s342 = sphi 0, %s342
      %s344 = sphi 0, %s342
      %s345 = sphi 0, %s344
      %s359 = sphi 0, %s345
      %s363 = sphi 0, %s363
      %s365 = sphi 0, %s363
      %s366 = sphi 0, %s365
      %s380 = sphi 0, %s366
      %s384 = sphi 0, %s384
      %s386 = sphi 0, %s384
      %s387 = sphi 0, %s386
      %s401 = sphi 0, %s387
      %s405 = sphi 0, %s405
      %s407 = sphi 0, %s405
      %s408 = sphi 0, %s407
      %s422 = sphi 0, %s408
      %s426 = sphi 0, %s426
      %s428 = sphi 0, %s426
      %s429 = sphi 0, %s428
      %s443 = sphi 0, %s429
      %s447 = sphi 0, %s447
      %s449 = sphi 0, %s447
      %s450 = sphi 0, %s449
      %s464 = sphi 0, %s450
      %s468 = sphi 0, %s468
      %s470 = sphi 0, %s468
      %s471 = sphi 0, %s470
      %s485 = sphi 0, %s471
      %s491 = sphi 0, %s493
      %s494 = sphi 0, %s491
      %s495 = sphi 0, %s494
      %s511 = sphi 0, %s495
    $region4: #{tpu_custom_call.1} parent=1 // loop_header_branch
      %44 = sbr.rel (%p42) target = $region8
    $region5: #{tpu_custom_call.1} parent=1 // loop_body
      %s46 = ssub.s32 %s41, 1
      %s47 = ssub.s32 %s41, 2
      %s48 = sadd.s32 %s41, 1
      %s49 = ssub.s32 %s41, %s48
      %p50 = scmp.eq.s32.totalorder %s49, 0
      %s52 = sadd.s32 %s51, 1
      %s53 = scalar_select %p50, %s51, %s52
      %p56 = pneg %p50
      %p57 = scmp.eq.s32.totalorder %s41, 1
      %p58 = por %p56, %p57
      %p59 = scmp.ne.s32.totalorder %s51, %s54
      %p60 = scmp.eq.s32.totalorder %s41, 0
      %p61 = por %p59, %p60
      %p62 = scmp.ne.s32.totalorder %s51, %s54
      %p63 = scmp.eq.s32.totalorder %s46, 1
      %p64 = por %p62, %p63
      %p65 = scmp.ne.s32.totalorder %s54, %s55
      %p66 = scmp.eq.s32.totalorder %s46, 0
      %p67 = por %p65, %p66
      %p68 = scmp.ne.s32.totalorder %s54, %s55
      %p69 = scmp.eq.s32.totalorder %s47, 1
      %p70 = por %p68, %p69
      %p72 = scmp.ne.s32.totalorder %s55, %s71
      %p73 = scmp.eq.s32.totalorder %s47, 0
      %p74 = por %p72, %p73
      %s75 = ssub.s32 %s41, %s48
      %p76 = scmp.eq.s32.totalorder %s75, 0
      %s78 = sadd.s32 %s77, 1
      %s79 = scalar_select %p76, %s77, %s78
      %p82 = pneg %p76
      %p83 = scmp.eq.s32.totalorder %s41, 1
      %p84 = por %p82, %p83
      %p85 = scmp.ne.s32.totalorder %s77, %s80
      %p86 = scmp.eq.s32.totalorder %s41, 0
      %p87 = por %p85, %p86
      %p88 = scmp.ne.s32.totalorder %s77, %s80
      %p89 = scmp.eq.s32.totalorder %s46, 1
      %p90 = por %p88, %p89
      %p91 = scmp.ne.s32.totalorder %s80, %s81
      %p92 = scmp.eq.s32.totalorder %s46, 0
      %p93 = por %p91, %p92
      %p94 = scmp.ne.s32.totalorder %s80, %s81
      %p95 = scmp.eq.s32.totalorder %s47, 1
      %p96 = por %p94, %p95
      %p98 = scmp.ne.s32.totalorder %s81, %s97
      %p99 = scmp.eq.s32.totalorder %s47, 0
      %p100 = por %p98, %p99
      %s101 = ssub.s32 %s41, %s48
      %p102 = scmp.eq.s32.totalorder %s101, 0
      %s104 = sadd.s32 %s103, 1
      %s105 = scalar_select %p102, %s103, %s104
      %p108 = pneg %p102
      %p109 = scmp.eq.s32.totalorder %s41, 1
      %p110 = por %p108, %p109
      %p111 = scmp.ne.s32.totalorder %s103, %s106
      %p112 = scmp.eq.s32.totalorder %s41, 0
      %p113 = por %p111, %p112
      %p114 = scmp.ne.s32.totalorder %s103, %s106
      %p115 = scmp.eq.s32.totalorder %s46, 1
      %p116 = por %p114, %p115
      %p117 = scmp.ne.s32.totalorder %s106, %s107
      %p118 = scmp.eq.s32.totalorder %s46, 0
      %p119 = por %p117, %p118
      %p120 = scmp.ne.s32.totalorder %s106, %s107
      %p121 = scmp.eq.s32.totalorder %s47, 1
      %p122 = por %p120, %p121
      %p124 = scmp.ne.s32.totalorder %s107, %s123
      %p125 = scmp.eq.s32.totalorder %s47, 0
      %p126 = por %p124, %p125
      %s127 = ssub.s32 %s41, %s48
      %p128 = scmp.eq.s32.totalorder %s127, 0
      %s130 = sadd.s32 %s129, 1
      %s131 = scalar_select %p128, %s129, %s130
      %p134 = pneg %p128
      %p135 = scmp.eq.s32.totalorder %s41, 1
      %p136 = por %p134, %p135
      %p137 = scmp.ne.s32.totalorder %s129, %s132
      %p138 = scmp.eq.s32.totalorder %s41, 0
      %p139 = por %p137, %p138
      %p140 = scmp.ne.s32.totalorder %s129, %s132
      %p141 = scmp.eq.s32.totalorder %s46, 1
      %p142 = por %p140, %p141
      %p143 = scmp.ne.s32.totalorder %s132, %s133
      %p144 = scmp.eq.s32.totalorder %s46, 0
      %p145 = por %p143, %p144
      %p146 = scmp.ne.s32.totalorder %s132, %s133
      %p147 = scmp.eq.s32.totalorder %s47, 1
      %p148 = por %p146, %p147
      %p150 = scmp.ne.s32.totalorder %s133, %s149
      %p151 = scmp.eq.s32.totalorder %s47, 0
      %p152 = por %p150, %p151
      %s154 = sadd.s32 %s153, 1
      %p157 = scmp.eq.s32.totalorder %s41, 1
      %p158 = scmp.ne.s32.totalorder %s153, %s155
      %p159 = scmp.eq.s32.totalorder %s41, 0
      %p160 = por %p158, %p159
      %p161 = scmp.ne.s32.totalorder %s153, %s155
      %p162 = scmp.eq.s32.totalorder %s46, 1
      %p163 = por %p161, %p162
      %p164 = scmp.ne.s32.totalorder %s155, %s156
      %p165 = scmp.eq.s32.totalorder %s46, 0
      %p166 = por %p164, %p165
      %p167 = scmp.ne.s32.totalorder %s155, %s156
      %p168 = scmp.eq.s32.totalorder %s47, 1
      %p169 = por %p167, %p168
      %p171 = scmp.ne.s32.totalorder %s156, %s170
      %p172 = scmp.eq.s32.totalorder %s47, 0
      %p173 = por %p171, %p172
      %s175 = sadd.s32 %s174, 1
      %p178 = scmp.eq.s32.totalorder %s41, 1
      %p179 = scmp.ne.s32.totalorder %s174, %s176
      %p180 = scmp.eq.s32.totalorder %s41, 0
      %p181 = por %p179, %p180
      %p182 = scmp.ne.s32.totalorder %s174, %s176
      %p183 = scmp.eq.s32.totalorder %s46, 1
      %p184 = por %p182, %p183
      %p185 = scmp.ne.s32.totalorder %s176, %s177
      %p186 = scmp.eq.s32.totalorder %s46, 0
      %p187 = por %p185, %p186
      %p188 = scmp.ne.s32.totalorder %s176, %s177
      %p189 = scmp.eq.s32.totalorder %s47, 1
      %p190 = por %p188, %p189
      %p192 = scmp.ne.s32.totalorder %s177, %s191
      %p193 = scmp.eq.s32.totalorder %s47, 0
      %p194 = por %p192, %p193
      %s196 = sadd.s32 %s195, 1
      %p199 = scmp.eq.s32.totalorder %s41, 1
      %p200 = scmp.ne.s32.totalorder %s195, %s197
      %p201 = scmp.eq.s32.totalorder %s41, 0
      %p202 = por %p200, %p201
      %p203 = scmp.ne.s32.totalorder %s195, %s197
      %p204 = scmp.eq.s32.totalorder %s46, 1
      %p205 = por %p203, %p204
      %p206 = scmp.ne.s32.totalorder %s197, %s198
      %p207 = scmp.eq.s32.totalorder %s46, 0
      %p208 = por %p206, %p207
      %p209 = scmp.ne.s32.totalorder %s197, %s198
      %p210 = scmp.eq.s32.totalorder %s47, 1
      %p211 = por %p209, %p210
      %p213 = scmp.ne.s32.totalorder %s198, %s212
      %p214 = scmp.eq.s32.totalorder %s47, 0
      %p215 = por %p213, %p214
      %s217 = sadd.s32 %s216, 1
      %p220 = scmp.eq.s32.totalorder %s41, 1
      %p221 = scmp.ne.s32.totalorder %s216, %s218
      %p222 = scmp.eq.s32.totalorder %s41, 0
      %p223 = por %p221, %p222
      %p224 = scmp.ne.s32.totalorder %s216, %s218
      %p225 = scmp.eq.s32.totalorder %s46, 1
      %p226 = por %p224, %p225
      %p227 = scmp.ne.s32.totalorder %s218, %s219
      %p228 = scmp.eq.s32.totalorder %s46, 0
      %p229 = por %p227, %p228
      %p230 = scmp.ne.s32.totalorder %s218, %s219
      %p231 = scmp.eq.s32.totalorder %s47, 1
      %p232 = por %p230, %p231
      %p234 = scmp.ne.s32.totalorder %s219, %s233
      %p235 = scmp.eq.s32.totalorder %s47, 0
      %p236 = por %p234, %p235
      %s238 = sadd.s32 %s237, 1
      %p241 = scmp.eq.s32.totalorder %s41, 1
      %p242 = scmp.ne.s32.totalorder %s237, %s239
      %p243 = scmp.eq.s32.totalorder %s41, 0
      %p244 = por %p242, %p243
      %p245 = scmp.ne.s32.totalorder %s237, %s239
      %p246 = scmp.eq.s32.totalorder %s46, 1
      %p247 = por %p245, %p246
      %p248 = scmp.ne.s32.totalorder %s239, %s240
      %p249 = scmp.eq.s32.totalorder %s46, 0
      %p250 = por %p248, %p249
      %p251 = scmp.ne.s32.totalorder %s239, %s240
      %p252 = scmp.eq.s32.totalorder %s47, 1
      %p253 = por %p251, %p252
      %p255 = scmp.ne.s32.totalorder %s240, %s254
      %p256 = scmp.eq.s32.totalorder %s47, 0
      %p257 = por %p255, %p256
      %s259 = sadd.s32 %s258, 1
      %p262 = scmp.eq.s32.totalorder %s41, 1
      %p263 = scmp.ne.s32.totalorder %s258, %s260
      %p264 = scmp.eq.s32.totalorder %s41, 0
      %p265 = por %p263, %p264
      %p266 = scmp.ne.s32.totalorder %s258, %s260
      %p267 = scmp.eq.s32.totalorder %s46, 1
      %p268 = por %p266, %p267
      %p269 = scmp.ne.s32.totalorder %s260, %s261
      %p270 = scmp.eq.s32.totalorder %s46, 0
      %p271 = por %p269, %p270
      %p272 = scmp.ne.s32.totalorder %s260, %s261
      %p273 = scmp.eq.s32.totalorder %s47, 1
      %p274 = por %p272, %p273
      %p276 = scmp.ne.s32.totalorder %s261, %s275
      %p277 = scmp.eq.s32.totalorder %s47, 0
      %p278 = por %p276, %p277
      %s280 = sadd.s32 %s279, 1
      %p283 = scmp.eq.s32.totalorder %s41, 1
      %p284 = scmp.ne.s32.totalorder %s279, %s281
      %p285 = scmp.eq.s32.totalorder %s41, 0
      %p286 = por %p284, %p285
      %p287 = scmp.ne.s32.totalorder %s279, %s281
      %p288 = scmp.eq.s32.totalorder %s46, 1
      %p289 = por %p287, %p288
      %p290 = scmp.ne.s32.totalorder %s281, %s282
      %p291 = scmp.eq.s32.totalorder %s46, 0
      %p292 = por %p290, %p291
      %p293 = scmp.ne.s32.totalorder %s281, %s282
      %p294 = scmp.eq.s32.totalorder %s47, 1
      %p295 = por %p293, %p294
      %p297 = scmp.ne.s32.totalorder %s282, %s296
      %p298 = scmp.eq.s32.totalorder %s47, 0
      %p299 = por %p297, %p298
      %s301 = sadd.s32 %s300, 1
      %p304 = scmp.eq.s32.totalorder %s41, 1
      %p305 = scmp.ne.s32.totalorder %s300, %s302
      %p306 = scmp.eq.s32.totalorder %s41, 0
      %p307 = por %p305, %p306
      %p308 = scmp.ne.s32.totalorder %s300, %s302
      %p309 = scmp.eq.s32.totalorder %s46, 1
      %p310 = por %p308, %p309
      %p311 = scmp.ne.s32.totalorder %s302, %s303
      %p312 = scmp.eq.s32.totalorder %s46, 0
      %p313 = por %p311, %p312
      %p314 = scmp.ne.s32.totalorder %s302, %s303
      %p315 = scmp.eq.s32.totalorder %s47, 1
      %p316 = por %p314, %p315
      %p318 = scmp.ne.s32.totalorder %s303, %s317
      %p319 = scmp.eq.s32.totalorder %s47, 0
      %p320 = por %p318, %p319
      %s322 = sadd.s32 %s321, 1
      %p325 = scmp.eq.s32.totalorder %s41, 1
      %p326 = scmp.ne.s32.totalorder %s321, %s323
      %p327 = scmp.eq.s32.totalorder %s41, 0
      %p328 = por %p326, %p327
      %p329 = scmp.ne.s32.totalorder %s321, %s323
      %p330 = scmp.eq.s32.totalorder %s46, 1
      %p331 = por %p329, %p330
      %p332 = scmp.ne.s32.totalorder %s323, %s324
      %p333 = scmp.eq.s32.totalorder %s46, 0
      %p334 = por %p332, %p333
      %p335 = scmp.ne.s32.totalorder %s323, %s324
      %p336 = scmp.eq.s32.totalorder %s47, 1
      %p337 = por %p335, %p336
      %p339 = scmp.ne.s32.totalorder %s324, %s338
      %p340 = scmp.eq.s32.totalorder %s47, 0
      %p341 = por %p339, %p340
      %s343 = sadd.s32 %s342, 1
      %p346 = scmp.eq.s32.totalorder %s41, 1
      %p347 = scmp.ne.s32.totalorder %s342, %s344
      %p348 = scmp.eq.s32.totalorder %s41, 0
      %p349 = por %p347, %p348
      %p350 = scmp.ne.s32.totalorder %s342, %s344
      %p351 = scmp.eq.s32.totalorder %s46, 1
      %p352 = por %p350, %p351
      %p353 = scmp.ne.s32.totalorder %s344, %s345
      %p354 = scmp.eq.s32.totalorder %s46, 0
      %p355 = por %p353, %p354
      %p356 = scmp.ne.s32.totalorder %s344, %s345
      %p357 = scmp.eq.s32.totalorder %s47, 1
      %p358 = por %p356, %p357
      %p360 = scmp.ne.s32.totalorder %s345, %s359
      %p361 = scmp.eq.s32.totalorder %s47, 0
      %p362 = por %p360, %p361
      %s364 = sadd.s32 %s363, 1
      %p367 = scmp.eq.s32.totalorder %s41, 1
      %p368 = scmp.ne.s32.totalorder %s363, %s365
      %p369 = scmp.eq.s32.totalorder %s41, 0
      %p370 = por %p368, %p369
      %p371 = scmp.ne.s32.totalorder %s363, %s365
      %p372 = scmp.eq.s32.totalorder %s46, 1
      %p373 = por %p371, %p372
      %p374 = scmp.ne.s32.totalorder %s365, %s366
      %p375 = scmp.eq.s32.totalorder %s46, 0
      %p376 = por %p374, %p375
      %p377 = scmp.ne.s32.totalorder %s365, %s366
      %p378 = scmp.eq.s32.totalorder %s47, 1
      %p379 = por %p377, %p378
      %p381 = scmp.ne.s32.totalorder %s366, %s380
      %p382 = scmp.eq.s32.totalorder %s47, 0
      %p383 = por %p381, %p382
      %s385 = sadd.s32 %s384, 1
      %p388 = scmp.eq.s32.totalorder %s41, 1
      %p389 = scmp.ne.s32.totalorder %s384, %s386
      %p390 = scmp.eq.s32.totalorder %s41, 0
      %p391 = por %p389, %p390
      %p392 = scmp.ne.s32.totalorder %s384, %s386
      %p393 = scmp.eq.s32.totalorder %s46, 1
      %p394 = por %p392, %p393
      %p395 = scmp.ne.s32.totalorder %s386, %s387
      %p396 = scmp.eq.s32.totalorder %s46, 0
      %p397 = por %p395, %p396
      %p398 = scmp.ne.s32.totalorder %s386, %s387
      %p399 = scmp.eq.s32.totalorder %s47, 1
      %p400 = por %p398, %p399
      %p402 = scmp.ne.s32.totalorder %s387, %s401
      %p403 = scmp.eq.s32.totalorder %s47, 0
      %p404 = por %p402, %p403
      %s406 = sadd.s32 %s405, 1
      %p409 = scmp.eq.s32.totalorder %s41, 1
      %p410 = scmp.ne.s32.totalorder %s405, %s407
      %p411 = scmp.eq.s32.totalorder %s41, 0
      %p412 = por %p410, %p411
      %p413 = scmp.ne.s32.totalorder %s405, %s407
      %p414 = scmp.eq.s32.totalorder %s46, 1
      %p415 = por %p413, %p414
      %p416 = scmp.ne.s32.totalorder %s407, %s408
      %p417 = scmp.eq.s32.totalorder %s46, 0
      %p418 = por %p416, %p417
      %p419 = scmp.ne.s32.totalorder %s407, %s408
      %p420 = scmp.eq.s32.totalorder %s47, 1
      %p421 = por %p419, %p420
      %p423 = scmp.ne.s32.totalorder %s408, %s422
      %p424 = scmp.eq.s32.totalorder %s47, 0
      %p425 = por %p423, %p424
      %s427 = sadd.s32 %s426, 1
      %p430 = scmp.eq.s32.totalorder %s41, 1
      %p431 = scmp.ne.s32.totalorder %s426, %s428
      %p432 = scmp.eq.s32.totalorder %s41, 0
      %p433 = por %p431, %p432
      %p434 = scmp.ne.s32.totalorder %s426, %s428
      %p435 = scmp.eq.s32.totalorder %s46, 1
      %p436 = por %p434, %p435
      %p437 = scmp.ne.s32.totalorder %s428, %s429
      %p438 = scmp.eq.s32.totalorder %s46, 0
      %p439 = por %p437, %p438
      %p440 = scmp.ne.s32.totalorder %s428, %s429
      %p441 = scmp.eq.s32.totalorder %s47, 1
      %p442 = por %p440, %p441
      %p444 = scmp.ne.s32.totalorder %s429, %s443
      %p445 = scmp.eq.s32.totalorder %s47, 0
      %p446 = por %p444, %p445
      %s448 = sadd.s32 %s447, 1
      %p451 = scmp.eq.s32.totalorder %s41, 1
      %p452 = scmp.ne.s32.totalorder %s447, %s449
      %p453 = scmp.eq.s32.totalorder %s41, 0
      %p454 = por %p452, %p453
      %p455 = scmp.ne.s32.totalorder %s447, %s449
      %p456 = scmp.eq.s32.totalorder %s46, 1
      %p457 = por %p455, %p456
      %p458 = scmp.ne.s32.totalorder %s449, %s450
      %p459 = scmp.eq.s32.totalorder %s46, 0
      %p460 = por %p458, %p459
      %p461 = scmp.ne.s32.totalorder %s449, %s450
      %p462 = scmp.eq.s32.totalorder %s47, 1
      %p463 = por %p461, %p462
      %p465 = scmp.ne.s32.totalorder %s450, %s464
      %p466 = scmp.eq.s32.totalorder %s47, 0
      %p467 = por %p465, %p466
      %s469 = sadd.s32 %s468, 1
      %p472 = scmp.eq.s32.totalorder %s41, 1
      %p473 = scmp.ne.s32.totalorder %s468, %s470
      %p474 = scmp.eq.s32.totalorder %s41, 0
      %p475 = por %p473, %p474
      %p476 = scmp.ne.s32.totalorder %s468, %s470
      %p477 = scmp.eq.s32.totalorder %s46, 1
      %p478 = por %p476, %p477
      %p479 = scmp.ne.s32.totalorder %s470, %s471
      %p480 = scmp.eq.s32.totalorder %s46, 0
      %p481 = por %p479, %p480
      %p482 = scmp.ne.s32.totalorder %s470, %s471
      %p483 = scmp.eq.s32.totalorder %s47, 1
      %p484 = por %p482, %p483
      %p486 = scmp.ne.s32.totalorder %s471, %s485
      %p487 = scmp.eq.s32.totalorder %s47, 0
      %p488 = por %p486, %p487
      %s489 = ssub.s32 %s41, %s48
      %p490 = scmp.eq.s32.totalorder %s489, 0
      %s492 = sadd.s32 %s491, 1
      %s493 = scalar_select %p490, %s491, %s492
      %p496 = pneg %p490
      %p497 = scmp.eq.s32.totalorder %s41, 1
      %p498 = por %p496, %p497
      %p499 = scmp.ne.s32.totalorder %s491, %s494
      %p500 = scmp.eq.s32.totalorder %s41, 0
      %p501 = por %p499, %p500
      %p502 = scmp.ne.s32.totalorder %s491, %s494
      %p503 = scmp.eq.s32.totalorder %s46, 1
      %p504 = por %p502, %p503
      %p505 = scmp.ne.s32.totalorder %s494, %s495
      %p506 = scmp.eq.s32.totalorder %s46, 0
      %p507 = por %p505, %p506
      %p508 = scmp.ne.s32.totalorder %s494, %s495
      %p509 = scmp.eq.s32.totalorder %s47, 1
      %p510 = por %p508, %p509
      %p512 = scmp.ne.s32.totalorder %s495, %s511
      %p513 = scmp.eq.s32.totalorder %s47, 0
      %p514 = por %p512, %p513
      %p515 = scmp.le.s32.totalorder 1, %s41
      %p516 = scmp.lt.s32.totalorder %s41, 3
      %p517 = pnand %p515, %p516
      %p518 = pneg %p517
      // Predicated region
      $region9: #{tpu_custom_call.1} parent=5 // pred_check
        _
      $region10: #{tpu_custom_call.1} parent=5 // pred_check_branch
        %520 = sbr.rel (%p517) target = $region12
      $region11: #{tpu_custom_call.1} parent=5 // pred_region
        %s521 = ssub.s32 %s41, 1
        // Predicated region
        $region13: #{tpu_custom_call.1} parent=11 // pred_check
          %p522 = pneg %p166
        $region14: #{tpu_custom_call.1} parent=11 // pred_check_branch
          %524 = sbr.rel (%p522) target = $region16
        $region15: #{tpu_custom_call.1} parent=11 // pred_region
          %s526 = ssub.s32 3072, 3072
          %527 = vsyncadd [#allocation9], %s526
          %s528 = sshll.u32 [#allocation10], 4
          %s529 = int_to_ptr.vmem [resolvable:$true] %s528
          %534 = dma.hbm_to_vmem [thread:$0]  %s4, 3072, %s529, [#allocation9], 192, 192, 12
        $region16: #{tpu_custom_call.1} parent=11 // pred_fallthru
          _
        // Predicated region
        $region17: #{tpu_custom_call.1} parent=11 // pred_check
          %p535 = pneg %p187
        $region18: #{tpu_custom_call.1} parent=11 // pred_check_branch
          %537 = sbr.rel (%p535) target = $region20
        $region19: #{tpu_custom_call.1} parent=11 // pred_region
          _
        $region20: #{tpu_custom_call.1} parent=11 // pred_fallthru
          _
        // Predicated region
        $region21: #{tpu_custom_call.1} parent=11 // pred_check
          %p538 = pneg %p208
        $region22: #{tpu_custom_call.1} parent=11 // pred_check_branch
          %540 = sbr.rel (%p538) target = $region24
        $region23: #{tpu_custom_call.1} parent=11 // pred_region
          %s542 = ssub.s32 1024, 1024
          %543 = vsyncadd [#allocation12], %s542
          %s544 = sshll.u32 [#allocation11], 4
          %s545 = int_to_ptr.vmem [resolvable:$true] %s544
          %550 = dma.hbm_to_vmem [thread:$0]  %s6, 1024, %s545, [#allocation12], 64, 64, 4
        $region24: #{tpu_custom_call.1} parent=11 // pred_fallthru
          _
        // Predicated region
        $region25: #{tpu_custom_call.1} parent=11 // pred_check
          %p551 = pneg %p229
        $region26: #{tpu_custom_call.1} parent=11 // pred_check_branch
          %553 = sbr.rel (%p551) target = $region28
        $region27: #{tpu_custom_call.1} parent=11 // pred_region
          _
        $region28: #{tpu_custom_call.1} parent=11 // pred_fallthru
          _
        // Predicated region
        $region29: #{tpu_custom_call.1} parent=11 // pred_check
          %p554 = pneg %p250
        $region30: #{tpu_custom_call.1} parent=11 // pred_check_branch
          %556 = sbr.rel (%p554) target = $region32
        $region31: #{tpu_custom_call.1} parent=11 // pred_region
          %s558 = ssub.s32 1024, 1024
          %559 = vsyncadd [#allocation12], %s558
          %s560 = sshll.u32 [#allocation13], 4
          %s561 = int_to_ptr.vmem [resolvable:$true] %s560
          %566 = dma.hbm_to_vmem [thread:$0]  %s8, 1024, %s561, [#allocation12], 64, 64, 4
        $region32: #{tpu_custom_call.1} parent=11 // pred_fallthru
          _
        // Predicated region
        $region33: #{tpu_custom_call.1} parent=11 // pred_check
          %p567 = pneg %p271
        $region34: #{tpu_custom_call.1} parent=11 // pred_check_branch
          %569 = sbr.rel (%p567) target = $region36
        $region35: #{tpu_custom_call.1} parent=11 // pred_region
          _
        $region36: #{tpu_custom_call.1} parent=11 // pred_fallthru
          _
        // Predicated region
        $region37: #{tpu_custom_call.1} parent=11 // pred_check
          %p570 = pneg %p292
        $region38: #{tpu_custom_call.1} parent=11 // pred_check_branch
          %572 = sbr.rel (%p570) target = $region40
        $region39: #{tpu_custom_call.1} parent=11 // pred_region
          %s574 = ssub.s32 2048, 2048
          %575 = vsyncadd [#allocation15], %s574
          %s576 = sshll.u32 [#allocation14], 4
          %s577 = int_to_ptr.vmem [resolvable:$true] %s576
          %582 = dma.hbm_to_vmem [thread:$0]  %s10, 2048, %s577, [#allocation15], 128, 128, 8
        $region40: #{tpu_custom_call.1} parent=11 // pred_fallthru
          _
        // Predicated region
        $region41: #{tpu_custom_call.1} parent=11 // pred_check
          %p583 = pneg %p313
        $region42: #{tpu_custom_call.1} parent=11 // pred_check_branch
          %585 = sbr.rel (%p583) target = $region44
        $region43: #{tpu_custom_call.1} parent=11 // pred_region
          _
        $region44: #{tpu_custom_call.1} parent=11 // pred_fallthru
          _
        // Predicated region
        $region45: #{tpu_custom_call.1} parent=11 // pred_check
          %p586 = pneg %p334
        $region46: #{tpu_custom_call.1} parent=11 // pred_check_branch
          %588 = sbr.rel (%p586) target = $region48
        $region47: #{tpu_custom_call.1} parent=11 // pred_region
          %s590 = ssub.s32 1024, 1024
          %591 = vsyncadd [#allocation15], %s590
          %s592 = sshll.u32 [#allocation16], 4
          %s593 = int_to_ptr.vmem [resolvable:$true] %s592
          %598 = dma.hbm_to_vmem [thread:$0]  %s12, 1024, %s593, [#allocation15], 64, 64, 4
        $region48: #{tpu_custom_call.1} parent=11 // pred_fallthru
          _
        // Predicated region
        $region49: #{tpu_custom_call.1} parent=11 // pred_check
          %p599 = pneg %p355
        $region50: #{tpu_custom_call.1} parent=11 // pred_check_branch
          %601 = sbr.rel (%p599) target = $region52
        $region51: #{tpu_custom_call.1} parent=11 // pred_region
          _
        $region52: #{tpu_custom_call.1} parent=11 // pred_fallthru
          _
        // Predicated region
        $region53: #{tpu_custom_call.1} parent=11 // pred_check
          %p602 = pneg %p376
        $region54: #{tpu_custom_call.1} parent=11 // pred_check_branch
          %604 = sbr.rel (%p602) target = $region56
        $region55: #{tpu_custom_call.1} parent=11 // pred_region
          %s606 = ssub.s32 2048, 2048
          %607 = vsyncadd [#allocation18], %s606
          %s608 = sshll.u32 [#allocation17], 4
          %s609 = int_to_ptr.vmem [resolvable:$true] %s608
          %614 = dma.hbm_to_vmem [thread:$0]  %s14, 2048, %s609, [#allocation18], 128, 128, 8
        $region56: #{tpu_custom_call.1} parent=11 // pred_fallthru
          _
        // Predicated region
        $region57: #{tpu_custom_call.1} parent=11 // pred_check
          %p615 = pneg %p397
        $region58: #{tpu_custom_call.1} parent=11 // pred_check_branch
          %617 = sbr.rel (%p615) target = $region60
        $region59: #{tpu_custom_call.1} parent=11 // pred_region
          _
        $region60: #{tpu_custom_call.1} parent=11 // pred_fallthru
          _
        // Predicated region
        $region61: #{tpu_custom_call.1} parent=11 // pred_check
          %p618 = pneg %p418
        $region62: #{tpu_custom_call.1} parent=11 // pred_check_branch
          %620 = sbr.rel (%p618) target = $region64
        $region63: #{tpu_custom_call.1} parent=11 // pred_region
          %s622 = ssub.s32 2048, 2048
          %623 = vsyncadd [#allocation18], %s622
          %s624 = sshll.u32 [#allocation19], 4
          %s625 = int_to_ptr.vmem [resolvable:$true] %s624
          %630 = dma.hbm_to_vmem [thread:$0]  %s16, 2048, %s625, [#allocation18], 64, 64, 4
        $region64: #{tpu_custom_call.1} parent=11 // pred_fallthru
          _
        // Predicated region
        $region65: #{tpu_custom_call.1} parent=11 // pred_check
          %p631 = pneg %p439
        $region66: #{tpu_custom_call.1} parent=11 // pred_check_branch
          %633 = sbr.rel (%p631) target = $region68
        $region67: #{tpu_custom_call.1} parent=11 // pred_region
          _
        $region68: #{tpu_custom_call.1} parent=11 // pred_fallthru
          _
        // Predicated region
        $region69: #{tpu_custom_call.1} parent=11 // pred_check
          %p634 = pneg %p460
        $region70: #{tpu_custom_call.1} parent=11 // pred_check_branch
          %636 = sbr.rel (%p634) target = $region72
        $region71: #{tpu_custom_call.1} parent=11 // pred_region
          _
        $region72: #{tpu_custom_call.1} parent=11 // pred_fallthru
          _
        // Predicated region
        $region73: #{tpu_custom_call.1} parent=11 // pred_check
          %p637 = pneg %p481
        $region74: #{tpu_custom_call.1} parent=11 // pred_check_branch
          %639 = sbr.rel (%p637) target = $region76
        $region75: #{tpu_custom_call.1} parent=11 // pred_region
          _
        $region76: #{tpu_custom_call.1} parent=11 // pred_fallthru
          _
      $region12: #{tpu_custom_call.1} parent=5 // pred_fallthru
        _
      %p640 = scmp.lt.s32.totalorder %s41, 2
      // Predicated region
      $region77: #{tpu_custom_call.1} parent=5 // pred_check
        %p641 = pneg %p640
      $region78: #{tpu_custom_call.1} parent=5 // pred_check_branch
        %643 = sbr.rel (%p641) target = $region80
      $region79: #{tpu_custom_call.1} parent=5 // pred_region
        // Predicated region
        $region81: #{tpu_custom_call.1} parent=79 // pred_check
          %p644 = pneg %p61
        $region82: #{tpu_custom_call.1} parent=79 // pred_check_branch
          %646 = sbr.rel (%p644) target = $region84
        $region83: #{tpu_custom_call.1} parent=79 // pred_region
          %s647 = sand.u32 %s51, 1
          %s648 = scalar_lea.sflag [#allocation3], %s647
          %s649 = sand.u32 %s51, 1
          %s650 = smul.addr %s649, 4
          %s651 = scalar_lea.vmem [#allocation2], %s650
          %s653 = ssub.s32 64, 64
          %654 = vsyncadd %s648, %s653
          %s655 = smul.addr %s41, 64
          %s656 = scalar_lea.hbm %s0, %s655
          %s658 = sshll.u32 %s651, 4
          %s659 = int_to_ptr.vmem [resolvable:$true] %s658
          %661 = dma.hbm_to_vmem [thread:$0]  %s656, 64, %s659, %s648
        $region84: #{tpu_custom_call.1} parent=79 // pred_fallthru
          _
        // Predicated region
        $region85: #{tpu_custom_call.1} parent=79 // pred_check
          %p662 = pneg %p87
        $region86: #{tpu_custom_call.1} parent=79 // pred_check_branch
          %664 = sbr.rel (%p662) target = $region88
        $region87: #{tpu_custom_call.1} parent=79 // pred_region
          %s665 = sand.u32 %s41, 1
          %s666 = scalar_lea.sflag [#allocation6], %s665
          %s667 = sand.u32 %s77, 1
          %s668 = smul.addr %s667, 8
          %s669 = scalar_lea.vmem [#allocation5], %s668
          %s671 = ssub.s32 128, 128
          %672 = vsyncadd %s666, %s671
          %s673 = smul.addr %s41, 128
          %s674 = scalar_lea.hbm %s1, %s673
          %s676 = sshll.u32 %s669, 4
          %s677 = int_to_ptr.vmem [resolvable:$true] %s676
          %679 = dma.hbm_to_vmem [thread:$0]  %s674, 128, %s677, %s666
        $region88: #{tpu_custom_call.1} parent=79 // pred_fallthru
          _
        // Predicated region
        $region89: #{tpu_custom_call.1} parent=79 // pred_check
          %p680 = pneg %p113
        $region90: #{tpu_custom_call.1} parent=79 // pred_check_branch
          %682 = sbr.rel (%p680) target = $region92
        $region91: #{tpu_custom_call.1} parent=79 // pred_region
          %s683 = sand.u32 %s41, 1
          %s684 = scalar_lea.sflag [#allocation6], %s683
          %s685 = sand.u32 %s103, 1
          %s686 = scalar_lea.vmem [#allocation7], %s685
          %s688 = ssub.s32 16, 16
          %689 = vsyncadd %s684, %s688
          %s690 = smul.addr %s41, 16
          %s691 = scalar_lea.hbm %s2, %s690
          %s693 = sshll.u32 %s686, 4
          %s694 = int_to_ptr.vmem [resolvable:$true] %s693
          %696 = dma.hbm_to_vmem [thread:$0]  %s691, 16, %s694, %s684
        $region92: #{tpu_custom_call.1} parent=79 // pred_fallthru
          _
        // Predicated region
        $region93: #{tpu_custom_call.1} parent=79 // pred_check
          %p697 = pneg %p139
        $region94: #{tpu_custom_call.1} parent=79 // pred_check_branch
          %699 = sbr.rel (%p697) target = $region96
        $region95: #{tpu_custom_call.1} parent=79 // pred_region
          %s700 = sand.u32 %s41, 1
          %s701 = scalar_lea.sflag [#allocation9], %s700
          %s702 = sand.u32 %s129, 1
          %s703 = smul.addr %s702, 8
          %s704 = scalar_lea.vmem [#allocation8], %s703
          %s706 = ssub.s32 128, 128
          %707 = vsyncadd %s701, %s706
          %s708 = smul.addr %s41, 128
          %s709 = scalar_lea.hbm %s3, %s708
          %s711 = sshll.u32 %s704, 4
          %s712 = int_to_ptr.vmem [resolvable:$true] %s711
          %714 = dma.hbm_to_vmem [thread:$0]  %s709, 128, %s712, %s701
        $region96: #{tpu_custom_call.1} parent=79 // pred_fallthru
          _
      $region80: #{tpu_custom_call.1} parent=5 // pred_fallthru
        _
      %p715 = scmp.le.s32.totalorder 1, %s41
      %p716 = scmp.lt.s32.totalorder %s41, 3
      %p717 = pnand %p715, %p716
      %p718 = pneg %p717
      // Predicated region
      $region97: #{tpu_custom_call.1} parent=5 // pred_check
        _
      $region98: #{tpu_custom_call.1} parent=5 // pred_check_branch
        %720 = sbr.rel (%p717) target = $region100
      $region99: #{tpu_custom_call.1} parent=5 // pred_region
        %s721 = ssub.s32 %s41, 1
        %s722 = sand.u32 %s54, 1
        %s723 = scalar_lea.sflag [#allocation3], %s722
        %s724 = sand.u32 %s54, 1
        %s725 = smul.addr %s724, 4
        %s726 = scalar_lea.vmem [#allocation2], %s725
        // Predicated region
        $region101: #{tpu_custom_call.1} parent=99 // pred_check
          %p727 = pneg %p67
        $region102: #{tpu_custom_call.1} parent=99 // pred_check_branch
          %729 = sbr.rel (%p727) target = $region104
        $region103: #{tpu_custom_call.1} parent=99 // pred_region
          %730 = dma.done %s723, 64
        $region104: #{tpu_custom_call.1} parent=99 // pred_fallthru
          _
        %s731 = sand.u32 %s46, 1
        %s732 = scalar_lea.sflag [#allocation6], %s731
        %s733 = sand.u32 %s80, 1
        %s734 = smul.addr %s733, 8
        %s735 = scalar_lea.vmem [#allocation5], %s734
        // Predicated region
        $region105: #{tpu_custom_call.1} parent=99 // pred_check
          %p736 = pneg %p93
        $region106: #{tpu_custom_call.1} parent=99 // pred_check_branch
          %738 = sbr.rel (%p736) target = $region108
        $region107: #{tpu_custom_call.1} parent=99 // pred_region
          %739 = dma.done %s732, 128
        $region108: #{tpu_custom_call.1} parent=99 // pred_fallthru
          _
        %s740 = sand.u32 %s46, 1
        %s741 = scalar_lea.sflag [#allocation6], %s740
        %s742 = sand.u32 %s106, 1
        %s743 = scalar_lea.vmem [#allocation7], %s742
        // Predicated region
        $region109: #{tpu_custom_call.1} parent=99 // pred_check
          %p744 = pneg %p119
        $region110: #{tpu_custom_call.1} parent=99 // pred_check_branch
          %746 = sbr.rel (%p744) target = $region112
        $region111: #{tpu_custom_call.1} parent=99 // pred_region
          %747 = dma.done %s741, 16
        $region112: #{tpu_custom_call.1} parent=99 // pred_fallthru
          _
        %s748 = sand.u32 %s46, 1
        %s749 = scalar_lea.sflag [#allocation9], %s748
        %s750 = sand.u32 %s132, 1
        %s751 = smul.addr %s750, 8
        %s752 = scalar_lea.vmem [#allocation8], %s751
        // Predicated region
        $region113: #{tpu_custom_call.1} parent=99 // pred_check
          %p753 = pneg %p145
        $region114: #{tpu_custom_call.1} parent=99 // pred_check_branch
          %755 = sbr.rel (%p753) target = $region116
        $region115: #{tpu_custom_call.1} parent=99 // pred_region
          %756 = dma.done %s749, 128
        $region116: #{tpu_custom_call.1} parent=99 // pred_fallthru
          _
        // Predicated region
        $region117: #{tpu_custom_call.1} parent=99 // pred_check
          %p757 = pneg %p166
        $region118: #{tpu_custom_call.1} parent=99 // pred_check_branch
          %759 = sbr.rel (%p757) target = $region120
        $region119: #{tpu_custom_call.1} parent=99 // pred_region
          %760 = dma.done [#allocation9], 3072
        $region120: #{tpu_custom_call.1} parent=99 // pred_fallthru
          _
        // Predicated region
        $region121: #{tpu_custom_call.1} parent=99 // pred_check
          %p761 = pneg %p208
        $region122: #{tpu_custom_call.1} parent=99 // pred_check_branch
          %763 = sbr.rel (%p761) target = $region124
        $region123: #{tpu_custom_call.1} parent=99 // pred_region
          %764 = dma.done [#allocation12], 1024
        $region124: #{tpu_custom_call.1} parent=99 // pred_fallthru
          _
        // Predicated region
        $region125: #{tpu_custom_call.1} parent=99 // pred_check
          %p765 = pneg %p250
        $region126: #{tpu_custom_call.1} parent=99 // pred_check_branch
          %767 = sbr.rel (%p765) target = $region128
        $region127: #{tpu_custom_call.1} parent=99 // pred_region
          %768 = dma.done [#allocation12], 1024
        $region128: #{tpu_custom_call.1} parent=99 // pred_fallthru
          _
        // Predicated region
        $region129: #{tpu_custom_call.1} parent=99 // pred_check
          %p769 = pneg %p292
        $region130: #{tpu_custom_call.1} parent=99 // pred_check_branch
          %771 = sbr.rel (%p769) target = $region132
        $region131: #{tpu_custom_call.1} parent=99 // pred_region
          %772 = dma.done [#allocation15], 2048
        $region132: #{tpu_custom_call.1} parent=99 // pred_fallthru
          _
        // Predicated region
        $region133: #{tpu_custom_call.1} parent=99 // pred_check
          %p773 = pneg %p334
        $region134: #{tpu_custom_call.1} parent=99 // pred_check_branch
          %775 = sbr.rel (%p773) target = $region136
        $region135: #{tpu_custom_call.1} parent=99 // pred_region
          %776 = dma.done [#allocation15], 1024
        $region136: #{tpu_custom_call.1} parent=99 // pred_fallthru
          _
        // Predicated region
        $region137: #{tpu_custom_call.1} parent=99 // pred_check
          %p777 = pneg %p376
        $region138: #{tpu_custom_call.1} parent=99 // pred_check_branch
          %779 = sbr.rel (%p777) target = $region140
        $region139: #{tpu_custom_call.1} parent=99 // pred_region
          %780 = dma.done [#allocation18], 2048
        $region140: #{tpu_custom_call.1} parent=99 // pred_fallthru
          _
        // Predicated region
        $region141: #{tpu_custom_call.1} parent=99 // pred_check
          %p781 = pneg %p418
        $region142: #{tpu_custom_call.1} parent=99 // pred_check_branch
          %783 = sbr.rel (%p781) target = $region144
        $region143: #{tpu_custom_call.1} parent=99 // pred_region
          %784 = dma.done [#allocation18], 2048
        $region144: #{tpu_custom_call.1} parent=99 // pred_fallthru
          _
        %s785 = sand.u32 %s54, 1
        %s786 = scalar_lea.sflag [#allocation3], %s785
        %s787 = sand.u32 %s54, 1
        %s788 = smul.addr %s787, 4
        %s789 = scalar_lea.vmem [#allocation2], %s788
        %p790 = pneg %p67
        %p791 = pneg %p64
        %s792 = sand.u32 %s46, 1
        %s793 = scalar_lea.sflag [#allocation6], %s792
        %s794 = sand.u32 %s80, 1
        %s795 = smul.addr %s794, 8
        %s796 = scalar_lea.vmem [#allocation5], %s795
        %p797 = pneg %p93
        %p798 = pneg %p90
        %s799 = sand.u32 %s46, 1
        %s800 = scalar_lea.sflag [#allocation6], %s799
        %s801 = sand.u32 %s106, 1
        %s802 = scalar_lea.vmem [#allocation7], %s801
        %p803 = pneg %p119
        %p804 = pneg %p116
        %s805 = sand.u32 %s46, 1
        %s806 = scalar_lea.sflag [#allocation9], %s805
        %s807 = sand.u32 %s132, 1
        %s808 = smul.addr %s807, 8
        %s809 = scalar_lea.vmem [#allocation8], %s808
        %p810 = pneg %p145
        %p811 = pneg %p142
        %p812 = pneg %p166
        %p813 = pneg %p163
        %p814 = pneg %p187
        %p815 = pneg %p184
        %p816 = pneg %p208
        %p817 = pneg %p205
        %p818 = pneg %p229
        %p819 = pneg %p226
        %p820 = pneg %p250
        %p821 = pneg %p247
        %p822 = pneg %p271
        %p823 = pneg %p268
        %p824 = pneg %p292
        %p825 = pneg %p289
        %p826 = pneg %p313
        %p827 = pneg %p310
        %p828 = pneg %p334
        %p829 = pneg %p331
        %p830 = pneg %p355
        %p831 = pneg %p352
        %p832 = pneg %p376
        %p833 = pneg %p373
        %p834 = pneg %p397
        %p835 = pneg %p394
        %p836 = pneg %p418
        %p837 = pneg %p415
        %p838 = pneg %p439
        %p839 = pneg %p436
        %p840 = pneg %p460
        %p841 = pneg %p457
        %p842 = pneg %p481
        %p843 = pneg %p478
        %p844 = pneg %p507
        %p845 = pneg %p504
        %s846 = sand.u32 %s494, 1
        %s847 = scalar_lea.sflag [#allocation4], %s846
        %s848 = sand.u32 %s494, 1
        %s849 = smul.addr %s848, 8
        %s850 = scalar_lea.vmem [#allocation20], %s849
        %v852 = vld [vmem:[%s735] sm:$0xff]
        %v853 = vld [vmem:[%s726] sm:$0xf]
        %v854 = vld [vmem:[%s18] sm:$0x1]
        %v855 = vld [vmem:[%s19] sm:$0x1]
        %856 = vadd.xlane.f32.xlu0 %v852
        %v857 = vpop.xlane.xlu0 %856
        %v858 = vrcp.pop 128.0
        %v859 = vmul.f32 %v857, %v858
        %v860 = vsub.f32 %v852, %v859
        %v861 = vmul.f32 %v860, %v860
        %862 = vadd.xlane.f32.xlu0 %v861
        %v863 = vpop.xlane.xlu0 %862
        %v864 = vmul.f32 %v863, %v858
        %v865 = vadd.f32 %v864, 1e-05
        %v866 = vrsqrt.pop %v865
        %v867 = vmul.f32 %v860, %v866
        %v868 = vlaneseq
        %v869 = vshrl.u32 %v868, 7
        %v870 = vsub.s32 0, %v869
        %v871 = vrot.slane %v854, %v870
        %v872 = vmul.f32 %v867, %v871
        %v873 = vlaneseq
        %v874 = vshrl.u32 %v873, 7
        %v875 = vsub.s32 0, %v874
        %v876 = vrot.slane %v855, %v875
        %v877 = vadd.f32 %v872, %v876
        %v878 = vpack.c.bf16 %v877, %v877
        %v879 = vld [vmem:[#allocation10] sm:$0xff]
        %v880 = vld [vmem:[#allocation10 + $0x8] sm:$0xf]
        %v881 = vld [vmem:[#allocation10 + $0xc] sm:$0xff]
        %v882 = vld [vmem:[#allocation10 + $0x14] sm:$0xf]
        %v883 = vld [vmem:[#allocation10 + $0x18] sm:$0xff]
        %v884 = vld [vmem:[#allocation10 + $0x20] sm:$0xf]
        %v885 = vld [vmem:[#allocation10 + $0x24] sm:$0xff]
        %v886 = vld [vmem:[#allocation10 + $0x2c] sm:$0xf]
        %v887 = vld [vmem:[#allocation10 + $0x30] sm:$0xff]
        %v888 = vld [vmem:[#allocation10 + $0x38] sm:$0xf]
        %v889 = vld [vmem:[#allocation10 + $0x3c] sm:$0xff]
        %v890 = vld [vmem:[#allocation10 + $0x44] sm:$0xf]
        %v891 = vld [vmem:[#allocation10 + $0x48] sm:$0xff]
        %v892 = vld [vmem:[#allocation10 + $0x50] sm:$0xf]
        %v893 = vld [vmem:[#allocation10 + $0x54] sm:$0xff]
        %v894 = vld [vmem:[#allocation10 + $0x5c] sm:$0xf]
        %v895 = vld [vmem:[#allocation10 + $0x60] sm:$0xff]
        %v896 = vld [vmem:[#allocation10 + $0x68] sm:$0xf]
        %v897 = vld [vmem:[#allocation10 + $0x6c] sm:$0xff]
        %v898 = vld [vmem:[#allocation10 + $0x74] sm:$0xf]
        %v899 = vld [vmem:[#allocation10 + $0x78] sm:$0xff]
        %v900 = vld [vmem:[#allocation10 + $0x80] sm:$0xf]
        %v901 = vld [vmem:[#allocation10 + $0x84] sm:$0xff]
        %v902 = vld [vmem:[#allocation10 + $0x8c] sm:$0xf]
        %v903 = vld [vmem:[#allocation10 + $0x90] sm:$0xff]
        %v904 = vld [vmem:[#allocation10 + $0x98] sm:$0xf]
        %v905 = vld [vmem:[#allocation10 + $0x9c] sm:$0xff]
        %v906 = vld [vmem:[#allocation10 + $0xa4] sm:$0xf]
        %v907 = vld [vmem:[#allocation10 + $0xa8] sm:$0xff]
        %v908 = vld [vmem:[#allocation10 + $0xb0] sm:$0xf]
        %v909 = vld [vmem:[#allocation10 + $0xb4] sm:$0xff]
        %v910 = vld [vmem:[#allocation10 + $0xbc] sm:$0xf]
        %v911 = vld [vmem:[%s5] sm:$0x7]
        %v913 = vlaneseq
        %v914 = vshrl.u32 %v913, 7
        %v915 = vsub.s32 0, %v914
        %v916 = vrot.slane %v911, %v915
        %v917 = vlaneseq
        %v918 = vshrl.u32 %v917, 7
        %v919 = vsub.s32 1, %v918
        %v920 = vrot.slane %v911, %v919
        %v921 = vlaneseq
        %v922 = vshrl.u32 %v921, 7
        %v923 = vsub.s32 2, %v922
        %v924 = vrot.slane %v911, %v923
        %v960 = vunpack.c.l.b16 %v879
        %v961 = vunpack.c.h.b16 %v879
        %v962 = vunpack.c.l.b16 %v880
        %v963 = vunpack.c.l.b16 %v881
        %v964 = vunpack.c.h.b16 %v881
        %v965 = vunpack.c.l.b16 %v882
        %v966 = vunpack.c.l.b16 %v883
        %v967 = vunpack.c.h.b16 %v883
        %v968 = vunpack.c.l.b16 %v884
        %v969 = vunpack.c.l.b16 %v885
        %v970 = vunpack.c.h.b16 %v885
        %v971 = vunpack.c.l.b16 %v886
        %v972 = vunpack.c.l.b16 %v887
        %v973 = vunpack.c.h.b16 %v887
        %v974 = vunpack.c.l.b16 %v888
        %v975 = vunpack.c.l.b16 %v889
        %v976 = vunpack.c.h.b16 %v889
        %v977 = vunpack.c.l.b16 %v890
        %v978 = vunpack.c.l.b16 %v891
        %v979 = vunpack.c.h.b16 %v891
        %v980 = vunpack.c.l.b16 %v892
        %v981 = vunpack.c.l.b16 %v893
        %v982 = vunpack.c.h.b16 %v893
        %v983 = vunpack.c.l.b16 %v894
        %v984 = vunpack.c.l.b16 %v895
        %v985 = vunpack.c.h.b16 %v895
        %v986 = vunpack.c.l.b16 %v896
        %v987 = vunpack.c.l.b16 %v897
        %v988 = vunpack.c.h.b16 %v897
        %v989 = vunpack.c.l.b16 %v898
        %v990 = vunpack.c.l.b16 %v899
        %v991 = vunpack.c.h.b16 %v899
        %v992 = vunpack.c.l.b16 %v900
        %v993 = vunpack.c.l.b16 %v901
        %v994 = vunpack.c.h.b16 %v901
        %v995 = vunpack.c.l.b16 %v902
        %v996 = vunpack.c.l.b16 %v903
        %v997 = vunpack.c.h.b16 %v903
        %v998 = vunpack.c.l.b16 %v904
        %v999 = vunpack.c.l.b16 %v905
        %v1000 = vunpack.c.h.b16 %v905
        %v1001 = vunpack.c.l.b16 %v906
        %v1002 = vunpack.c.l.b16 %v907
        %v1003 = vunpack.c.h.b16 %v907
        %v1004 = vunpack.c.l.b16 %v908
        %v1005 = vunpack.c.l.b16 %v909
        %v1006 = vunpack.c.h.b16 %v909
        %v1007 = vunpack.c.l.b16 %v910
        %v1008 = vpack.c.b16 %v963, %v960
        %v1009 = vpack.c.b16 %v964, %v961
        %v1010 = vpack.c.b16 %v965, %v962
        %v1011 = vpack.c.b16 %v969, %v966
        %v1012 = vpack.c.b16 %v970, %v967
        %v1013 = vpack.c.b16 %v971, %v968
        %v1014 = vpack.c.b16 %v975, %v972
        %v1015 = vpack.c.b16 %v976, %v973
        %v1016 = vpack.c.b16 %v977, %v974
        %v1017 = vpack.c.b16 %v981, %v978
        %v1018 = vpack.c.b16 %v982, %v979
        %v1019 = vpack.c.b16 %v983, %v980
        %v1020 = vpack.c.b16 %v987, %v984
        %v1021 = vpack.c.b16 %v988, %v985
        %v1022 = vpack.c.b16 %v989, %v986
        %v1023 = vpack.c.b16 %v993, %v990
        %v1024 = vpack.c.b16 %v994, %v991
        %v1025 = vpack.c.b16 %v995, %v992
        %v1026 = vpack.c.b16 %v999, %v996
        %v1027 = vpack.c.b16 %v1000, %v997
        %v1028 = vpack.c.b16 %v1001, %v998
        %v1029 = vpack.c.b16 %v1005, %v1002
        %v1030 = vpack.c.b16 %v1006, %v1003
        %v1031 = vpack.c.b16 %v1007, %v1004
        %1056 = vmatprep.subr.bf16.mxu0 %v1009
        %1057 = vmatpush1.bf16.msra.mxu0 %v1008
        %1058 = vmatprep.subr.bf16.mxu0 %v1012
        %1059 = vmatpush1.bf16.msra.mxu0 %v1011
        %1060 = vmatprep.subr.bf16.mxu0 %v1015
        %1061 = vmatpush1.bf16.msra.mxu0 %v1014
        %1062 = vmatprep.subr.bf16.mxu0 %v1018
        %1063 = vmatpush1.bf16.msra.mxu0 %v1017
        %1064 = vmatprep.subr.bf16.mxu0 %v1021
        %1065 = vmatpush1.bf16.msra.mxu0 %v1020
        %1066 = vmatprep.subr.bf16.mxu0 %v1024
        %1067 = vmatpush1.bf16.msra.mxu0 %v1023
        %1068 = vmatprep.subr.bf16.mxu0 %v1027
        %1069 = vmatpush1.bf16.msra.mxu0 %v1026
        %1070 = vmatprep.subr.bf16.mxu0 %v1030
        %1071 = vmatpush1.bf16.msra.mxu0 %v1029
        %1072 = vmatprep.subr.bf16.mxu0 0
        %1073 = vmatpush1.bf16.msra.mxu0 0
        %1074 = vmatprep.subr.bf16.mxu0 0
        %1075 = vmatpush1.bf16.msra.mxu0 0
        %1076 = vmatprep.subr.bf16.mxu0 0
        %1077 = vmatpush1.bf16.msra.mxu0 0
        %1078 = vmatprep.subr.bf16.mxu0 0
        %1079 = vmatpush1.bf16.msra.mxu0 0
        %1080 = vmatprep.subr.bf16.mxu0 0
        %1081 = vmatpush1.bf16.msra.mxu0 0
        %1082 = vmatprep.subr.bf16.mxu0 0
        %1083 = vmatpush1.bf16.msra.mxu0 0
        %1084 = vmatprep.subr.bf16.mxu0 0
        %1085 = vmatpush1.bf16.msra.mxu0 0
        %1086 = vmatprep.subr.bf16.mxu0 0
        %1087 = vmatpush1.bf16.msra.mxu0 0
        %1088 = vmatprep.mubr.bf16.mxu0 0
        %1089 = vmatmul.mubr.bf16.gmra.mrb[0].mxu0 %v878
        %v1090 = vpop.f32.mrb[0].mxu0
        %v1091 = vadd.f32 %v916, %v1090
        %v1092 = vpop.f32.mrb[0].mxu0
        %v1093 = vadd.f32 %v920, %v1092
        %v1094 = vpop.f32.mrb[0].mxu0
        %v1095 = vpop.f32.mrb[0].mxu0
        %1096 = vdwg.mxu0
        %1097 = vmatprep.subr.bf16.mxu0 0
        %1098 = vmatpush1.bf16.msra.mxu0 %v1010
        %1099 = vmatprep.subr.bf16.mxu0 0
        %1100 = vmatpush1.bf16.msra.mxu0 %v1013
        %1101 = vmatprep.subr.bf16.mxu0 0
        %1102 = vmatpush1.bf16.msra.mxu0 %v1016
        %1103 = vmatprep.subr.bf16.mxu0 0
        %1104 = vmatpush1.bf16.msra.mxu0 %v1019
        %1105 = vmatprep.subr.bf16.mxu0 0
        %1106 = vmatpush1.bf16.msra.mxu0 %v1022
        %1107 = vmatprep.subr.bf16.mxu0 0
        %1108 = vmatpush1.bf16.msra.mxu0 %v1025
        %1109 = vmatprep.subr.bf16.mxu0 0
        %1110 = vmatpush1.bf16.msra.mxu0 %v1028
        %1111 = vmatprep.subr.bf16.mxu0 0
        %1112 = vmatpush1.bf16.msra.mxu0 %v1031
        %1113 = vmatprep.subr.bf16.mxu0 0
        %1114 = vmatpush1.bf16.msra.mxu0 0
        %1115 = vmatprep.subr.bf16.mxu0 0
        %1116 = vmatpush1.bf16.msra.mxu0 0
        %1117 = vmatprep.subr.bf16.mxu0 0
        %1118 = vmatpush1.bf16.msra.mxu0 0
        %1119 = vmatprep.subr.bf16.mxu0 0
        %1120 = vmatpush1.bf16.msra.mxu0 0
        %1121 = vmatprep.subr.bf16.mxu0 0
        %1122 = vmatpush1.bf16.msra.mxu0 0
        %1123 = vmatprep.subr.bf16.mxu0 0
        %1124 = vmatpush1.bf16.msra.mxu0 0
        %1125 = vmatprep.subr.bf16.mxu0 0
        %1126 = vmatpush1.bf16.msra.mxu0 0
        %1127 = vmatprep.subr.bf16.mxu0 0
        %1128 = vmatpush1.bf16.msra.mxu0 0
        %1129 = vmatprep.mubr.bf16.mxu0 0
        %1130 = vmatmul.mubr.bf16.gmra.mrb[0].mxu0 %v878
        %v1131 = vpop.f32.mrb[0].mxu0
        %v1132 = vadd.f32 %v924, %v1131
        %v1133 = vpop.f32.mrb[0].mxu0
        %v1134 = vpop.f32.mrb[0].mxu0
        %v1135 = vpop.f32.mrb[0].mxu0
        %1136 = vdwg.mxu0
        %1138 = vrot.lane.b32.xlu0 %v1091, 96
        %v1139 = vpop.permute.xlu0 %1138
        %1141 = vrot.lane.b32.xlu0 %v1091, 64
        %v1142 = vpop.permute.xlu0 %1141
        %1144 = vrot.lane.b32.xlu0 %v1091, 32
        %v1145 = vpop.permute.xlu0 %1144
        %v1147 = vcombine.low %v1091, %v1142
        %v1148 = vcombine.high %v1091, %v1142
        %v1150 = vunpack.c.l.s4 1983009808
        %v1151 = vunpack.c.0.s8 %v1150
        %v1152 = vlaneseq
        %v1153 = vshrl.u32 %v1152, 7
        %v1154 = vsub.s32 %v1151, %v1153
        %v1155 = vrot.slane %v1147, %v1154
        %v1157 = vunpack.c.l.s4 1983009808
        %v1158 = vunpack.c.0.s8 %v1157
        %v1159 = vlaneseq
        %v1160 = vshrl.u32 %v1159, 7
        %v1161 = vsub.s32 %v1158, %v1160
        %v1162 = vrot.slane %v1148, %v1161
        %v1163 = vcombine.low %v1139, %v1145
        %v1164 = vcombine.high %v1139, %v1145
        %v1166 = vunpack.c.l.s4 1983009808
        %v1167 = vunpack.c.0.s8 %v1166
        %v1168 = vlaneseq
        %v1169 = vshrl.u32 %v1168, 7
        %v1170 = vsub.s32 %v1167, %v1169
        %v1171 = vrot.slane %v1163, %v1170
        %v1173 = vunpack.c.l.s4 1983009808
        %v1174 = vunpack.c.0.s8 %v1173
        %v1175 = vlaneseq
        %v1176 = vshrl.u32 %v1175, 7
        %v1177 = vsub.s32 %v1174, %v1176
        %v1178 = vrot.slane %v1164, %v1177
        %v1179 = vcombine.low %v1155, %v1171
        %v1180 = vcombine.high %v1155, %v1171
        %v1182 = vunpack.c.l.s4 1934713408
        %v1183 = vunpack.c.0.s8 %v1182
        %v1184 = vlaneseq
        %v1185 = vshrl.u32 %v1184, 7
        %v1186 = vsub.s32 %v1183, %v1185
        %v1187 = vrot.slane %v1179, %v1186
        %v1189 = vunpack.c.l.s4 1934713408
        %v1190 = vunpack.c.0.s8 %v1189
        %v1191 = vlaneseq
        %v1192 = vshrl.u32 %v1191, 7
        %v1193 = vsub.s32 %v1190, %v1192
        %v1194 = vrot.slane %v1180, %v1193
        %v1195 = vcombine.low %v1162, %v1178
        %v1196 = vcombine.high %v1162, %v1178
        %v1198 = vunpack.c.l.s4 1934713408
        %v1199 = vunpack.c.0.s8 %v1198
        %v1200 = vlaneseq
        %v1201 = vshrl.u32 %v1200, 7
        %v1202 = vsub.s32 %v1199, %v1201
        %v1203 = vrot.slane %v1195, %v1202
        %v1205 = vunpack.c.l.s4 1934713408
        %v1206 = vunpack.c.0.s8 %v1205
        %v1207 = vlaneseq
        %v1208 = vshrl.u32 %v1207, 7
        %v1209 = vsub.s32 %v1206, %v1208
        %v1210 = vrot.slane %v1196, %v1209
        %v1211 = vcombine.high %v1187, 0.0
        %v1212 = vcombine.high %v1194, 0.0
        %v1213 = vcombine.high %v1203, 0.0
        %v1214 = vcombine.high %v1210, 0.0
        %v1215 = vcombine.low %v1187, %v1194
        %v1217 = vunpack.c.l.s4 1983009808
        %v1218 = vunpack.c.0.s8 %v1217
        %v1219 = vlaneseq
        %v1220 = vshrl.u32 %v1219, 7
        %v1221 = vsub.s32 %v1218, %v1220
        %v1222 = vrot.slane %v1215, %v1221
        %v1223 = vcombine.low %v1211, %v1212
        %v1225 = vunpack.c.l.s4 1983009808
        %v1226 = vunpack.c.0.s8 %v1225
        %v1227 = vlaneseq
        %v1228 = vshrl.u32 %v1227, 7
        %v1229 = vsub.s32 %v1226, %v1228
        %v1230 = vrot.slane %v1223, %v1229
        %v1231 = vcombine.low %v1203, %v1210
        %v1233 = vunpack.c.l.s4 1983009808
        %v1234 = vunpack.c.0.s8 %v1233
        %v1235 = vlaneseq
        %v1236 = vshrl.u32 %v1235, 7
        %v1237 = vsub.s32 %v1234, %v1236
        %v1238 = vrot.slane %v1231, %v1237
        %v1239 = vcombine.low %v1213, %v1214
        %v1241 = vunpack.c.l.s4 1983009808
        %v1242 = vunpack.c.0.s8 %v1241
        %v1243 = vlaneseq
        %v1244 = vshrl.u32 %v1243, 7
        %v1245 = vsub.s32 %v1242, %v1244
        %v1246 = vrot.slane %v1239, %v1245
        %v1247 = vcombine.low %v1222, %v1230
        %v1248 = vcombine.high %v1222, %v1230
        %v1250 = vunpack.c.l.s4 1934713408
        %v1251 = vunpack.c.0.s8 %v1250
        %v1252 = vlaneseq
        %v1253 = vshrl.u32 %v1252, 7
        %v1254 = vsub.s32 %v1251, %v1253
        %v1255 = vrot.slane %v1247, %v1254
        %v1257 = vunpack.c.l.s4 1934713408
        %v1258 = vunpack.c.0.s8 %v1257
        %v1259 = vlaneseq
        %v1260 = vshrl.u32 %v1259, 7
        %v1261 = vsub.s32 %v1258, %v1260
        %v1262 = vrot.slane %v1248, %v1261
        %v1263 = vcombine.low %v1238, %v1246
        %v1264 = vcombine.high %v1238, %v1246
        %v1266 = vunpack.c.l.s4 1934713408
        %v1267 = vunpack.c.0.s8 %v1266
        %v1268 = vlaneseq
        %v1269 = vshrl.u32 %v1268, 7
        %v1270 = vsub.s32 %v1267, %v1269
        %v1271 = vrot.slane %v1263, %v1270
        %v1273 = vunpack.c.l.s4 1934713408
        %v1274 = vunpack.c.0.s8 %v1273
        %v1275 = vlaneseq
        %v1276 = vshrl.u32 %v1275, 7
        %v1277 = vsub.s32 %v1274, %v1276
        %v1278 = vrot.slane %v1264, %v1277
        %v1279 = vcombine.low %v1255, %v1271
        %v1280 = vcombine.high %v1255, %v1271
        %v1281 = vcombine.low %v1262, %v1278
        %v1282 = vcombine.high %v1262, %v1278
        %v1283 = vpack.c.bf16 %v1279, %v1279
        %v1284 = vpack.c.bf16 %v1280, %v1280
        %v1285 = vpack.c.bf16 %v1281, %v1281
        %v1286 = vpack.c.bf16 %v1282, %v1282
        %1288 = vrot.lane.b32.xlu0 %v1093, 96
        %v1289 = vpop.permute.xlu0 %1288
        %1291 = vrot.lane.b32.xlu0 %v1093, 64
        %v1292 = vpop.permute.xlu0 %1291
        %1294 = vrot.lane.b32.xlu0 %v1093, 32
        %v1295 = vpop.permute.xlu0 %1294
        %v1297 = vcombine.low %v1093, %v1292
        %v1298 = vcombine.high %v1093, %v1292
        %v1300 = vunpack.c.l.s4 1983009808
        %v1301 = vunpack.c.0.s8 %v1300
        %v1302 = vlaneseq
        %v1303 = vshrl.u32 %v1302, 7
        %v1304 = vsub.s32 %v1301, %v1303
        %v1305 = vrot.slane %v1297, %v1304
        %v1307 = vunpack.c.l.s4 1983009808
        %v1308 = vunpack.c.0.s8 %v1307
        %v1309 = vlaneseq
        %v1310 = vshrl.u32 %v1309, 7
        %v1311 = vsub.s32 %v1308, %v1310
        %v1312 = vrot.slane %v1298, %v1311
        %v1313 = vcombine.low %v1289, %v1295
        %v1314 = vcombine.high %v1289, %v1295
        %v1316 = vunpack.c.l.s4 1983009808
        %v1317 = vunpack.c.0.s8 %v1316
        %v1318 = vlaneseq
        %v1319 = vshrl.u32 %v1318, 7
        %v1320 = vsub.s32 %v1317, %v1319
        %v1321 = vrot.slane %v1313, %v1320
        %v1323 = vunpack.c.l.s4 1983009808
        %v1324 = vunpack.c.0.s8 %v1323
        %v1325 = vlaneseq
        %v1326 = vshrl.u32 %v1325, 7
        %v1327 = vsub.s32 %v1324, %v1326
        %v1328 = vrot.slane %v1314, %v1327
        %v1329 = vcombine.low %v1305, %v1321
        %v1330 = vcombine.high %v1305, %v1321
        %v1332 = vunpack.c.l.s4 1934713408
        %v1333 = vunpack.c.0.s8 %v1332
        %v1334 = vlaneseq
        %v1335 = vshrl.u32 %v1334, 7
        %v1336 = vsub.s32 %v1333, %v1335
        %v1337 = vrot.slane %v1329, %v1336
        %v1339 = vunpack.c.l.s4 1934713408
        %v1340 = vunpack.c.0.s8 %v1339
        %v1341 = vlaneseq
        %v1342 = vshrl.u32 %v1341, 7
        %v1343 = vsub.s32 %v1340, %v1342
        %v1344 = vrot.slane %v1330, %v1343
        %v1345 = vcombine.low %v1312, %v1328
        %v1346 = vcombine.high %v1312, %v1328
        %v1348 = vunpack.c.l.s4 1934713408
        %v1349 = vunpack.c.0.s8 %v1348
        %v1350 = vlaneseq
        %v1351 = vshrl.u32 %v1350, 7
        %v1352 = vsub.s32 %v1349, %v1351
        %v1353 = vrot.slane %v1345, %v1352
        %v1355 = vunpack.c.l.s4 1934713408
        %v1356 = vunpack.c.0.s8 %v1355
        %v1357 = vlaneseq
        %v1358 = vshrl.u32 %v1357, 7
        %v1359 = vsub.s32 %v1356, %v1358
        %v1360 = vrot.slane %v1346, %v1359
        %v1361 = vcombine.high %v1337, 0.0
        %v1362 = vcombine.high %v1344, 0.0
        %v1363 = vcombine.high %v1353, 0.0
        %v1364 = vcombine.high %v1360, 0.0
        %v1365 = vcombine.low %v1337, %v1344
        %v1367 = vunpack.c.l.s4 1983009808
        %v1368 = vunpack.c.0.s8 %v1367
        %v1369 = vlaneseq
        %v1370 = vshrl.u32 %v1369, 7
        %v1371 = vsub.s32 %v1368, %v1370
        %v1372 = vrot.slane %v1365, %v1371
        %v1373 = vcombine.low %v1361, %v1362
        %v1375 = vunpack.c.l.s4 1983009808
        %v1376 = vunpack.c.0.s8 %v1375
        %v1377 = vlaneseq
        %v1378 = vshrl.u32 %v1377, 7
        %v1379 = vsub.s32 %v1376, %v1378
        %v1380 = vrot.slane %v1373, %v1379
        %v1381 = vcombine.low %v1353, %v1360
        %v1383 = vunpack.c.l.s4 1983009808
        %v1384 = vunpack.c.0.s8 %v1383
        %v1385 = vlaneseq
        %v1386 = vshrl.u32 %v1385, 7
        %v1387 = vsub.s32 %v1384, %v1386
        %v1388 = vrot.slane %v1381, %v1387
        %v1389 = vcombine.low %v1363, %v1364
        %v1391 = vunpack.c.l.s4 1983009808
        %v1392 = vunpack.c.0.s8 %v1391
        %v1393 = vlaneseq
        %v1394 = vshrl.u32 %v1393, 7
        %v1395 = vsub.s32 %v1392, %v1394
        %v1396 = vrot.slane %v1389, %v1395
        %v1397 = vcombine.low %v1372, %v1380
        %v1398 = vcombine.high %v1372, %v1380
        %v1400 = vunpack.c.l.s4 1934713408
        %v1401 = vunpack.c.0.s8 %v1400
        %v1402 = vlaneseq
        %v1403 = vshrl.u32 %v1402, 7
        %v1404 = vsub.s32 %v1401, %v1403
        %v1405 = vrot.slane %v1397, %v1404
        %v1407 = vunpack.c.l.s4 1934713408
        %v1408 = vunpack.c.0.s8 %v1407
        %v1409 = vlaneseq
        %v1410 = vshrl.u32 %v1409, 7
        %v1411 = vsub.s32 %v1408, %v1410
        %v1412 = vrot.slane %v1398, %v1411
        %v1413 = vcombine.low %v1388, %v1396
        %v1414 = vcombine.high %v1388, %v1396
        %v1416 = vunpack.c.l.s4 1934713408
        %v1417 = vunpack.c.0.s8 %v1416
        %v1418 = vlaneseq
        %v1419 = vshrl.u32 %v1418, 7
        %v1420 = vsub.s32 %v1417, %v1419
        %v1421 = vrot.slane %v1413, %v1420
        %v1423 = vunpack.c.l.s4 1934713408
        %v1424 = vunpack.c.0.s8 %v1423
        %v1425 = vlaneseq
        %v1426 = vshrl.u32 %v1425, 7
        %v1427 = vsub.s32 %v1424, %v1426
        %v1428 = vrot.slane %v1414, %v1427
        %v1429 = vcombine.low %v1405, %v1421
        %v1430 = vcombine.high %v1405, %v1421
        %v1431 = vcombine.low %v1412, %v1428
        %v1432 = vcombine.high %v1412, %v1428
        %v1433 = vpack.c.bf16 %v1429, %v1429
        %v1434 = vpack.c.bf16 %v1430, %v1430
        %v1435 = vpack.c.bf16 %v1431, %v1431
        %v1436 = vpack.c.bf16 %v1432, %v1432
        %1438 = vrot.lane.b32.xlu0 %v1132, 96
        %v1439 = vpop.permute.xlu0 %1438
        %1441 = vrot.lane.b32.xlu0 %v1132, 64
        %v1442 = vpop.permute.xlu0 %1441
        %1444 = vrot.lane.b32.xlu0 %v1132, 32
        %v1445 = vpop.permute.xlu0 %1444
        %v1447 = vcombine.low %v1132, %v1442
        %v1448 = vcombine.high %v1132, %v1442
        %v1450 = vunpack.c.l.s4 1983009808
        %v1451 = vunpack.c.0.s8 %v1450
        %v1452 = vlaneseq
        %v1453 = vshrl.u32 %v1452, 7
        %v1454 = vsub.s32 %v1451, %v1453
        %v1455 = vrot.slane %v1447, %v1454
        %v1457 = vunpack.c.l.s4 1983009808
        %v1458 = vunpack.c.0.s8 %v1457
        %v1459 = vlaneseq
        %v1460 = vshrl.u32 %v1459, 7
        %v1461 = vsub.s32 %v1458, %v1460
        %v1462 = vrot.slane %v1448, %v1461
        %v1463 = vcombine.low %v1439, %v1445
        %v1464 = vcombine.high %v1439, %v1445
        %v1466 = vunpack.c.l.s4 1983009808
        %v1467 = vunpack.c.0.s8 %v1466
        %v1468 = vlaneseq
        %v1469 = vshrl.u32 %v1468, 7
        %v1470 = vsub.s32 %v1467, %v1469
        %v1471 = vrot.slane %v1463, %v1470
        %v1473 = vunpack.c.l.s4 1983009808
        %v1474 = vunpack.c.0.s8 %v1473
        %v1475 = vlaneseq
        %v1476 = vshrl.u32 %v1475, 7
        %v1477 = vsub.s32 %v1474, %v1476
        %v1478 = vrot.slane %v1464, %v1477
        %v1479 = vcombine.low %v1455, %v1471
        %v1480 = vcombine.high %v1455, %v1471
        %v1482 = vunpack.c.l.s4 1934713408
        %v1483 = vunpack.c.0.s8 %v1482
        %v1484 = vlaneseq
        %v1485 = vshrl.u32 %v1484, 7
        %v1486 = vsub.s32 %v1483, %v1485
        %v1487 = vrot.slane %v1479, %v1486
        %v1489 = vunpack.c.l.s4 1934713408
        %v1490 = vunpack.c.0.s8 %v1489
        %v1491 = vlaneseq
        %v1492 = vshrl.u32 %v1491, 7
        %v1493 = vsub.s32 %v1490, %v1492
        %v1494 = vrot.slane %v1480, %v1493
        %v1495 = vcombine.low %v1462, %v1478
        %v1496 = vcombine.high %v1462, %v1478
        %v1498 = vunpack.c.l.s4 1934713408
        %v1499 = vunpack.c.0.s8 %v1498
        %v1500 = vlaneseq
        %v1501 = vshrl.u32 %v1500, 7
        %v1502 = vsub.s32 %v1499, %v1501
        %v1503 = vrot.slane %v1495, %v1502
        %v1505 = vunpack.c.l.s4 1934713408
        %v1506 = vunpack.c.0.s8 %v1505
        %v1507 = vlaneseq
        %v1508 = vshrl.u32 %v1507, 7
        %v1509 = vsub.s32 %v1506, %v1508
        %v1510 = vrot.slane %v1496, %v1509
        %v1511 = vcombine.high %v1487, 0.0
        %v1512 = vcombine.high %v1494, 0.0
        %v1513 = vcombine.high %v1503, 0.0
        %v1514 = vcombine.high %v1510, 0.0
        %v1515 = vcombine.low %v1487, %v1494
        %v1517 = vunpack.c.l.s4 1983009808
        %v1518 = vunpack.c.0.s8 %v1517
        %v1519 = vlaneseq
        %v1520 = vshrl.u32 %v1519, 7
        %v1521 = vsub.s32 %v1518, %v1520
        %v1522 = vrot.slane %v1515, %v1521
        %v1523 = vcombine.low %v1511, %v1512
        %v1525 = vunpack.c.l.s4 1983009808
        %v1526 = vunpack.c.0.s8 %v1525
        %v1527 = vlaneseq
        %v1528 = vshrl.u32 %v1527, 7
        %v1529 = vsub.s32 %v1526, %v1528
        %v1530 = vrot.slane %v1523, %v1529
        %v1531 = vcombine.low %v1503, %v1510
        %v1533 = vunpack.c.l.s4 1983009808
        %v1534 = vunpack.c.0.s8 %v1533
        %v1535 = vlaneseq
        %v1536 = vshrl.u32 %v1535, 7
        %v1537 = vsub.s32 %v1534, %v1536
        %v1538 = vrot.slane %v1531, %v1537
        %v1539 = vcombine.low %v1513, %v1514
        %v1541 = vunpack.c.l.s4 1983009808
        %v1542 = vunpack.c.0.s8 %v1541
        %v1543 = vlaneseq
        %v1544 = vshrl.u32 %v1543, 7
        %v1545 = vsub.s32 %v1542, %v1544
        %v1546 = vrot.slane %v1539, %v1545
        %v1547 = vcombine.low %v1522, %v1530
        %v1548 = vcombine.high %v1522, %v1530
        %v1550 = vunpack.c.l.s4 1934713408
        %v1551 = vunpack.c.0.s8 %v1550
        %v1552 = vlaneseq
        %v1553 = vshrl.u32 %v1552, 7
        %v1554 = vsub.s32 %v1551, %v1553
        %v1555 = vrot.slane %v1547, %v1554
        %v1557 = vunpack.c.l.s4 1934713408
        %v1558 = vunpack.c.0.s8 %v1557
        %v1559 = vlaneseq
        %v1560 = vshrl.u32 %v1559, 7
        %v1561 = vsub.s32 %v1558, %v1560
        %v1562 = vrot.slane %v1548, %v1561
        %v1563 = vcombine.low %v1538, %v1546
        %v1564 = vcombine.high %v1538, %v1546
        %v1566 = vunpack.c.l.s4 1934713408
        %v1567 = vunpack.c.0.s8 %v1566
        %v1568 = vlaneseq
        %v1569 = vshrl.u32 %v1568, 7
        %v1570 = vsub.s32 %v1567, %v1569
        %v1571 = vrot.slane %v1563, %v1570
        %v1573 = vunpack.c.l.s4 1934713408
        %v1574 = vunpack.c.0.s8 %v1573
        %v1575 = vlaneseq
        %v1576 = vshrl.u32 %v1575, 7
        %v1577 = vsub.s32 %v1574, %v1576
        %v1578 = vrot.slane %v1564, %v1577
        %v1579 = vcombine.low %v1555, %v1571
        %v1580 = vcombine.high %v1555, %v1571
        %v1581 = vcombine.low %v1562, %v1578
        %v1582 = vcombine.high %v1562, %v1578
        %v1583 = vpack.c.bf16 %v1579, %v1579
        %v1584 = vpack.c.bf16 %v1580, %v1580
        %v1585 = vpack.c.bf16 %v1581, %v1581
        %v1586 = vpack.c.bf16 %v1582, %v1582
        %v1587 = vld [vmem:[%s752] sm:$0xff]
        %vm1588 = vcmask 261120
        %v1590 = vsel %vm1588, %v1283, 0
        %v1593 = vsel %vm1588, %v1433, 0
        %1595 = vmatprep.subr.bf16.mxu0 0
        %1596 = vmatpush1.bf16.xpose.msra.mxu0 %v1593
        %1597 = vmatprep.subr.bf16.mxu0 0
        %1598 = vmatpush1.bf16.xpose.msra.mxu0 0
        %1599 = vmatprep.subr.bf16.mxu0 0
        %1600 = vmatpush1.bf16.xpose.msra.mxu0 0
        %1601 = vmatprep.subr.bf16.mxu0 0
        %1602 = vmatpush1.bf16.xpose.msra.mxu0 0
        %1603 = vmatprep.subr.bf16.mxu0 0
        %1604 = vmatpush1.bf16.xpose.msra.mxu0 0
        %1605 = vmatprep.subr.bf16.mxu0 0
        %1606 = vmatpush1.bf16.xpose.msra.mxu0 0
        %1607 = vmatprep.subr.bf16.mxu0 0
        %1608 = vmatpush1.bf16.xpose.msra.mxu0 0
        %1609 = vmatprep.subr.bf16.mxu0 0
        %1610 = vmatpush1.bf16.xpose.msra.mxu0 0
        %1611 = vmatprep.subr.bf16.mxu0 0
        %1612 = vmatpush1.bf16.xpose.msra.mxu0 0
        %1613 = vmatprep.subr.bf16.mxu0 0
        %1614 = vmatpush1.bf16.xpose.msra.mxu0 0
        %1615 = vmatprep.subr.bf16.mxu0 0
        %1616 = vmatpush1.bf16.xpose.msra.mxu0 0
        %1617 = vmatprep.subr.bf16.mxu0 0
        %1618 = vmatpush1.bf16.xpose.msra.mxu0 0
        %1619 = vmatprep.subr.bf16.mxu0 0
        %1620 = vmatpush1.bf16.xpose.msra.mxu0 0
        %1621 = vmatprep.subr.bf16.mxu0 0
        %1622 = vmatpush1.bf16.xpose.msra.mxu0 0
        %1623 = vmatprep.subr.bf16.mxu0 0
        %1624 = vmatpush1.bf16.xpose.msra.mxu0 0
        %1625 = vmatprep.subr.bf16.mxu0 0
        %1626 = vmatpush1.bf16.xpose.msra.mxu0 0
        %1627 = vmatprep.mubr.bf16.mxu0 0
        %1628 = vmatmul.mubr.bf16.gmra.mrb[0].mxu0 %v1590
        %v1629 = vpop.f32.mrb[0].mxu0
        %v1630 = vadd.f32 %v1587, %v1629
        %v1631 = vpop.f32.mrb[0].mxu0
        %v1632 = vpop.f32.mrb[0].mxu0
        %v1633 = vpop.f32.mrb[0].mxu0
        %1634 = vdwg.mxu0
        %v1636 = vsel %vm1588, %v1284, 0
        %v1639 = vsel %vm1588, %v1434, 0
        %1641 = vmatprep.subr.bf16.mxu0 0
        %1642 = vmatpush1.bf16.xpose.msra.mxu0 %v1639
        %1643 = vmatprep.subr.bf16.mxu0 0
        %1644 = vmatpush1.bf16.xpose.msra.mxu0 0
        %1645 = vmatprep.subr.bf16.mxu0 0
        %1646 = vmatpush1.bf16.xpose.msra.mxu0 0
        %1647 = vmatprep.subr.bf16.mxu0 0
        %1648 = vmatpush1.bf16.xpose.msra.mxu0 0
        %1649 = vmatprep.subr.bf16.mxu0 0
        %1650 = vmatpush1.bf16.xpose.msra.mxu0 0
        %1651 = vmatprep.subr.bf16.mxu0 0
        %1652 = vmatpush1.bf16.xpose.msra.mxu0 0
        %1653 = vmatprep.subr.bf16.mxu0 0
        %1654 = vmatpush1.bf16.xpose.msra.mxu0 0
        %1655 = vmatprep.subr.bf16.mxu0 0
        %1656 = vmatpush1.bf16.xpose.msra.mxu0 0
        %1657 = vmatprep.subr.bf16.mxu0 0
        %1658 = vmatpush1.bf16.xpose.msra.mxu0 0
        %1659 = vmatprep.subr.bf16.mxu0 0
        %1660 = vmatpush1.bf16.xpose.msra.mxu0 0
        %1661 = vmatprep.subr.bf16.mxu0 0
        %1662 = vmatpush1.bf16.xpose.msra.mxu0 0
        %1663 = vmatprep.subr.bf16.mxu0 0
        %1664 = vmatpush1.bf16.xpose.msra.mxu0 0
        %1665 = vmatprep.subr.bf16.mxu0 0
        %1666 = vmatpush1.bf16.xpose.msra.mxu0 0
        %1667 = vmatprep.subr.bf16.mxu0 0
        %1668 = vmatpush1.bf16.xpose.msra.mxu0 0
        %1669 = vmatprep.subr.bf16.mxu0 0
        %1670 = vmatpush1.bf16.xpose.msra.mxu0 0
        %1671 = vmatprep.subr.bf16.mxu0 0
        %1672 = vmatpush1.bf16.xpose.msra.mxu0 0
        %1673 = vmatprep.mubr.bf16.mxu0 0
        %1674 = vmatmul.mubr.bf16.gmra.mrb[0].mxu0 %v1636
        %v1675 = vpop.f32.mrb[0].mxu0
        %v1676 = vadd.f32 %v1587, %v1675
        %v1677 = vpop.f32.mrb[0].mxu0
        %v1678 = vpop.f32.mrb[0].mxu0
        %v1679 = vpop.f32.mrb[0].mxu0
        %1680 = vdwg.mxu0
        %v1682 = vsel %vm1588, %v1285, 0
        %v1685 = vsel %vm1588, %v1435, 0
        %1687 = vmatprep.subr.bf16.mxu0 0
        %1688 = vmatpush1.bf16.xpose.msra.mxu0 %v1685
        %1689 = vmatprep.subr.bf16.mxu0 0
        %1690 = vmatpush1.bf16.xpose.msra.mxu0 0
        %1691 = vmatprep.subr.bf16.mxu0 0
        %1692 = vmatpush1.bf16.xpose.msra.mxu0 0
        %1693 = vmatprep.subr.bf16.mxu0 0
        %1694 = vmatpush1.bf16.xpose.msra.mxu0 0
        %1695 = vmatprep.subr.bf16.mxu0 0
        %1696 = vmatpush1.bf16.xpose.msra.mxu0 0
        %1697 = vmatprep.subr.bf16.mxu0 0
        %1698 = vmatpush1.bf16.xpose.msra.mxu0 0
        %1699 = vmatprep.subr.bf16.mxu0 0
        %1700 = vmatpush1.bf16.xpose.msra.mxu0 0
        %1701 = vmatprep.subr.bf16.mxu0 0
        %1702 = vmatpush1.bf16.xpose.msra.mxu0 0
        %1703 = vmatprep.subr.bf16.mxu0 0
        %1704 = vmatpush1.bf16.xpose.msra.mxu0 0
        %1705 = vmatprep.subr.bf16.mxu0 0
        %1706 = vmatpush1.bf16.xpose.msra.mxu0 0
        %1707 = vmatprep.subr.bf16.mxu0 0
        %1708 = vmatpush1.bf16.xpose.msra.mxu0 0
        %1709 = vmatprep.subr.bf16.mxu0 0
        %1710 = vmatpush1.bf16.xpose.msra.mxu0 0
        %1711 = vmatprep.subr.bf16.mxu0 0
        %1712 = vmatpush1.bf16.xpose.msra.mxu0 0
        %1713 = vmatprep.subr.bf16.mxu0 0
        %1714 = vmatpush1.bf16.xpose.msra.mxu0 0
        %1715 = vmatprep.subr.bf16.mxu0 0
        %1716 = vmatpush1.bf16.xpose.msra.mxu0 0
        %1717 = vmatprep.subr.bf16.mxu0 0
        %1718 = vmatpush1.bf16.xpose.msra.mxu0 0
        %1719 = vmatprep.mubr.bf16.mxu0 0
        %1720 = vmatmul.mubr.bf16.gmra.mrb[0].mxu0 %v1682
        %v1721 = vpop.f32.mrb[0].mxu0
        %v1722 = vadd.f32 %v1587, %v1721
        %v1723 = vpop.f32.mrb[0].mxu0
        %v1724 = vpop.f32.mrb[0].mxu0
        %v1725 = vpop.f32.mrb[0].mxu0
        %1726 = vdwg.mxu0
        %v1728 = vsel %vm1588, %v1286, 0
        %v1731 = vsel %vm1588, %v1436, 0
        %1733 = vmatprep.subr.bf16.mxu0 0
        %1734 = vmatpush1.bf16.xpose.msra.mxu0 %v1731
        %1735 = vmatprep.subr.bf16.mxu0 0
        %1736 = vmatpush1.bf16.xpose.msra.mxu0 0
        %1737 = vmatprep.subr.bf16.mxu0 0
        %1738 = vmatpush1.bf16.xpose.msra.mxu0 0
        %1739 = vmatprep.subr.bf16.mxu0 0
        %1740 = vmatpush1.bf16.xpose.msra.mxu0 0
        %1741 = vmatprep.subr.bf16.mxu0 0
        %1742 = vmatpush1.bf16.xpose.msra.mxu0 0
        %1743 = vmatprep.subr.bf16.mxu0 0
        %1744 = vmatpush1.bf16.xpose.msra.mxu0 0
        %1745 = vmatprep.subr.bf16.mxu0 0
        %1746 = vmatpush1.bf16.xpose.msra.mxu0 0
        %1747 = vmatprep.subr.bf16.mxu0 0
        %1748 = vmatpush1.bf16.xpose.msra.mxu0 0
        %1749 = vmatprep.subr.bf16.mxu0 0
        %1750 = vmatpush1.bf16.xpose.msra.mxu0 0
        %1751 = vmatprep.subr.bf16.mxu0 0
        %1752 = vmatpush1.bf16.xpose.msra.mxu0 0
        %1753 = vmatprep.subr.bf16.mxu0 0
        %1754 = vmatpush1.bf16.xpose.msra.mxu0 0
        %1755 = vmatprep.subr.bf16.mxu0 0
        %1756 = vmatpush1.bf16.xpose.msra.mxu0 0
        %1757 = vmatprep.subr.bf16.mxu0 0
        %1758 = vmatpush1.bf16.xpose.msra.mxu0 0
        %1759 = vmatprep.subr.bf16.mxu0 0
        %1760 = vmatpush1.bf16.xpose.msra.mxu0 0
        %1761 = vmatprep.subr.bf16.mxu0 0
        %1762 = vmatpush1.bf16.xpose.msra.mxu0 0
        %1763 = vmatprep.subr.bf16.mxu0 0
        %1764 = vmatpush1.bf16.xpose.msra.mxu0 0
        %1765 = vmatprep.mubr.bf16.mxu0 0
        %1766 = vmatmul.mubr.bf16.gmra.mrb[0].mxu0 %v1728
        %v1767 = vpop.f32.mrb[0].mxu0
        %v1768 = vadd.f32 %v1587, %v1767
        %v1769 = vpop.f32.mrb[0].mxu0
        %v1770 = vpop.f32.mrb[0].mxu0
        %v1771 = vpop.f32.mrb[0].mxu0
        %1772 = vdwg.mxu0
        %vm1773 = vcmask 64512
        %v1774 = vsel %vm1773, %v1630, -inf
        %1775 = vmax.xlane.f32.xlu0 %v1774
        %v1776 = vpop.xlane.xlu0 %1775
        %v1777 = vsel %vm1773, %v1676, -inf
        %1778 = vmax.xlane.f32.xlu0 %v1777
        %v1779 = vpop.xlane.xlu0 %1778
        %v1780 = vsel %vm1773, %v1722, -inf
        %1781 = vmax.xlane.f32.xlu0 %v1780
        %v1782 = vpop.xlane.xlu0 %1781
        %v1783 = vsel %vm1773, %v1768, -inf
        %1784 = vmax.xlane.f32.xlu0 %v1783
        %v1785 = vpop.xlane.xlu0 %1784
        %v1786 = vsub.f32 %v1630, %v1776
        %v1787 = vsub.f32 %v1676, %v1779
        %v1788 = vsub.f32 %v1722, %v1782
        %v1789 = vsub.f32 %v1768, %v1785
        %v1790 = vmul.f32 %v1786, 1.442695
        %v1791 = vpow.pop %v1790
        %v1792 = vmul.f32 %v1787, 1.442695
        %v1793 = vpow.pop %v1792
        %v1794 = vmul.f32 %v1788, 1.442695
        %v1795 = vpow.pop %v1794
        %v1796 = vmul.f32 %v1789, 1.442695
        %v1797 = vpow.pop %v1796
        %v1798 = vsel %vm1773, %v1791, 0.0
        %1799 = vadd.xlane.f32.xlu0 %v1798
        %v1800 = vpop.xlane.xlu0 %1799
        %v1801 = vsel %vm1773, %v1793, 0.0
        %1802 = vadd.xlane.f32.xlu0 %v1801
        %v1803 = vpop.xlane.xlu0 %1802
        %v1804 = vsel %vm1773, %v1795, 0.0
        %1805 = vadd.xlane.f32.xlu0 %v1804
        %v1806 = vpop.xlane.xlu0 %1805
        %v1807 = vsel %vm1773, %v1797, 0.0
        %1808 = vadd.xlane.f32.xlu0 %v1807
        %v1809 = vpop.xlane.xlu0 %1808
        %v1810 = vrcp.pop %v1800
        %v1811 = vrcp.pop %v1803
        %v1812 = vrcp.pop %v1806
        %v1813 = vrcp.pop %v1809
        %v1814 = vmul.f32 %v1791, %v1810
        %v1815 = vmul.f32 %v1793, %v1811
        %v1816 = vmul.f32 %v1795, %v1812
        %v1817 = vmul.f32 %v1797, %v1813
        %v1818 = vpack.c.bf16 %v1814, %v1814
        %v1819 = vpack.c.bf16 %v1815, %v1815
        %v1820 = vpack.c.bf16 %v1816, %v1816
        %v1821 = vpack.c.bf16 %v1817, %v1817
        %v1823 = vsel %vm1773, %v1818, 0
        %vm1825 = vcmask 1043456
        %v1827 = vsel %vm1825, %v1583, 0
        %1829 = vmatprep.subr.bf16.mxu0 0
        %1830 = vmatpush1.bf16.msra.mxu0 %v1827
        %1831 = vmatprep.subr.bf16.mxu0 0
        %1832 = vmatpush1.bf16.msra.mxu0 0
        %1833 = vmatprep.subr.bf16.mxu0 0
        %1834 = vmatpush1.bf16.msra.mxu0 0
        %1835 = vmatprep.subr.bf16.mxu0 0
        %1836 = vmatpush1.bf16.msra.mxu0 0
        %1837 = vmatprep.subr.bf16.mxu0 0
        %1838 = vmatpush1.bf16.msra.mxu0 0
        %1839 = vmatprep.subr.bf16.mxu0 0
        %1840 = vmatpush1.bf16.msra.mxu0 0
        %1841 = vmatprep.subr.bf16.mxu0 0
        %1842 = vmatpush1.bf16.msra.mxu0 0
        %1843 = vmatprep.subr.bf16.mxu0 0
        %1844 = vmatpush1.bf16.msra.mxu0 0
        %1845 = vmatprep.subr.bf16.mxu0 0
        %1846 = vmatpush1.bf16.msra.mxu0 0
        %1847 = vmatprep.subr.bf16.mxu0 0
        %1848 = vmatpush1.bf16.msra.mxu0 0
        %1849 = vmatprep.subr.bf16.mxu0 0
        %1850 = vmatpush1.bf16.msra.mxu0 0
        %1851 = vmatprep.subr.bf16.mxu0 0
        %1852 = vmatpush1.bf16.msra.mxu0 0
        %1853 = vmatprep.subr.bf16.mxu0 0
        %1854 = vmatpush1.bf16.msra.mxu0 0
        %1855 = vmatprep.subr.bf16.mxu0 0
        %1856 = vmatpush1.bf16.msra.mxu0 0
        %1857 = vmatprep.subr.bf16.mxu0 0
        %1858 = vmatpush1.bf16.msra.mxu0 0
        %1859 = vmatprep.subr.bf16.mxu0 0
        %1860 = vmatpush1.bf16.msra.mxu0 0
        %1861 = vmatprep.mubr.bf16.mxu0 0
        %1862 = vmatmul.mubr.bf16.gmra.mrb[0].mxu0 %v1823
        %v1863 = vpop.f32.mrb[0].mxu0
        %v1864 = vadd.f32 0.0, %v1863
        %v1865 = vpop.f32.mrb[0].mxu0
        %v1866 = vpop.f32.mrb[0].mxu0
        %v1867 = vpop.f32.mrb[0].mxu0
        %1868 = vdwg.mxu0
        %v1870 = vsel %vm1773, %v1819, 0
        %v1873 = vsel %vm1825, %v1584, 0
        %1875 = vmatprep.subr.bf16.mxu0 0
        %1876 = vmatpush1.bf16.msra.mxu0 %v1873
        %1877 = vmatprep.subr.bf16.mxu0 0
        %1878 = vmatpush1.bf16.msra.mxu0 0
        %1879 = vmatprep.subr.bf16.mxu0 0
        %1880 = vmatpush1.bf16.msra.mxu0 0
        %1881 = vmatprep.subr.bf16.mxu0 0
        %1882 = vmatpush1.bf16.msra.mxu0 0
        %1883 = vmatprep.subr.bf16.mxu0 0
        %1884 = vmatpush1.bf16.msra.mxu0 0
        %1885 = vmatprep.subr.bf16.mxu0 0
        %1886 = vmatpush1.bf16.msra.mxu0 0
        %1887 = vmatprep.subr.bf16.mxu0 0
        %1888 = vmatpush1.bf16.msra.mxu0 0
        %1889 = vmatprep.subr.bf16.mxu0 0
        %1890 = vmatpush1.bf16.msra.mxu0 0
        %1891 = vmatprep.subr.bf16.mxu0 0
        %1892 = vmatpush1.bf16.msra.mxu0 0
        %1893 = vmatprep.subr.bf16.mxu0 0
        %1894 = vmatpush1.bf16.msra.mxu0 0
        %1895 = vmatprep.subr.bf16.mxu0 0
        %1896 = vmatpush1.bf16.msra.mxu0 0
        %1897 = vmatprep.subr.bf16.mxu0 0
        %1898 = vmatpush1.bf16.msra.mxu0 0
        %1899 = vmatprep.subr.bf16.mxu0 0
        %1900 = vmatpush1.bf16.msra.mxu0 0
        %1901 = vmatprep.subr.bf16.mxu0 0
        %1902 = vmatpush1.bf16.msra.mxu0 0
        %1903 = vmatprep.subr.bf16.mxu0 0
        %1904 = vmatpush1.bf16.msra.mxu0 0
        %1905 = vmatprep.subr.bf16.mxu0 0
        %1906 = vmatpush1.bf16.msra.mxu0 0
        %1907 = vmatprep.mubr.bf16.mxu0 0
        %1908 = vmatmul.mubr.bf16.gmra.mrb[0].mxu0 %v1870
        %v1909 = vpop.f32.mrb[0].mxu0
        %v1910 = vadd.f32 0.0, %v1909
        %v1911 = vpop.f32.mrb[0].mxu0
        %v1912 = vpop.f32.mrb[0].mxu0
        %v1913 = vpop.f32.mrb[0].mxu0
        %1914 = vdwg.mxu0
        %v1916 = vsel %vm1773, %v1820, 0
        %v1919 = vsel %vm1825, %v1585, 0
        %1921 = vmatprep.subr.bf16.mxu0 0
        %1922 = vmatpush1.bf16.msra.mxu0 %v1919
        %1923 = vmatprep.subr.bf16.mxu0 0
        %1924 = vmatpush1.bf16.msra.mxu0 0
        %1925 = vmatprep.subr.bf16.mxu0 0
        %1926 = vmatpush1.bf16.msra.mxu0 0
        %1927 = vmatprep.subr.bf16.mxu0 0
        %1928 = vmatpush1.bf16.msra.mxu0 0
        %1929 = vmatprep.subr.bf16.mxu0 0
        %1930 = vmatpush1.bf16.msra.mxu0 0
        %1931 = vmatprep.subr.bf16.mxu0 0
        %1932 = vmatpush1.bf16.msra.mxu0 0
        %1933 = vmatprep.subr.bf16.mxu0 0
        %1934 = vmatpush1.bf16.msra.mxu0 0
        %1935 = vmatprep.subr.bf16.mxu0 0
        %1936 = vmatpush1.bf16.msra.mxu0 0
        %1937 = vmatprep.subr.bf16.mxu0 0
        %1938 = vmatpush1.bf16.msra.mxu0 0
        %1939 = vmatprep.subr.bf16.mxu0 0
        %1940 = vmatpush1.bf16.msra.mxu0 0
        %1941 = vmatprep.subr.bf16.mxu0 0
        %1942 = vmatpush1.bf16.msra.mxu0 0
        %1943 = vmatprep.subr.bf16.mxu0 0
        %1944 = vmatpush1.bf16.msra.mxu0 0
        %1945 = vmatprep.subr.bf16.mxu0 0
        %1946 = vmatpush1.bf16.msra.mxu0 0
        %1947 = vmatprep.subr.bf16.mxu0 0
        %1948 = vmatpush1.bf16.msra.mxu0 0
        %1949 = vmatprep.subr.bf16.mxu0 0
        %1950 = vmatpush1.bf16.msra.mxu0 0
        %1951 = vmatprep.subr.bf16.mxu0 0
        %1952 = vmatpush1.bf16.msra.mxu0 0
        %1953 = vmatprep.mubr.bf16.mxu0 0
        %1954 = vmatmul.mubr.bf16.gmra.mrb[0].mxu0 %v1916
        %v1955 = vpop.f32.mrb[0].mxu0
        %v1956 = vadd.f32 0.0, %v1955
        %v1957 = vpop.f32.mrb[0].mxu0
        %v1958 = vpop.f32.mrb[0].mxu0
        %v1959 = vpop.f32.mrb[0].mxu0
        %1960 = vdwg.mxu0
        %v1962 = vsel %vm1773, %v1821, 0
        %v1965 = vsel %vm1825, %v1586, 0
        %1967 = vmatprep.subr.bf16.mxu0 0
        %1968 = vmatpush1.bf16.msra.mxu0 %v1965
        %1969 = vmatprep.subr.bf16.mxu0 0
        %1970 = vmatpush1.bf16.msra.mxu0 0
        %1971 = vmatprep.subr.bf16.mxu0 0
        %1972 = vmatpush1.bf16.msra.mxu0 0
        %1973 = vmatprep.subr.bf16.mxu0 0
        %1974 = vmatpush1.bf16.msra.mxu0 0
        %1975 = vmatprep.subr.bf16.mxu0 0
        %1976 = vmatpush1.bf16.msra.mxu0 0
        %1977 = vmatprep.subr.bf16.mxu0 0
        %1978 = vmatpush1.bf16.msra.mxu0 0
        %1979 = vmatprep.subr.bf16.mxu0 0
        %1980 = vmatpush1.bf16.msra.mxu0 0
        %1981 = vmatprep.subr.bf16.mxu0 0
        %1982 = vmatpush1.bf16.msra.mxu0 0
        %1983 = vmatprep.subr.bf16.mxu0 0
        %1984 = vmatpush1.bf16.msra.mxu0 0
        %1985 = vmatprep.subr.bf16.mxu0 0
        %1986 = vmatpush1.bf16.msra.mxu0 0
        %1987 = vmatprep.subr.bf16.mxu0 0
        %1988 = vmatpush1.bf16.msra.mxu0 0
        %1989 = vmatprep.subr.bf16.mxu0 0
        %1990 = vmatpush1.bf16.msra.mxu0 0
        %1991 = vmatprep.subr.bf16.mxu0 0
        %1992 = vmatpush1.bf16.msra.mxu0 0
        %1993 = vmatprep.subr.bf16.mxu0 0
        %1994 = vmatpush1.bf16.msra.mxu0 0
        %1995 = vmatprep.subr.bf16.mxu0 0
        %1996 = vmatpush1.bf16.msra.mxu0 0
        %1997 = vmatprep.subr.bf16.mxu0 0
        %1998 = vmatpush1.bf16.msra.mxu0 0
        %1999 = vmatprep.mubr.bf16.mxu0 0
        %2000 = vmatmul.mubr.bf16.gmra.mrb[0].mxu0 %v1962
        %v2001 = vpop.f32.mrb[0].mxu0
        %v2002 = vadd.f32 0.0, %v2001
        %v2003 = vpop.f32.mrb[0].mxu0
        %v2004 = vpop.f32.mrb[0].mxu0
        %v2005 = vpop.f32.mrb[0].mxu0
        %2006 = vdwg.mxu0
        %v2007 = vcombine.low %v1864, %v1956
        %v2008 = vcombine.high %v1864, %v1956
        %v2010 = vunpack.c.l.s4 1983009808
        %v2011 = vunpack.c.0.s8 %v2010
        %v2012 = vlaneseq
        %v2013 = vshrl.u32 %v2012, 7
        %v2014 = vsub.s32 %v2011, %v2013
        %v2015 = vrot.slane %v2007, %v2014
        %v2017 = vunpack.c.l.s4 1983009808
        %v2018 = vunpack.c.0.s8 %v2017
        %v2019 = vlaneseq
        %v2020 = vshrl.u32 %v2019, 7
        %v2021 = vsub.s32 %v2018, %v2020
        %v2022 = vrot.slane %v2008, %v2021
        %v2023 = vcombine.low %v1910, %v2002
        %v2024 = vcombine.high %v1910, %v2002
        %v2026 = vunpack.c.l.s4 1983009808
        %v2027 = vunpack.c.0.s8 %v2026
        %v2028 = vlaneseq
        %v2029 = vshrl.u32 %v2028, 7
        %v2030 = vsub.s32 %v2027, %v2029
        %v2031 = vrot.slane %v2023, %v2030
        %v2033 = vunpack.c.l.s4 1983009808
        %v2034 = vunpack.c.0.s8 %v2033
        %v2035 = vlaneseq
        %v2036 = vshrl.u32 %v2035, 7
        %v2037 = vsub.s32 %v2034, %v2036
        %v2038 = vrot.slane %v2024, %v2037
        %v2039 = vcombine.low %v2015, %v2031
        %v2040 = vcombine.high %v2015, %v2031
        %v2042 = vunpack.c.l.s4 1934713408
        %v2043 = vunpack.c.0.s8 %v2042
        %v2044 = vlaneseq
        %v2045 = vshrl.u32 %v2044, 7
        %v2046 = vsub.s32 %v2043, %v2045
        %v2047 = vrot.slane %v2039, %v2046
        %v2049 = vunpack.c.l.s4 1934713408
        %v2050 = vunpack.c.0.s8 %v2049
        %v2051 = vlaneseq
        %v2052 = vshrl.u32 %v2051, 7
        %v2053 = vsub.s32 %v2050, %v2052
        %v2054 = vrot.slane %v2040, %v2053
        %v2055 = vcombine.low %v2022, %v2038
        %v2056 = vcombine.high %v2022, %v2038
        %v2058 = vunpack.c.l.s4 1934713408
        %v2059 = vunpack.c.0.s8 %v2058
        %v2060 = vlaneseq
        %v2061 = vshrl.u32 %v2060, 7
        %v2062 = vsub.s32 %v2059, %v2061
        %v2063 = vrot.slane %v2055, %v2062
        %v2065 = vunpack.c.l.s4 1934713408
        %v2066 = vunpack.c.0.s8 %v2065
        %v2067 = vlaneseq
        %v2068 = vshrl.u32 %v2067, 7
        %v2069 = vsub.s32 %v2066, %v2068
        %v2070 = vrot.slane %v2056, %v2069
        %v2071 = vcombine.high %v2047, 0.0
        %v2072 = vcombine.high %v2054, 0.0
        %v2073 = vcombine.high %v2063, 0.0
        %v2074 = vcombine.high %v2070, 0.0
        %v2075 = vcombine.low %v2047, %v2054
        %v2077 = vunpack.c.l.s4 1983009808
        %v2078 = vunpack.c.0.s8 %v2077
        %v2079 = vlaneseq
        %v2080 = vshrl.u32 %v2079, 7
        %v2081 = vsub.s32 %v2078, %v2080
        %v2082 = vrot.slane %v2075, %v2081
        %v2083 = vcombine.low %v2071, %v2072
        %v2085 = vunpack.c.l.s4 1983009808
        %v2086 = vunpack.c.0.s8 %v2085
        %v2087 = vlaneseq
        %v2088 = vshrl.u32 %v2087, 7
        %v2089 = vsub.s32 %v2086, %v2088
        %v2090 = vrot.slane %v2083, %v2089
        %v2091 = vcombine.low %v2063, %v2070
        %v2093 = vunpack.c.l.s4 1983009808
        %v2094 = vunpack.c.0.s8 %v2093
        %v2095 = vlaneseq
        %v2096 = vshrl.u32 %v2095, 7
        %v2097 = vsub.s32 %v2094, %v2096
        %v2098 = vrot.slane %v2091, %v2097
        %v2099 = vcombine.low %v2073, %v2074
        %v2101 = vunpack.c.l.s4 1983009808
        %v2102 = vunpack.c.0.s8 %v2101
        %v2103 = vlaneseq
        %v2104 = vshrl.u32 %v2103, 7
        %v2105 = vsub.s32 %v2102, %v2104
        %v2106 = vrot.slane %v2099, %v2105
        %v2107 = vcombine.low %v2082, %v2090
        %v2108 = vcombine.high %v2082, %v2090
        %v2110 = vunpack.c.l.s4 1934713408
        %v2111 = vunpack.c.0.s8 %v2110
        %v2112 = vlaneseq
        %v2113 = vshrl.u32 %v2112, 7
        %v2114 = vsub.s32 %v2111, %v2113
        %v2115 = vrot.slane %v2107, %v2114
        %v2117 = vunpack.c.l.s4 1934713408
        %v2118 = vunpack.c.0.s8 %v2117
        %v2119 = vlaneseq
        %v2120 = vshrl.u32 %v2119, 7
        %v2121 = vsub.s32 %v2118, %v2120
        %v2122 = vrot.slane %v2108, %v2121
        %v2123 = vcombine.low %v2098, %v2106
        %v2124 = vcombine.high %v2098, %v2106
        %v2126 = vunpack.c.l.s4 1934713408
        %v2127 = vunpack.c.0.s8 %v2126
        %v2128 = vlaneseq
        %v2129 = vshrl.u32 %v2128, 7
        %v2130 = vsub.s32 %v2127, %v2129
        %v2131 = vrot.slane %v2123, %v2130
        %v2133 = vunpack.c.l.s4 1934713408
        %v2134 = vunpack.c.0.s8 %v2133
        %v2135 = vlaneseq
        %v2136 = vshrl.u32 %v2135, 7
        %v2137 = vsub.s32 %v2134, %v2136
        %v2138 = vrot.slane %v2124, %v2137
        %v2139 = vcombine.low %v2115, %v2131
        %v2140 = vcombine.high %v2115, %v2131
        %v2141 = vcombine.low %v2122, %v2138
        %v2142 = vcombine.high %v2122, %v2138
        %2144 = vrot.lane.b32.xlu0 %v2140, 32
        %v2145 = vpop.permute.xlu0 %2144
        %2148 = vrot.lane.b32.xlu0 %v2141, 64
        %v2149 = vpop.permute.xlu0 %2148
        %2152 = vrot.lane.b32.xlu0 %v2142, 96
        %v2153 = vpop.permute.xlu0 %2152
        %v2155 = vsel %vm1588, %v2139, %v2145
        %vm2156 = vcmask 523264
        %v2157 = vsel %vm2156, %v2155, %v2149
        %vm2158 = vcmask 785408
        %v2159 = vsel %vm2158, %v2157, %v2153
        %v2160 = vpack.c.bf16 %v2159, %v2159
        %v2161 = vld [vmem:[#allocation11] sm:$0xf]
        %v2162 = vld [vmem:[#allocation11 + $0x4] sm:$0xf]
        %v2163 = vld [vmem:[#allocation11 + $0x8] sm:$0xf]
        %v2164 = vld [vmem:[#allocation11 + $0xc] sm:$0xf]
        %v2165 = vld [vmem:[#allocation11 + $0x10] sm:$0xf]
        %v2166 = vld [vmem:[#allocation11 + $0x14] sm:$0xf]
        %v2167 = vld [vmem:[#allocation11 + $0x18] sm:$0xf]
        %v2168 = vld [vmem:[#allocation11 + $0x1c] sm:$0xf]
        %v2169 = vld [vmem:[#allocation11 + $0x20] sm:$0xf]
        %v2170 = vld [vmem:[#allocation11 + $0x24] sm:$0xf]
        %v2171 = vld [vmem:[#allocation11 + $0x28] sm:$0xf]
        %v2172 = vld [vmem:[#allocation11 + $0x2c] sm:$0xf]
        %v2173 = vld [vmem:[#allocation11 + $0x30] sm:$0xf]
        %v2174 = vld [vmem:[#allocation11 + $0x34] sm:$0xf]
        %v2175 = vld [vmem:[#allocation11 + $0x38] sm:$0xf]
        %v2176 = vld [vmem:[#allocation11 + $0x3c] sm:$0xf]
        %v2177 = vld [vmem:[%s7] sm:$0x1]
        %v2179 = vlaneseq
        %v2180 = vshrl.u32 %v2179, 7
        %v2181 = vsub.s32 0, %v2180
        %v2182 = vrot.slane %v2177, %v2181
        %v2200 = vunpack.c.l.b16 %v2161
        %v2201 = vunpack.c.l.b16 %v2162
        %v2202 = vunpack.c.l.b16 %v2163
        %v2203 = vunpack.c.l.b16 %v2164
        %v2204 = vunpack.c.l.b16 %v2165
        %v2205 = vunpack.c.l.b16 %v2166
        %v2206 = vunpack.c.l.b16 %v2167
        %v2207 = vunpack.c.l.b16 %v2168
        %v2208 = vunpack.c.l.b16 %v2169
        %v2209 = vunpack.c.l.b16 %v2170
        %v2210 = vunpack.c.l.b16 %v2171
        %v2211 = vunpack.c.l.b16 %v2172
        %v2212 = vunpack.c.l.b16 %v2173
        %v2213 = vunpack.c.l.b16 %v2174
        %v2214 = vunpack.c.l.b16 %v2175
        %v2215 = vunpack.c.l.b16 %v2176
        %v2216 = vpack.c.b16 %v2201, %v2200
        %v2217 = vpack.c.b16 %v2203, %v2202
        %v2218 = vpack.c.b16 %v2205, %v2204
        %v2219 = vpack.c.b16 %v2207, %v2206
        %v2220 = vpack.c.b16 %v2209, %v2208
        %v2221 = vpack.c.b16 %v2211, %v2210
        %v2222 = vpack.c.b16 %v2213, %v2212
        %v2223 = vpack.c.b16 %v2215, %v2214
        %2232 = vmatprep.subr.bf16.mxu0 0
        %2233 = vmatpush1.bf16.msra.mxu0 %v2216
        %2234 = vmatprep.subr.bf16.mxu0 0
        %2235 = vmatpush1.bf16.msra.mxu0 %v2217
        %2236 = vmatprep.subr.bf16.mxu0 0
        %2237 = vmatpush1.bf16.msra.mxu0 %v2218
        %2238 = vmatprep.subr.bf16.mxu0 0
        %2239 = vmatpush1.bf16.msra.mxu0 %v2219
        %2240 = vmatprep.subr.bf16.mxu0 0
        %2241 = vmatpush1.bf16.msra.mxu0 %v2220
        %2242 = vmatprep.subr.bf16.mxu0 0
        %2243 = vmatpush1.bf16.msra.mxu0 %v2221
        %2244 = vmatprep.subr.bf16.mxu0 0
        %2245 = vmatpush1.bf16.msra.mxu0 %v2222
        %2246 = vmatprep.subr.bf16.mxu0 0
        %2247 = vmatpush1.bf16.msra.mxu0 %v2223
        %2248 = vmatprep.subr.bf16.mxu0 0
        %2249 = vmatpush1.bf16.msra.mxu0 0
        %2250 = vmatprep.subr.bf16.mxu0 0
        %2251 = vmatpush1.bf16.msra.mxu0 0
        %2252 = vmatprep.subr.bf16.mxu0 0
        %2253 = vmatpush1.bf16.msra.mxu0 0
        %2254 = vmatprep.subr.bf16.mxu0 0
        %2255 = vmatpush1.bf16.msra.mxu0 0
        %2256 = vmatprep.subr.bf16.mxu0 0
        %2257 = vmatpush1.bf16.msra.mxu0 0
        %2258 = vmatprep.subr.bf16.mxu0 0
        %2259 = vmatpush1.bf16.msra.mxu0 0
        %2260 = vmatprep.subr.bf16.mxu0 0
        %2261 = vmatpush1.bf16.msra.mxu0 0
        %2262 = vmatprep.subr.bf16.mxu0 0
        %2263 = vmatpush1.bf16.msra.mxu0 0
        %2264 = vmatprep.mubr.bf16.mxu0 0
        %2265 = vmatmul.mubr.bf16.gmra.mrb[0].mxu0 %v2160
        %v2266 = vpop.f32.mrb[0].mxu0
        %v2267 = vadd.f32 %v2182, %v2266
        %v2268 = vpop.f32.mrb[0].mxu0
        %v2269 = vpop.f32.mrb[0].mxu0
        %v2270 = vpop.f32.mrb[0].mxu0
        %2271 = vdwg.mxu0
        %v2272 = vadd.f32 %v852, %v2267
        %v2273 = vld [vmem:[%s18 + $0x1] sm:$0x1]
        %v2274 = vld [vmem:[%s19 + $0x1] sm:$0x1]
        %2275 = vadd.xlane.f32.xlu0 %v2272
        %v2276 = vpop.xlane.xlu0 %2275
        %v2277 = vmul.f32 %v2276, %v858
        %v2278 = vsub.f32 %v2272, %v2277
        %v2279 = vmul.f32 %v2278, %v2278
        %2280 = vadd.xlane.f32.xlu0 %v2279
        %v2281 = vpop.xlane.xlu0 %2280
        %v2282 = vmul.f32 %v2281, %v858
        %v2283 = vadd.f32 %v2282, 1e-05
        %v2284 = vrsqrt.pop %v2283
        %v2285 = vmul.f32 %v2278, %v2284
        %v2286 = vlaneseq
        %v2287 = vshrl.u32 %v2286, 7
        %v2288 = vsub.s32 0, %v2287
        %v2289 = vrot.slane %v2273, %v2288
        %v2290 = vmul.f32 %v2285, %v2289
        %v2291 = vlaneseq
        %v2292 = vshrl.u32 %v2291, 7
        %v2293 = vsub.s32 0, %v2292
        %v2294 = vrot.slane %v2274, %v2293
        %v2295 = vadd.f32 %v2290, %v2294
        %v2296 = vpack.c.bf16 %v2295, %v2295
        %v2297 = vld [vmem:[#allocation13] sm:$0xf]
        %v2298 = vld [vmem:[#allocation13 + $0x4] sm:$0xf]
        %v2299 = vld [vmem:[#allocation13 + $0x8] sm:$0xf]
        %v2300 = vld [vmem:[#allocation13 + $0xc] sm:$0xf]
        %v2301 = vld [vmem:[#allocation13 + $0x10] sm:$0xf]
        %v2302 = vld [vmem:[#allocation13 + $0x14] sm:$0xf]
        %v2303 = vld [vmem:[#allocation13 + $0x18] sm:$0xf]
        %v2304 = vld [vmem:[#allocation13 + $0x1c] sm:$0xf]
        %v2305 = vld [vmem:[#allocation13 + $0x20] sm:$0xf]
        %v2306 = vld [vmem:[#allocation13 + $0x24] sm:$0xf]
        %v2307 = vld [vmem:[#allocation13 + $0x28] sm:$0xf]
        %v2308 = vld [vmem:[#allocation13 + $0x2c] sm:$0xf]
        %v2309 = vld [vmem:[#allocation13 + $0x30] sm:$0xf]
        %v2310 = vld [vmem:[#allocation13 + $0x34] sm:$0xf]
        %v2311 = vld [vmem:[#allocation13 + $0x38] sm:$0xf]
        %v2312 = vld [vmem:[#allocation13 + $0x3c] sm:$0xf]
        %v2313 = vld [vmem:[%s9] sm:$0x1]
        %v2315 = vlaneseq
        %v2316 = vshrl.u32 %v2315, 7
        %v2317 = vsub.s32 0, %v2316
        %v2318 = vrot.slane %v2313, %v2317
        %v2336 = vunpack.c.l.b16 %v2297
        %v2337 = vunpack.c.l.b16 %v2298
        %v2338 = vunpack.c.l.b16 %v2299
        %v2339 = vunpack.c.l.b16 %v2300
        %v2340 = vunpack.c.l.b16 %v2301
        %v2341 = vunpack.c.l.b16 %v2302
        %v2342 = vunpack.c.l.b16 %v2303
        %v2343 = vunpack.c.l.b16 %v2304
        %v2344 = vunpack.c.l.b16 %v2305
        %v2345 = vunpack.c.l.b16 %v2306
        %v2346 = vunpack.c.l.b16 %v2307
        %v2347 = vunpack.c.l.b16 %v2308
        %v2348 = vunpack.c.l.b16 %v2309
        %v2349 = vunpack.c.l.b16 %v2310
        %v2350 = vunpack.c.l.b16 %v2311
        %v2351 = vunpack.c.l.b16 %v2312
        %v2352 = vpack.c.b16 %v2337, %v2336
        %v2353 = vpack.c.b16 %v2339, %v2338
        %v2354 = vpack.c.b16 %v2341, %v2340
        %v2355 = vpack.c.b16 %v2343, %v2342
        %v2356 = vpack.c.b16 %v2345, %v2344
        %v2357 = vpack.c.b16 %v2347, %v2346
        %v2358 = vpack.c.b16 %v2349, %v2348
        %v2359 = vpack.c.b16 %v2351, %v2350
        %2368 = vmatprep.subr.bf16.mxu0 0
        %2369 = vmatpush1.bf16.msra.mxu0 %v2352
        %2370 = vmatprep.subr.bf16.mxu0 0
        %2371 = vmatpush1.bf16.msra.mxu0 %v2353
        %2372 = vmatprep.subr.bf16.mxu0 0
        %2373 = vmatpush1.bf16.msra.mxu0 %v2354
        %2374 = vmatprep.subr.bf16.mxu0 0
        %2375 = vmatpush1.bf16.msra.mxu0 %v2355
        %2376 = vmatprep.subr.bf16.mxu0 0
        %2377 = vmatpush1.bf16.msra.mxu0 %v2356
        %2378 = vmatprep.subr.bf16.mxu0 0
        %2379 = vmatpush1.bf16.msra.mxu0 %v2357
        %2380 = vmatprep.subr.bf16.mxu0 0
        %2381 = vmatpush1.bf16.msra.mxu0 %v2358
        %2382 = vmatprep.subr.bf16.mxu0 0
        %2383 = vmatpush1.bf16.msra.mxu0 %v2359
        %2384 = vmatprep.subr.bf16.mxu0 0
        %2385 = vmatpush1.bf16.msra.mxu0 0
        %2386 = vmatprep.subr.bf16.mxu0 0
        %2387 = vmatpush1.bf16.msra.mxu0 0
        %2388 = vmatprep.subr.bf16.mxu0 0
        %2389 = vmatpush1.bf16.msra.mxu0 0
        %2390 = vmatprep.subr.bf16.mxu0 0
        %2391 = vmatpush1.bf16.msra.mxu0 0
        %2392 = vmatprep.subr.bf16.mxu0 0
        %2393 = vmatpush1.bf16.msra.mxu0 0
        %2394 = vmatprep.subr.bf16.mxu0 0
        %2395 = vmatpush1.bf16.msra.mxu0 0
        %2396 = vmatprep.subr.bf16.mxu0 0
        %2397 = vmatpush1.bf16.msra.mxu0 0
        %2398 = vmatprep.subr.bf16.mxu0 0
        %2399 = vmatpush1.bf16.msra.mxu0 0
        %2400 = vmatprep.mubr.bf16.mxu0 0
        %2401 = vmatmul.mubr.bf16.gmra.mrb[0].mxu0 %v2296
        %v2402 = vpop.f32.mrb[0].mxu0
        %v2403 = vadd.f32 %v2318, %v2402
        %v2404 = vpop.f32.mrb[0].mxu0
        %v2405 = vpop.f32.mrb[0].mxu0
        %v2406 = vpop.f32.mrb[0].mxu0
        %2407 = vdwg.mxu0
        %v2408 = vld [vmem:[#allocation14] sm:$0xff]
        %v2409 = vld [vmem:[#allocation14 + $0x8] sm:$0xff]
        %v2410 = vld [vmem:[#allocation14 + $0x10] sm:$0xff]
        %v2411 = vld [vmem:[#allocation14 + $0x18] sm:$0xff]
        %v2412 = vld [vmem:[#allocation14 + $0x20] sm:$0xff]
        %v2413 = vld [vmem:[#allocation14 + $0x28] sm:$0xff]
        %v2414 = vld [vmem:[#allocation14 + $0x30] sm:$0xff]
        %v2415 = vld [vmem:[#allocation14 + $0x38] sm:$0xff]
        %v2416 = vld [vmem:[#allocation14 + $0x40] sm:$0xff]
        %v2417 = vld [vmem:[#allocation14 + $0x48] sm:$0xff]
        %v2418 = vld [vmem:[#allocation14 + $0x50] sm:$0xff]
        %v2419 = vld [vmem:[#allocation14 + $0x58] sm:$0xff]
        %v2420 = vld [vmem:[#allocation14 + $0x60] sm:$0xff]
        %v2421 = vld [vmem:[#allocation14 + $0x68] sm:$0xff]
        %v2422 = vld [vmem:[#allocation14 + $0x70] sm:$0xff]
        %v2423 = vld [vmem:[#allocation14 + $0x78] sm:$0xff]
        %v2424 = vld [vmem:[%s11] sm:$0x3]
        %v2426 = vlaneseq
        %v2427 = vshrl.u32 %v2426, 7
        %v2428 = vsub.s32 0, %v2427
        %v2429 = vrot.slane %v2424, %v2428
        %v2430 = vlaneseq
        %v2431 = vshrl.u32 %v2430, 7
        %v2432 = vsub.s32 1, %v2431
        %v2433 = vrot.slane %v2424, %v2432
        %v2452 = vunpack.c.l.b16 %v2408
        %v2453 = vunpack.c.h.b16 %v2408
        %v2454 = vunpack.c.l.b16 %v2409
        %v2455 = vunpack.c.h.b16 %v2409
        %v2456 = vunpack.c.l.b16 %v2410
        %v2457 = vunpack.c.h.b16 %v2410
        %v2458 = vunpack.c.l.b16 %v2411
        %v2459 = vunpack.c.h.b16 %v2411
        %v2460 = vunpack.c.l.b16 %v2412
        %v2461 = vunpack.c.h.b16 %v2412
        %v2462 = vunpack.c.l.b16 %v2413
        %v2463 = vunpack.c.h.b16 %v2413
        %v2464 = vunpack.c.l.b16 %v2414
        %v2465 = vunpack.c.h.b16 %v2414
        %v2466 = vunpack.c.l.b16 %v2415
        %v2467 = vunpack.c.h.b16 %v2415
        %v2468 = vunpack.c.l.b16 %v2416
        %v2469 = vunpack.c.h.b16 %v2416
        %v2470 = vunpack.c.l.b16 %v2417
        %v2471 = vunpack.c.h.b16 %v2417
        %v2472 = vunpack.c.l.b16 %v2418
        %v2473 = vunpack.c.h.b16 %v2418
        %v2474 = vunpack.c.l.b16 %v2419
        %v2475 = vunpack.c.h.b16 %v2419
        %v2476 = vunpack.c.l.b16 %v2420
        %v2477 = vunpack.c.h.b16 %v2420
        %v2478 = vunpack.c.l.b16 %v2421
        %v2479 = vunpack.c.h.b16 %v2421
        %v2480 = vunpack.c.l.b16 %v2422
        %v2481 = vunpack.c.h.b16 %v2422
        %v2482 = vunpack.c.l.b16 %v2423
        %v2483 = vunpack.c.h.b16 %v2423
        %v2484 = vpack.c.b16 %v2454, %v2452
        %v2485 = vpack.c.b16 %v2455, %v2453
        %v2486 = vpack.c.b16 %v2458, %v2456
        %v2487 = vpack.c.b16 %v2459, %v2457
        %v2488 = vpack.c.b16 %v2462, %v2460
        %v2489 = vpack.c.b16 %v2463, %v2461
        %v2490 = vpack.c.b16 %v2466, %v2464
        %v2491 = vpack.c.b16 %v2467, %v2465
        %v2492 = vpack.c.b16 %v2470, %v2468
        %v2493 = vpack.c.b16 %v2471, %v2469
        %v2494 = vpack.c.b16 %v2474, %v2472
        %v2495 = vpack.c.b16 %v2475, %v2473
        %v2496 = vpack.c.b16 %v2478, %v2476
        %v2497 = vpack.c.b16 %v2479, %v2477
        %v2498 = vpack.c.b16 %v2482, %v2480
        %v2499 = vpack.c.b16 %v2483, %v2481
        %2516 = vmatprep.subr.bf16.mxu0 %v2485
        %2517 = vmatpush1.bf16.msra.mxu0 %v2484
        %2518 = vmatprep.subr.bf16.mxu0 %v2487
        %2519 = vmatpush1.bf16.msra.mxu0 %v2486
        %2520 = vmatprep.subr.bf16.mxu0 %v2489
        %2521 = vmatpush1.bf16.msra.mxu0 %v2488
        %2522 = vmatprep.subr.bf16.mxu0 %v2491
        %2523 = vmatpush1.bf16.msra.mxu0 %v2490
        %2524 = vmatprep.subr.bf16.mxu0 %v2493
        %2525 = vmatpush1.bf16.msra.mxu0 %v2492
        %2526 = vmatprep.subr.bf16.mxu0 %v2495
        %2527 = vmatpush1.bf16.msra.mxu0 %v2494
        %2528 = vmatprep.subr.bf16.mxu0 %v2497
        %2529 = vmatpush1.bf16.msra.mxu0 %v2496
        %2530 = vmatprep.subr.bf16.mxu0 %v2499
        %2531 = vmatpush1.bf16.msra.mxu0 %v2498
        %2532 = vmatprep.subr.bf16.mxu0 0
        %2533 = vmatpush1.bf16.msra.mxu0 0
        %2534 = vmatprep.subr.bf16.mxu0 0
        %2535 = vmatpush1.bf16.msra.mxu0 0
        %2536 = vmatprep.subr.bf16.mxu0 0
        %2537 = vmatpush1.bf16.msra.mxu0 0
        %2538 = vmatprep.subr.bf16.mxu0 0
        %2539 = vmatpush1.bf16.msra.mxu0 0
        %2540 = vmatprep.subr.bf16.mxu0 0
        %2541 = vmatpush1.bf16.msra.mxu0 0
        %2542 = vmatprep.subr.bf16.mxu0 0
        %2543 = vmatpush1.bf16.msra.mxu0 0
        %2544 = vmatprep.subr.bf16.mxu0 0
        %2545 = vmatpush1.bf16.msra.mxu0 0
        %2546 = vmatprep.subr.bf16.mxu0 0
        %2547 = vmatpush1.bf16.msra.mxu0 0
        %2548 = vmatprep.mubr.bf16.mxu0 0
        %2549 = vmatmul.mubr.bf16.gmra.mrb[0].mxu0 %v853
        %v2550 = vpop.f32.mrb[0].mxu0
        %v2551 = vadd.f32 %v2429, %v2550
        %v2552 = vpop.f32.mrb[0].mxu0
        %v2553 = vadd.f32 %v2433, %v2552
        %v2554 = vpop.f32.mrb[0].mxu0
        %v2555 = vpop.f32.mrb[0].mxu0
        %2556 = vdwg.mxu0
        %2558 = vrot.lane.b32.xlu0 %v2403, 96
        %v2559 = vpop.permute.xlu0 %2558
        %2561 = vrot.lane.b32.xlu0 %v2403, 64
        %v2562 = vpop.permute.xlu0 %2561
        %2564 = vrot.lane.b32.xlu0 %v2403, 32
        %v2565 = vpop.permute.xlu0 %2564
        %v2567 = vcombine.low %v2403, %v2562
        %v2568 = vcombine.high %v2403, %v2562
        %v2570 = vunpack.c.l.s4 1983009808
        %v2571 = vunpack.c.0.s8 %v2570
        %v2572 = vlaneseq
        %v2573 = vshrl.u32 %v2572, 7
        %v2574 = vsub.s32 %v2571, %v2573
        %v2575 = vrot.slane %v2567, %v2574
        %v2577 = vunpack.c.l.s4 1983009808
        %v2578 = vunpack.c.0.s8 %v2577
        %v2579 = vlaneseq
        %v2580 = vshrl.u32 %v2579, 7
        %v2581 = vsub.s32 %v2578, %v2580
        %v2582 = vrot.slane %v2568, %v2581
        %v2583 = vcombine.low %v2559, %v2565
        %v2584 = vcombine.high %v2559, %v2565
        %v2586 = vunpack.c.l.s4 1983009808
        %v2587 = vunpack.c.0.s8 %v2586
        %v2588 = vlaneseq
        %v2589 = vshrl.u32 %v2588, 7
        %v2590 = vsub.s32 %v2587, %v2589
        %v2591 = vrot.slane %v2583, %v2590
        %v2593 = vunpack.c.l.s4 1983009808
        %v2594 = vunpack.c.0.s8 %v2593
        %v2595 = vlaneseq
        %v2596 = vshrl.u32 %v2595, 7
        %v2597 = vsub.s32 %v2594, %v2596
        %v2598 = vrot.slane %v2584, %v2597
        %v2599 = vcombine.low %v2575, %v2591
        %v2600 = vcombine.high %v2575, %v2591
        %v2602 = vunpack.c.l.s4 1934713408
        %v2603 = vunpack.c.0.s8 %v2602
        %v2604 = vlaneseq
        %v2605 = vshrl.u32 %v2604, 7
        %v2606 = vsub.s32 %v2603, %v2605
        %v2607 = vrot.slane %v2599, %v2606
        %v2609 = vunpack.c.l.s4 1934713408
        %v2610 = vunpack.c.0.s8 %v2609
        %v2611 = vlaneseq
        %v2612 = vshrl.u32 %v2611, 7
        %v2613 = vsub.s32 %v2610, %v2612
        %v2614 = vrot.slane %v2600, %v2613
        %v2615 = vcombine.low %v2582, %v2598
        %v2616 = vcombine.high %v2582, %v2598
        %v2618 = vunpack.c.l.s4 1934713408
        %v2619 = vunpack.c.0.s8 %v2618
        %v2620 = vlaneseq
        %v2621 = vshrl.u32 %v2620, 7
        %v2622 = vsub.s32 %v2619, %v2621
        %v2623 = vrot.slane %v2615, %v2622
        %v2625 = vunpack.c.l.s4 1934713408
        %v2626 = vunpack.c.0.s8 %v2625
        %v2627 = vlaneseq
        %v2628 = vshrl.u32 %v2627, 7
        %v2629 = vsub.s32 %v2626, %v2628
        %v2630 = vrot.slane %v2616, %v2629
        %v2631 = vcombine.high %v2607, 0.0
        %v2632 = vcombine.high %v2614, 0.0
        %v2633 = vcombine.high %v2623, 0.0
        %v2634 = vcombine.high %v2630, 0.0
        %v2635 = vcombine.low %v2607, %v2614
        %v2637 = vunpack.c.l.s4 1983009808
        %v2638 = vunpack.c.0.s8 %v2637
        %v2639 = vlaneseq
        %v2640 = vshrl.u32 %v2639, 7
        %v2641 = vsub.s32 %v2638, %v2640
        %v2642 = vrot.slane %v2635, %v2641
        %v2643 = vcombine.low %v2631, %v2632
        %v2645 = vunpack.c.l.s4 1983009808
        %v2646 = vunpack.c.0.s8 %v2645
        %v2647 = vlaneseq
        %v2648 = vshrl.u32 %v2647, 7
        %v2649 = vsub.s32 %v2646, %v2648
        %v2650 = vrot.slane %v2643, %v2649
        %v2651 = vcombine.low %v2623, %v2630
        %v2653 = vunpack.c.l.s4 1983009808
        %v2654 = vunpack.c.0.s8 %v2653
        %v2655 = vlaneseq
        %v2656 = vshrl.u32 %v2655, 7
        %v2657 = vsub.s32 %v2654, %v2656
        %v2658 = vrot.slane %v2651, %v2657
        %v2659 = vcombine.low %v2633, %v2634
        %v2661 = vunpack.c.l.s4 1983009808
        %v2662 = vunpack.c.0.s8 %v2661
        %v2663 = vlaneseq
        %v2664 = vshrl.u32 %v2663, 7
        %v2665 = vsub.s32 %v2662, %v2664
        %v2666 = vrot.slane %v2659, %v2665
        %v2667 = vcombine.low %v2642, %v2650
        %v2668 = vcombine.high %v2642, %v2650
        %v2670 = vunpack.c.l.s4 1934713408
        %v2671 = vunpack.c.0.s8 %v2670
        %v2672 = vlaneseq
        %v2673 = vshrl.u32 %v2672, 7
        %v2674 = vsub.s32 %v2671, %v2673
        %v2675 = vrot.slane %v2667, %v2674
        %v2677 = vunpack.c.l.s4 1934713408
        %v2678 = vunpack.c.0.s8 %v2677
        %v2679 = vlaneseq
        %v2680 = vshrl.u32 %v2679, 7
        %v2681 = vsub.s32 %v2678, %v2680
        %v2682 = vrot.slane %v2668, %v2681
        %v2683 = vcombine.low %v2658, %v2666
        %v2684 = vcombine.high %v2658, %v2666
        %v2686 = vunpack.c.l.s4 1934713408
        %v2687 = vunpack.c.0.s8 %v2686
        %v2688 = vlaneseq
        %v2689 = vshrl.u32 %v2688, 7
        %v2690 = vsub.s32 %v2687, %v2689
        %v2691 = vrot.slane %v2683, %v2690
        %v2693 = vunpack.c.l.s4 1934713408
        %v2694 = vunpack.c.0.s8 %v2693
        %v2695 = vlaneseq
        %v2696 = vshrl.u32 %v2695, 7
        %v2697 = vsub.s32 %v2694, %v2696
        %v2698 = vrot.slane %v2684, %v2697
        %v2699 = vcombine.low %v2675, %v2691
        %v2700 = vcombine.high %v2675, %v2691
        %v2701 = vcombine.low %v2682, %v2698
        %v2702 = vcombine.high %v2682, %v2698
        %v2703 = vpack.c.bf16 %v2699, %v2699
        %v2704 = vpack.c.bf16 %v2700, %v2700
        %v2705 = vpack.c.bf16 %v2701, %v2701
        %v2706 = vpack.c.bf16 %v2702, %v2702
        %2708 = vrot.lane.b32.xlu0 %v2551, 96
        %v2709 = vpop.permute.xlu0 %2708
        %2711 = vrot.lane.b32.xlu0 %v2551, 64
        %v2712 = vpop.permute.xlu0 %2711
        %2714 = vrot.lane.b32.xlu0 %v2551, 32
        %v2715 = vpop.permute.xlu0 %2714
        %v2717 = vcombine.low %v2551, %v2712
        %v2718 = vcombine.high %v2551, %v2712
        %v2720 = vunpack.c.l.s4 1983009808
        %v2721 = vunpack.c.0.s8 %v2720
        %v2722 = vlaneseq
        %v2723 = vshrl.u32 %v2722, 7
        %v2724 = vsub.s32 %v2721, %v2723
        %v2725 = vrot.slane %v2717, %v2724
        %v2727 = vunpack.c.l.s4 1983009808
        %v2728 = vunpack.c.0.s8 %v2727
        %v2729 = vlaneseq
        %v2730 = vshrl.u32 %v2729, 7
        %v2731 = vsub.s32 %v2728, %v2730
        %v2732 = vrot.slane %v2718, %v2731
        %v2733 = vcombine.low %v2709, %v2715
        %v2734 = vcombine.high %v2709, %v2715
        %v2736 = vunpack.c.l.s4 1983009808
        %v2737 = vunpack.c.0.s8 %v2736
        %v2738 = vlaneseq
        %v2739 = vshrl.u32 %v2738, 7
        %v2740 = vsub.s32 %v2737, %v2739
        %v2741 = vrot.slane %v2733, %v2740
        %v2743 = vunpack.c.l.s4 1983009808
        %v2744 = vunpack.c.0.s8 %v2743
        %v2745 = vlaneseq
        %v2746 = vshrl.u32 %v2745, 7
        %v2747 = vsub.s32 %v2744, %v2746
        %v2748 = vrot.slane %v2734, %v2747
        %v2749 = vcombine.low %v2725, %v2741
        %v2750 = vcombine.high %v2725, %v2741
        %v2752 = vunpack.c.l.s4 1934713408
        %v2753 = vunpack.c.0.s8 %v2752
        %v2754 = vlaneseq
        %v2755 = vshrl.u32 %v2754, 7
        %v2756 = vsub.s32 %v2753, %v2755
        %v2757 = vrot.slane %v2749, %v2756
        %v2759 = vunpack.c.l.s4 1934713408
        %v2760 = vunpack.c.0.s8 %v2759
        %v2761 = vlaneseq
        %v2762 = vshrl.u32 %v2761, 7
        %v2763 = vsub.s32 %v2760, %v2762
        %v2764 = vrot.slane %v2750, %v2763
        %v2765 = vcombine.low %v2732, %v2748
        %v2766 = vcombine.high %v2732, %v2748
        %v2768 = vunpack.c.l.s4 1934713408
        %v2769 = vunpack.c.0.s8 %v2768
        %v2770 = vlaneseq
        %v2771 = vshrl.u32 %v2770, 7
        %v2772 = vsub.s32 %v2769, %v2771
        %v2773 = vrot.slane %v2765, %v2772
        %v2775 = vunpack.c.l.s4 1934713408
        %v2776 = vunpack.c.0.s8 %v2775
        %v2777 = vlaneseq
        %v2778 = vshrl.u32 %v2777, 7
        %v2779 = vsub.s32 %v2776, %v2778
        %v2780 = vrot.slane %v2766, %v2779
        %v2781 = vcombine.high %v2757, 0.0
        %v2782 = vcombine.high %v2764, 0.0
        %v2783 = vcombine.high %v2773, 0.0
        %v2784 = vcombine.high %v2780, 0.0
        %v2785 = vcombine.low %v2757, %v2764
        %v2787 = vunpack.c.l.s4 1983009808
        %v2788 = vunpack.c.0.s8 %v2787
        %v2789 = vlaneseq
        %v2790 = vshrl.u32 %v2789, 7
        %v2791 = vsub.s32 %v2788, %v2790
        %v2792 = vrot.slane %v2785, %v2791
        %v2793 = vcombine.low %v2781, %v2782
        %v2795 = vunpack.c.l.s4 1983009808
        %v2796 = vunpack.c.0.s8 %v2795
        %v2797 = vlaneseq
        %v2798 = vshrl.u32 %v2797, 7
        %v2799 = vsub.s32 %v2796, %v2798
        %v2800 = vrot.slane %v2793, %v2799
        %v2801 = vcombine.low %v2773, %v2780
        %v2803 = vunpack.c.l.s4 1983009808
        %v2804 = vunpack.c.0.s8 %v2803
        %v2805 = vlaneseq
        %v2806 = vshrl.u32 %v2805, 7
        %v2807 = vsub.s32 %v2804, %v2806
        %v2808 = vrot.slane %v2801, %v2807
        %v2809 = vcombine.low %v2783, %v2784
        %v2811 = vunpack.c.l.s4 1983009808
        %v2812 = vunpack.c.0.s8 %v2811
        %v2813 = vlaneseq
        %v2814 = vshrl.u32 %v2813, 7
        %v2815 = vsub.s32 %v2812, %v2814
        %v2816 = vrot.slane %v2809, %v2815
        %v2817 = vcombine.low %v2792, %v2800
        %v2818 = vcombine.high %v2792, %v2800
        %v2820 = vunpack.c.l.s4 1934713408
        %v2821 = vunpack.c.0.s8 %v2820
        %v2822 = vlaneseq
        %v2823 = vshrl.u32 %v2822, 7
        %v2824 = vsub.s32 %v2821, %v2823
        %v2825 = vrot.slane %v2817, %v2824
        %v2827 = vunpack.c.l.s4 1934713408
        %v2828 = vunpack.c.0.s8 %v2827
        %v2829 = vlaneseq
        %v2830 = vshrl.u32 %v2829, 7
        %v2831 = vsub.s32 %v2828, %v2830
        %v2832 = vrot.slane %v2818, %v2831
        %v2833 = vcombine.low %v2808, %v2816
        %v2834 = vcombine.high %v2808, %v2816
        %v2836 = vunpack.c.l.s4 1934713408
        %v2837 = vunpack.c.0.s8 %v2836
        %v2838 = vlaneseq
        %v2839 = vshrl.u32 %v2838, 7
        %v2840 = vsub.s32 %v2837, %v2839
        %v2841 = vrot.slane %v2833, %v2840
        %v2843 = vunpack.c.l.s4 1934713408
        %v2844 = vunpack.c.0.s8 %v2843
        %v2845 = vlaneseq
        %v2846 = vshrl.u32 %v2845, 7
        %v2847 = vsub.s32 %v2844, %v2846
        %v2848 = vrot.slane %v2834, %v2847
        %v2849 = vcombine.low %v2825, %v2841
        %v2850 = vcombine.high %v2825, %v2841
        %v2851 = vcombine.low %v2832, %v2848
        %v2852 = vcombine.high %v2832, %v2848
        %v2853 = vpack.c.bf16 %v2849, %v2849
        %v2854 = vpack.c.bf16 %v2850, %v2850
        %v2855 = vpack.c.bf16 %v2851, %v2851
        %v2856 = vpack.c.bf16 %v2852, %v2852
        %2858 = vrot.lane.b32.xlu0 %v2553, 96
        %v2859 = vpop.permute.xlu0 %2858
        %2861 = vrot.lane.b32.xlu0 %v2553, 64
        %v2862 = vpop.permute.xlu0 %2861
        %2864 = vrot.lane.b32.xlu0 %v2553, 32
        %v2865 = vpop.permute.xlu0 %2864
        %v2867 = vcombine.low %v2553, %v2862
        %v2868 = vcombine.high %v2553, %v2862
        %v2870 = vunpack.c.l.s4 1983009808
        %v2871 = vunpack.c.0.s8 %v2870
        %v2872 = vlaneseq
        %v2873 = vshrl.u32 %v2872, 7
        %v2874 = vsub.s32 %v2871, %v2873
        %v2875 = vrot.slane %v2867, %v2874
        %v2877 = vunpack.c.l.s4 1983009808
        %v2878 = vunpack.c.0.s8 %v2877
        %v2879 = vlaneseq
        %v2880 = vshrl.u32 %v2879, 7
        %v2881 = vsub.s32 %v2878, %v2880
        %v2882 = vrot.slane %v2868, %v2881
        %v2883 = vcombine.low %v2859, %v2865
        %v2884 = vcombine.high %v2859, %v2865
        %v2886 = vunpack.c.l.s4 1983009808
        %v2887 = vunpack.c.0.s8 %v2886
        %v2888 = vlaneseq
        %v2889 = vshrl.u32 %v2888, 7
        %v2890 = vsub.s32 %v2887, %v2889
        %v2891 = vrot.slane %v2883, %v2890
        %v2893 = vunpack.c.l.s4 1983009808
        %v2894 = vunpack.c.0.s8 %v2893
        %v2895 = vlaneseq
        %v2896 = vshrl.u32 %v2895, 7
        %v2897 = vsub.s32 %v2894, %v2896
        %v2898 = vrot.slane %v2884, %v2897
        %v2899 = vcombine.low %v2875, %v2891
        %v2900 = vcombine.high %v2875, %v2891
        %v2902 = vunpack.c.l.s4 1934713408
        %v2903 = vunpack.c.0.s8 %v2902
        %v2904 = vlaneseq
        %v2905 = vshrl.u32 %v2904, 7
        %v2906 = vsub.s32 %v2903, %v2905
        %v2907 = vrot.slane %v2899, %v2906
        %v2909 = vunpack.c.l.s4 1934713408
        %v2910 = vunpack.c.0.s8 %v2909
        %v2911 = vlaneseq
        %v2912 = vshrl.u32 %v2911, 7
        %v2913 = vsub.s32 %v2910, %v2912
        %v2914 = vrot.slane %v2900, %v2913
        %v2915 = vcombine.low %v2882, %v2898
        %v2916 = vcombine.high %v2882, %v2898
        %v2918 = vunpack.c.l.s4 1934713408
        %v2919 = vunpack.c.0.s8 %v2918
        %v2920 = vlaneseq
        %v2921 = vshrl.u32 %v2920, 7
        %v2922 = vsub.s32 %v2919, %v2921
        %v2923 = vrot.slane %v2915, %v2922
        %v2925 = vunpack.c.l.s4 1934713408
        %v2926 = vunpack.c.0.s8 %v2925
        %v2927 = vlaneseq
        %v2928 = vshrl.u32 %v2927, 7
        %v2929 = vsub.s32 %v2926, %v2928
        %v2930 = vrot.slane %v2916, %v2929
        %v2931 = vcombine.high %v2907, 0.0
        %v2932 = vcombine.high %v2914, 0.0
        %v2933 = vcombine.high %v2923, 0.0
        %v2934 = vcombine.high %v2930, 0.0
        %v2935 = vcombine.low %v2907, %v2914
        %v2937 = vunpack.c.l.s4 1983009808
        %v2938 = vunpack.c.0.s8 %v2937
        %v2939 = vlaneseq
        %v2940 = vshrl.u32 %v2939, 7
        %v2941 = vsub.s32 %v2938, %v2940
        %v2942 = vrot.slane %v2935, %v2941
        %v2943 = vcombine.low %v2931, %v2932
        %v2945 = vunpack.c.l.s4 1983009808
        %v2946 = vunpack.c.0.s8 %v2945
        %v2947 = vlaneseq
        %v2948 = vshrl.u32 %v2947, 7
        %v2949 = vsub.s32 %v2946, %v2948
        %v2950 = vrot.slane %v2943, %v2949
        %v2951 = vcombine.low %v2923, %v2930
        %v2953 = vunpack.c.l.s4 1983009808
        %v2954 = vunpack.c.0.s8 %v2953
        %v2955 = vlaneseq
        %v2956 = vshrl.u32 %v2955, 7
        %v2957 = vsub.s32 %v2954, %v2956
        %v2958 = vrot.slane %v2951, %v2957
        %v2959 = vcombine.low %v2933, %v2934
        %v2961 = vunpack.c.l.s4 1983009808
        %v2962 = vunpack.c.0.s8 %v2961
        %v2963 = vlaneseq
        %v2964 = vshrl.u32 %v2963, 7
        %v2965 = vsub.s32 %v2962, %v2964
        %v2966 = vrot.slane %v2959, %v2965
        %v2967 = vcombine.low %v2942, %v2950
        %v2968 = vcombine.high %v2942, %v2950
        %v2970 = vunpack.c.l.s4 1934713408
        %v2971 = vunpack.c.0.s8 %v2970
        %v2972 = vlaneseq
        %v2973 = vshrl.u32 %v2972, 7
        %v2974 = vsub.s32 %v2971, %v2973
        %v2975 = vrot.slane %v2967, %v2974
        %v2977 = vunpack.c.l.s4 1934713408
        %v2978 = vunpack.c.0.s8 %v2977
        %v2979 = vlaneseq
        %v2980 = vshrl.u32 %v2979, 7
        %v2981 = vsub.s32 %v2978, %v2980
        %v2982 = vrot.slane %v2968, %v2981
        %v2983 = vcombine.low %v2958, %v2966
        %v2984 = vcombine.high %v2958, %v2966
        %v2986 = vunpack.c.l.s4 1934713408
        %v2987 = vunpack.c.0.s8 %v2986
        %v2988 = vlaneseq
        %v2989 = vshrl.u32 %v2988, 7
        %v2990 = vsub.s32 %v2987, %v2989
        %v2991 = vrot.slane %v2983, %v2990
        %v2993 = vunpack.c.l.s4 1934713408
        %v2994 = vunpack.c.0.s8 %v2993
        %v2995 = vlaneseq
        %v2996 = vshrl.u32 %v2995, 7
        %v2997 = vsub.s32 %v2994, %v2996
        %v2998 = vrot.slane %v2984, %v2997
        %v2999 = vcombine.low %v2975, %v2991
        %v3000 = vcombine.high %v2975, %v2991
        %v3001 = vcombine.low %v2982, %v2998
        %v3002 = vcombine.high %v2982, %v2998
        %v3003 = vpack.c.bf16 %v2999, %v2999
        %v3004 = vpack.c.bf16 %v3000, %v3000
        %v3005 = vpack.c.bf16 %v3001, %v3001
        %v3006 = vpack.c.bf16 %v3002, %v3002
        %v3007 = vld [vmem:[%s743] sm:$0x1]
        %v3009 = vlaneseq
        %v3010 = vshrl.u32 %v3009, 7
        %v3011 = vsub.s32 0, %v3010
        %v3012 = vrot.slane %v3007, %v3011
        %v3015 = vsel %vm1588, %v2703, 0
        %v3018 = vsel %vm1588, %v2853, 0
        %3020 = vmatprep.subr.bf16.mxu0 0
        %3021 = vmatpush1.bf16.xpose.msra.mxu0 %v3018
        %3022 = vmatprep.subr.bf16.mxu0 0
        %3023 = vmatpush1.bf16.xpose.msra.mxu0 0
        %3024 = vmatprep.subr.bf16.mxu0 0
        %3025 = vmatpush1.bf16.xpose.msra.mxu0 0
        %3026 = vmatprep.subr.bf16.mxu0 0
        %3027 = vmatpush1.bf16.xpose.msra.mxu0 0
        %3028 = vmatprep.subr.bf16.mxu0 0
        %3029 = vmatpush1.bf16.xpose.msra.mxu0 0
        %3030 = vmatprep.subr.bf16.mxu0 0
        %3031 = vmatpush1.bf16.xpose.msra.mxu0 0
        %3032 = vmatprep.subr.bf16.mxu0 0
        %3033 = vmatpush1.bf16.xpose.msra.mxu0 0
        %3034 = vmatprep.subr.bf16.mxu0 0
        %3035 = vmatpush1.bf16.xpose.msra.mxu0 0
        %3036 = vmatprep.subr.bf16.mxu0 0
        %3037 = vmatpush1.bf16.xpose.msra.mxu0 0
        %3038 = vmatprep.subr.bf16.mxu0 0
        %3039 = vmatpush1.bf16.xpose.msra.mxu0 0
        %3040 = vmatprep.subr.bf16.mxu0 0
        %3041 = vmatpush1.bf16.xpose.msra.mxu0 0
        %3042 = vmatprep.subr.bf16.mxu0 0
        %3043 = vmatpush1.bf16.xpose.msra.mxu0 0
        %3044 = vmatprep.subr.bf16.mxu0 0
        %3045 = vmatpush1.bf16.xpose.msra.mxu0 0
        %3046 = vmatprep.subr.bf16.mxu0 0
        %3047 = vmatpush1.bf16.xpose.msra.mxu0 0
        %3048 = vmatprep.subr.bf16.mxu0 0
        %3049 = vmatpush1.bf16.xpose.msra.mxu0 0
        %3050 = vmatprep.subr.bf16.mxu0 0
        %3051 = vmatpush1.bf16.xpose.msra.mxu0 0
        %3052 = vmatprep.mubr.bf16.mxu0 0
        %3053 = vmatmul.mubr.bf16.gmra.mrb[0].mxu0 %v3015
        %v3054 = vpop.f32.mrb[0].mxu0
        %v3055 = vadd.f32 %v3012, %v3054
        %v3056 = vpop.f32.mrb[0].mxu0
        %v3057 = vpop.f32.mrb[0].mxu0
        %v3058 = vpop.f32.mrb[0].mxu0
        %3059 = vdwg.mxu0
        %v3061 = vsel %vm1588, %v2704, 0
        %v3064 = vsel %vm1588, %v2854, 0
        %3066 = vmatprep.subr.bf16.mxu0 0
        %3067 = vmatpush1.bf16.xpose.msra.mxu0 %v3064
        %3068 = vmatprep.subr.bf16.mxu0 0
        %3069 = vmatpush1.bf16.xpose.msra.mxu0 0
        %3070 = vmatprep.subr.bf16.mxu0 0
        %3071 = vmatpush1.bf16.xpose.msra.mxu0 0
        %3072 = vmatprep.subr.bf16.mxu0 0
        %3073 = vmatpush1.bf16.xpose.msra.mxu0 0
        %3074 = vmatprep.subr.bf16.mxu0 0
        %3075 = vmatpush1.bf16.xpose.msra.mxu0 0
        %3076 = vmatprep.subr.bf16.mxu0 0
        %3077 = vmatpush1.bf16.xpose.msra.mxu0 0
        %3078 = vmatprep.subr.bf16.mxu0 0
        %3079 = vmatpush1.bf16.xpose.msra.mxu0 0
        %3080 = vmatprep.subr.bf16.mxu0 0
        %3081 = vmatpush1.bf16.xpose.msra.mxu0 0
        %3082 = vmatprep.subr.bf16.mxu0 0
        %3083 = vmatpush1.bf16.xpose.msra.mxu0 0
        %3084 = vmatprep.subr.bf16.mxu0 0
        %3085 = vmatpush1.bf16.xpose.msra.mxu0 0
        %3086 = vmatprep.subr.bf16.mxu0 0
        %3087 = vmatpush1.bf16.xpose.msra.mxu0 0
        %3088 = vmatprep.subr.bf16.mxu0 0
        %3089 = vmatpush1.bf16.xpose.msra.mxu0 0
        %3090 = vmatprep.subr.bf16.mxu0 0
        %3091 = vmatpush1.bf16.xpose.msra.mxu0 0
        %3092 = vmatprep.subr.bf16.mxu0 0
        %3093 = vmatpush1.bf16.xpose.msra.mxu0 0
        %3094 = vmatprep.subr.bf16.mxu0 0
        %3095 = vmatpush1.bf16.xpose.msra.mxu0 0
        %3096 = vmatprep.subr.bf16.mxu0 0
        %3097 = vmatpush1.bf16.xpose.msra.mxu0 0
        %3098 = vmatprep.mubr.bf16.mxu0 0
        %3099 = vmatmul.mubr.bf16.gmra.mrb[0].mxu0 %v3061
        %v3100 = vpop.f32.mrb[0].mxu0
        %v3101 = vadd.f32 %v3012, %v3100
        %v3102 = vpop.f32.mrb[0].mxu0
        %v3103 = vpop.f32.mrb[0].mxu0
        %v3104 = vpop.f32.mrb[0].mxu0
        %3105 = vdwg.mxu0
        %v3107 = vsel %vm1588, %v2705, 0
        %v3110 = vsel %vm1588, %v2855, 0
        %3112 = vmatprep.subr.bf16.mxu0 0
        %3113 = vmatpush1.bf16.xpose.msra.mxu0 %v3110
        %3114 = vmatprep.subr.bf16.mxu0 0
        %3115 = vmatpush1.bf16.xpose.msra.mxu0 0
        %3116 = vmatprep.subr.bf16.mxu0 0
        %3117 = vmatpush1.bf16.xpose.msra.mxu0 0
        %3118 = vmatprep.subr.bf16.mxu0 0
        %3119 = vmatpush1.bf16.xpose.msra.mxu0 0
        %3120 = vmatprep.subr.bf16.mxu0 0
        %3121 = vmatpush1.bf16.xpose.msra.mxu0 0
        %3122 = vmatprep.subr.bf16.mxu0 0
        %3123 = vmatpush1.bf16.xpose.msra.mxu0 0
        %3124 = vmatprep.subr.bf16.mxu0 0
        %3125 = vmatpush1.bf16.xpose.msra.mxu0 0
        %3126 = vmatprep.subr.bf16.mxu0 0
        %3127 = vmatpush1.bf16.xpose.msra.mxu0 0
        %3128 = vmatprep.subr.bf16.mxu0 0
        %3129 = vmatpush1.bf16.xpose.msra.mxu0 0
        %3130 = vmatprep.subr.bf16.mxu0 0
        %3131 = vmatpush1.bf16.xpose.msra.mxu0 0
        %3132 = vmatprep.subr.bf16.mxu0 0
        %3133 = vmatpush1.bf16.xpose.msra.mxu0 0
        %3134 = vmatprep.subr.bf16.mxu0 0
        %3135 = vmatpush1.bf16.xpose.msra.mxu0 0
        %3136 = vmatprep.subr.bf16.mxu0 0
        %3137 = vmatpush1.bf16.xpose.msra.mxu0 0
        %3138 = vmatprep.subr.bf16.mxu0 0
        %3139 = vmatpush1.bf16.xpose.msra.mxu0 0
        %3140 = vmatprep.subr.bf16.mxu0 0
        %3141 = vmatpush1.bf16.xpose.msra.mxu0 0
        %3142 = vmatprep.subr.bf16.mxu0 0
        %3143 = vmatpush1.bf16.xpose.msra.mxu0 0
        %3144 = vmatprep.mubr.bf16.mxu0 0
        %3145 = vmatmul.mubr.bf16.gmra.mrb[0].mxu0 %v3107
        %v3146 = vpop.f32.mrb[0].mxu0
        %v3147 = vadd.f32 %v3012, %v3146
        %v3148 = vpop.f32.mrb[0].mxu0
        %v3149 = vpop.f32.mrb[0].mxu0
        %v3150 = vpop.f32.mrb[0].mxu0
        %3151 = vdwg.mxu0
        %v3153 = vsel %vm1588, %v2706, 0
        %v3156 = vsel %vm1588, %v2856, 0
        %3158 = vmatprep.subr.bf16.mxu0 0
        %3159 = vmatpush1.bf16.xpose.msra.mxu0 %v3156
        %3160 = vmatprep.subr.bf16.mxu0 0
        %3161 = vmatpush1.bf16.xpose.msra.mxu0 0
        %3162 = vmatprep.subr.bf16.mxu0 0
        %3163 = vmatpush1.bf16.xpose.msra.mxu0 0
        %3164 = vmatprep.subr.bf16.mxu0 0
        %3165 = vmatpush1.bf16.xpose.msra.mxu0 0
        %3166 = vmatprep.subr.bf16.mxu0 0
        %3167 = vmatpush1.bf16.xpose.msra.mxu0 0
        %3168 = vmatprep.subr.bf16.mxu0 0
        %3169 = vmatpush1.bf16.xpose.msra.mxu0 0
        %3170 = vmatprep.subr.bf16.mxu0 0
        %3171 = vmatpush1.bf16.xpose.msra.mxu0 0
        %3172 = vmatprep.subr.bf16.mxu0 0
        %3173 = vmatpush1.bf16.xpose.msra.mxu0 0
        %3174 = vmatprep.subr.bf16.mxu0 0
        %3175 = vmatpush1.bf16.xpose.msra.mxu0 0
        %3176 = vmatprep.subr.bf16.mxu0 0
        %3177 = vmatpush1.bf16.xpose.msra.mxu0 0
        %3178 = vmatprep.subr.bf16.mxu0 0
        %3179 = vmatpush1.bf16.xpose.msra.mxu0 0
        %3180 = vmatprep.subr.bf16.mxu0 0
        %3181 = vmatpush1.bf16.xpose.msra.mxu0 0
        %3182 = vmatprep.subr.bf16.mxu0 0
        %3183 = vmatpush1.bf16.xpose.msra.mxu0 0
        %3184 = vmatprep.subr.bf16.mxu0 0
        %3185 = vmatpush1.bf16.xpose.msra.mxu0 0
        %3186 = vmatprep.subr.bf16.mxu0 0
        %3187 = vmatpush1.bf16.xpose.msra.mxu0 0
        %3188 = vmatprep.subr.bf16.mxu0 0
        %3189 = vmatpush1.bf16.xpose.msra.mxu0 0
        %3190 = vmatprep.mubr.bf16.mxu0 0
        %3191 = vmatmul.mubr.bf16.gmra.mrb[0].mxu0 %v3153
        %v3192 = vpop.f32.mrb[0].mxu0
        %v3193 = vadd.f32 %v3012, %v3192
        %v3194 = vpop.f32.mrb[0].mxu0
        %v3195 = vpop.f32.mrb[0].mxu0
        %v3196 = vpop.f32.mrb[0].mxu0
        %3197 = vdwg.mxu0
        %v3198 = vsel %vm1773, %v3055, -inf
        %3199 = vmax.xlane.f32.xlu0 %v3198
        %v3200 = vpop.xlane.xlu0 %3199
        %v3201 = vsel %vm1773, %v3101, -inf
        %3202 = vmax.xlane.f32.xlu0 %v3201
        %v3203 = vpop.xlane.xlu0 %3202
        %v3204 = vsel %vm1773, %v3147, -inf
        %3205 = vmax.xlane.f32.xlu0 %v3204
        %v3206 = vpop.xlane.xlu0 %3205
        %v3207 = vsel %vm1773, %v3193, -inf
        %3208 = vmax.xlane.f32.xlu0 %v3207
        %v3209 = vpop.xlane.xlu0 %3208
        %v3210 = vsub.f32 %v3055, %v3200
        %v3211 = vsub.f32 %v3101, %v3203
        %v3212 = vsub.f32 %v3147, %v3206
        %v3213 = vsub.f32 %v3193, %v3209
        %v3214 = vmul.f32 %v3210, 1.442695
        %v3215 = vpow.pop %v3214
        %v3216 = vmul.f32 %v3211, 1.442695
        %v3217 = vpow.pop %v3216
        %v3218 = vmul.f32 %v3212, 1.442695
        %v3219 = vpow.pop %v3218
        %v3220 = vmul.f32 %v3213, 1.442695
        %v3221 = vpow.pop %v3220
        %v3222 = vsel %vm1773, %v3215, 0.0
        %3223 = vadd.xlane.f32.xlu0 %v3222
        %v3224 = vpop.xlane.xlu0 %3223
        %v3225 = vsel %vm1773, %v3217, 0.0
        %3226 = vadd.xlane.f32.xlu0 %v3225
        %v3227 = vpop.xlane.xlu0 %3226
        %v3228 = vsel %vm1773, %v3219, 0.0
        %3229 = vadd.xlane.f32.xlu0 %v3228
        %v3230 = vpop.xlane.xlu0 %3229
        %v3231 = vsel %vm1773, %v3221, 0.0
        %3232 = vadd.xlane.f32.xlu0 %v3231
        %v3233 = vpop.xlane.xlu0 %3232
        %v3234 = vrcp.pop %v3224
        %v3235 = vrcp.pop %v3227
        %v3236 = vrcp.pop %v3230
        %v3237 = vrcp.pop %v3233
        %v3238 = vmul.f32 %v3215, %v3234
        %v3239 = vmul.f32 %v3217, %v3235
        %v3240 = vmul.f32 %v3219, %v3236
        %v3241 = vmul.f32 %v3221, %v3237
        %v3242 = vpack.c.bf16 %v3238, %v3238
        %v3243 = vpack.c.bf16 %v3239, %v3239
        %v3244 = vpack.c.bf16 %v3240, %v3240
        %v3245 = vpack.c.bf16 %v3241, %v3241
        %v3247 = vsel %vm1773, %v3242, 0
        %v3250 = vsel %vm1825, %v3003, 0
        %3252 = vmatprep.subr.bf16.mxu0 0
        %3253 = vmatpush1.bf16.msra.mxu0 %v3250
        %3254 = vmatprep.subr.bf16.mxu0 0
        %3255 = vmatpush1.bf16.msra.mxu0 0
        %3256 = vmatprep.subr.bf16.mxu0 0
        %3257 = vmatpush1.bf16.msra.mxu0 0
        %3258 = vmatprep.subr.bf16.mxu0 0
        %3259 = vmatpush1.bf16.msra.mxu0 0
        %3260 = vmatprep.subr.bf16.mxu0 0
        %3261 = vmatpush1.bf16.msra.mxu0 0
        %3262 = vmatprep.subr.bf16.mxu0 0
        %3263 = vmatpush1.bf16.msra.mxu0 0
        %3264 = vmatprep.subr.bf16.mxu0 0
        %3265 = vmatpush1.bf16.msra.mxu0 0
        %3266 = vmatprep.subr.bf16.mxu0 0
        %3267 = vmatpush1.bf16.msra.mxu0 0
        %3268 = vmatprep.subr.bf16.mxu0 0
        %3269 = vmatpush1.bf16.msra.mxu0 0
        %3270 = vmatprep.subr.bf16.mxu0 0
        %3271 = vmatpush1.bf16.msra.mxu0 0
        %3272 = vmatprep.subr.bf16.mxu0 0
        %3273 = vmatpush1.bf16.msra.mxu0 0
        %3274 = vmatprep.subr.bf16.mxu0 0
        %3275 = vmatpush1.bf16.msra.mxu0 0
        %3276 = vmatprep.subr.bf16.mxu0 0
        %3277 = vmatpush1.bf16.msra.mxu0 0
        %3278 = vmatprep.subr.bf16.mxu0 0
        %3279 = vmatpush1.bf16.msra.mxu0 0
        %3280 = vmatprep.subr.bf16.mxu0 0
        %3281 = vmatpush1.bf16.msra.mxu0 0
        %3282 = vmatprep.subr.bf16.mxu0 0
        %3283 = vmatpush1.bf16.msra.mxu0 0
        %3284 = vmatprep.mubr.bf16.mxu0 0
        %3285 = vmatmul.mubr.bf16.gmra.mrb[0].mxu0 %v3247
        %v3286 = vpop.f32.mrb[0].mxu0
        %v3287 = vadd.f32 0.0, %v3286
        %v3288 = vpop.f32.mrb[0].mxu0
        %v3289 = vpop.f32.mrb[0].mxu0
        %v3290 = vpop.f32.mrb[0].mxu0
        %3291 = vdwg.mxu0
        %v3293 = vsel %vm1773, %v3243, 0
        %v3296 = vsel %vm1825, %v3004, 0
        %3298 = vmatprep.subr.bf16.mxu0 0
        %3299 = vmatpush1.bf16.msra.mxu0 %v3296
        %3300 = vmatprep.subr.bf16.mxu0 0
        %3301 = vmatpush1.bf16.msra.mxu0 0
        %3302 = vmatprep.subr.bf16.mxu0 0
        %3303 = vmatpush1.bf16.msra.mxu0 0
        %3304 = vmatprep.subr.bf16.mxu0 0
        %3305 = vmatpush1.bf16.msra.mxu0 0
        %3306 = vmatprep.subr.bf16.mxu0 0
        %3307 = vmatpush1.bf16.msra.mxu0 0
        %3308 = vmatprep.subr.bf16.mxu0 0
        %3309 = vmatpush1.bf16.msra.mxu0 0
        %3310 = vmatprep.subr.bf16.mxu0 0
        %3311 = vmatpush1.bf16.msra.mxu0 0
        %3312 = vmatprep.subr.bf16.mxu0 0
        %3313 = vmatpush1.bf16.msra.mxu0 0
        %3314 = vmatprep.subr.bf16.mxu0 0
        %3315 = vmatpush1.bf16.msra.mxu0 0
        %3316 = vmatprep.subr.bf16.mxu0 0
        %3317 = vmatpush1.bf16.msra.mxu0 0
        %3318 = vmatprep.subr.bf16.mxu0 0
        %3319 = vmatpush1.bf16.msra.mxu0 0
        %3320 = vmatprep.subr.bf16.mxu0 0
        %3321 = vmatpush1.bf16.msra.mxu0 0
        %3322 = vmatprep.subr.bf16.mxu0 0
        %3323 = vmatpush1.bf16.msra.mxu0 0
        %3324 = vmatprep.subr.bf16.mxu0 0
        %3325 = vmatpush1.bf16.msra.mxu0 0
        %3326 = vmatprep.subr.bf16.mxu0 0
        %3327 = vmatpush1.bf16.msra.mxu0 0
        %3328 = vmatprep.subr.bf16.mxu0 0
        %3329 = vmatpush1.bf16.msra.mxu0 0
        %3330 = vmatprep.mubr.bf16.mxu0 0
        %3331 = vmatmul.mubr.bf16.gmra.mrb[0].mxu0 %v3293
        %v3332 = vpop.f32.mrb[0].mxu0
        %v3333 = vadd.f32 0.0, %v3332
        %v3334 = vpop.f32.mrb[0].mxu0
        %v3335 = vpop.f32.mrb[0].mxu0
        %v3336 = vpop.f32.mrb[0].mxu0
        %3337 = vdwg.mxu0
        %v3339 = vsel %vm1773, %v3244, 0
        %v3342 = vsel %vm1825, %v3005, 0
        %3344 = vmatprep.subr.bf16.mxu0 0
        %3345 = vmatpush1.bf16.msra.mxu0 %v3342
        %3346 = vmatprep.subr.bf16.mxu0 0
        %3347 = vmatpush1.bf16.msra.mxu0 0
        %3348 = vmatprep.subr.bf16.mxu0 0
        %3349 = vmatpush1.bf16.msra.mxu0 0
        %3350 = vmatprep.subr.bf16.mxu0 0
        %3351 = vmatpush1.bf16.msra.mxu0 0
        %3352 = vmatprep.subr.bf16.mxu0 0
        %3353 = vmatpush1.bf16.msra.mxu0 0
        %3354 = vmatprep.subr.bf16.mxu0 0
        %3355 = vmatpush1.bf16.msra.mxu0 0
        %3356 = vmatprep.subr.bf16.mxu0 0
        %3357 = vmatpush1.bf16.msra.mxu0 0
        %3358 = vmatprep.subr.bf16.mxu0 0
        %3359 = vmatpush1.bf16.msra.mxu0 0
        %3360 = vmatprep.subr.bf16.mxu0 0
        %3361 = vmatpush1.bf16.msra.mxu0 0
        %3362 = vmatprep.subr.bf16.mxu0 0
        %3363 = vmatpush1.bf16.msra.mxu0 0
        %3364 = vmatprep.subr.bf16.mxu0 0
        %3365 = vmatpush1.bf16.msra.mxu0 0
        %3366 = vmatprep.subr.bf16.mxu0 0
        %3367 = vmatpush1.bf16.msra.mxu0 0
        %3368 = vmatprep.subr.bf16.mxu0 0
        %3369 = vmatpush1.bf16.msra.mxu0 0
        %3370 = vmatprep.subr.bf16.mxu0 0
        %3371 = vmatpush1.bf16.msra.mxu0 0
        %3372 = vmatprep.subr.bf16.mxu0 0
        %3373 = vmatpush1.bf16.msra.mxu0 0
        %3374 = vmatprep.subr.bf16.mxu0 0
        %3375 = vmatpush1.bf16.msra.mxu0 0
        %3376 = vmatprep.mubr.bf16.mxu0 0
        %3377 = vmatmul.mubr.bf16.gmra.mrb[0].mxu0 %v3339
        %v3378 = vpop.f32.mrb[0].mxu0
        %v3379 = vadd.f32 0.0, %v3378
        %v3380 = vpop.f32.mrb[0].mxu0
        %v3381 = vpop.f32.mrb[0].mxu0
        %v3382 = vpop.f32.mrb[0].mxu0
        %3383 = vdwg.mxu0
        %v3385 = vsel %vm1773, %v3245, 0
        %v3388 = vsel %vm1825, %v3006, 0
        %3390 = vmatprep.subr.bf16.mxu0 0
        %3391 = vmatpush1.bf16.msra.mxu0 %v3388
        %3392 = vmatprep.subr.bf16.mxu0 0
        %3393 = vmatpush1.bf16.msra.mxu0 0
        %3394 = vmatprep.subr.bf16.mxu0 0
        %3395 = vmatpush1.bf16.msra.mxu0 0
        %3396 = vmatprep.subr.bf16.mxu0 0
        %3397 = vmatpush1.bf16.msra.mxu0 0
        %3398 = vmatprep.subr.bf16.mxu0 0
        %3399 = vmatpush1.bf16.msra.mxu0 0
        %3400 = vmatprep.subr.bf16.mxu0 0
        %3401 = vmatpush1.bf16.msra.mxu0 0
        %3402 = vmatprep.subr.bf16.mxu0 0
        %3403 = vmatpush1.bf16.msra.mxu0 0
        %3404 = vmatprep.subr.bf16.mxu0 0
        %3405 = vmatpush1.bf16.msra.mxu0 0
        %3406 = vmatprep.subr.bf16.mxu0 0
        %3407 = vmatpush1.bf16.msra.mxu0 0
        %3408 = vmatprep.subr.bf16.mxu0 0
        %3409 = vmatpush1.bf16.msra.mxu0 0
        %3410 = vmatprep.subr.bf16.mxu0 0
        %3411 = vmatpush1.bf16.msra.mxu0 0
        %3412 = vmatprep.subr.bf16.mxu0 0
        %3413 = vmatpush1.bf16.msra.mxu0 0
        %3414 = vmatprep.subr.bf16.mxu0 0
        %3415 = vmatpush1.bf16.msra.mxu0 0
        %3416 = vmatprep.subr.bf16.mxu0 0
        %3417 = vmatpush1.bf16.msra.mxu0 0
        %3418 = vmatprep.subr.bf16.mxu0 0
        %3419 = vmatpush1.bf16.msra.mxu0 0
        %3420 = vmatprep.subr.bf16.mxu0 0
        %3421 = vmatpush1.bf16.msra.mxu0 0
        %3422 = vmatprep.mubr.bf16.mxu0 0
        %3423 = vmatmul.mubr.bf16.gmra.mrb[0].mxu0 %v3385
        %v3424 = vpop.f32.mrb[0].mxu0
        %v3425 = vadd.f32 0.0, %v3424
        %v3426 = vpop.f32.mrb[0].mxu0
        %v3427 = vpop.f32.mrb[0].mxu0
        %v3428 = vpop.f32.mrb[0].mxu0
        %3429 = vdwg.mxu0
        %v3430 = vcombine.low %v3287, %v3379
        %v3431 = vcombine.high %v3287, %v3379
        %v3433 = vunpack.c.l.s4 1983009808
        %v3434 = vunpack.c.0.s8 %v3433
        %v3435 = vlaneseq
        %v3436 = vshrl.u32 %v3435, 7
        %v3437 = vsub.s32 %v3434, %v3436
        %v3438 = vrot.slane %v3430, %v3437
        %v3440 = vunpack.c.l.s4 1983009808
        %v3441 = vunpack.c.0.s8 %v3440
        %v3442 = vlaneseq
        %v3443 = vshrl.u32 %v3442, 7
        %v3444 = vsub.s32 %v3441, %v3443
        %v3445 = vrot.slane %v3431, %v3444
        %v3446 = vcombine.low %v3333, %v3425
        %v3447 = vcombine.high %v3333, %v3425
        %v3449 = vunpack.c.l.s4 1983009808
        %v3450 = vunpack.c.0.s8 %v3449
        %v3451 = vlaneseq
        %v3452 = vshrl.u32 %v3451, 7
        %v3453 = vsub.s32 %v3450, %v3452
        %v3454 = vrot.slane %v3446, %v3453
        %v3456 = vunpack.c.l.s4 1983009808
        %v3457 = vunpack.c.0.s8 %v3456
        %v3458 = vlaneseq
        %v3459 = vshrl.u32 %v3458, 7
        %v3460 = vsub.s32 %v3457, %v3459
        %v3461 = vrot.slane %v3447, %v3460
        %v3462 = vcombine.low %v3438, %v3454
        %v3463 = vcombine.high %v3438, %v3454
        %v3465 = vunpack.c.l.s4 1934713408
        %v3466 = vunpack.c.0.s8 %v3465
        %v3467 = vlaneseq
        %v3468 = vshrl.u32 %v3467, 7
        %v3469 = vsub.s32 %v3466, %v3468
        %v3470 = vrot.slane %v3462, %v3469
        %v3472 = vunpack.c.l.s4 1934713408
        %v3473 = vunpack.c.0.s8 %v3472
        %v3474 = vlaneseq
        %v3475 = vshrl.u32 %v3474, 7
        %v3476 = vsub.s32 %v3473, %v3475
        %v3477 = vrot.slane %v3463, %v3476
        %v3478 = vcombine.low %v3445, %v3461
        %v3479 = vcombine.high %v3445, %v3461
        %v3481 = vunpack.c.l.s4 1934713408
        %v3482 = vunpack.c.0.s8 %v3481
        %v3483 = vlaneseq
        %v3484 = vshrl.u32 %v3483, 7
        %v3485 = vsub.s32 %v3482, %v3484
        %v3486 = vrot.slane %v3478, %v3485
        %v3488 = vunpack.c.l.s4 1934713408
        %v3489 = vunpack.c.0.s8 %v3488
        %v3490 = vlaneseq
        %v3491 = vshrl.u32 %v3490, 7
        %v3492 = vsub.s32 %v3489, %v3491
        %v3493 = vrot.slane %v3479, %v3492
        %v3494 = vcombine.high %v3470, 0.0
        %v3495 = vcombine.high %v3477, 0.0
        %v3496 = vcombine.high %v3486, 0.0
        %v3497 = vcombine.high %v3493, 0.0
        %v3498 = vcombine.low %v3470, %v3477
        %v3500 = vunpack.c.l.s4 1983009808
        %v3501 = vunpack.c.0.s8 %v3500
        %v3502 = vlaneseq
        %v3503 = vshrl.u32 %v3502, 7
        %v3504 = vsub.s32 %v3501, %v3503
        %v3505 = vrot.slane %v3498, %v3504
        %v3506 = vcombine.low %v3494, %v3495
        %v3508 = vunpack.c.l.s4 1983009808
        %v3509 = vunpack.c.0.s8 %v3508
        %v3510 = vlaneseq
        %v3511 = vshrl.u32 %v3510, 7
        %v3512 = vsub.s32 %v3509, %v3511
        %v3513 = vrot.slane %v3506, %v3512
        %v3514 = vcombine.low %v3486, %v3493
        %v3516 = vunpack.c.l.s4 1983009808
        %v3517 = vunpack.c.0.s8 %v3516
        %v3518 = vlaneseq
        %v3519 = vshrl.u32 %v3518, 7
        %v3520 = vsub.s32 %v3517, %v3519
        %v3521 = vrot.slane %v3514, %v3520
        %v3522 = vcombine.low %v3496, %v3497
        %v3524 = vunpack.c.l.s4 1983009808
        %v3525 = vunpack.c.0.s8 %v3524
        %v3526 = vlaneseq
        %v3527 = vshrl.u32 %v3526, 7
        %v3528 = vsub.s32 %v3525, %v3527
        %v3529 = vrot.slane %v3522, %v3528
        %v3530 = vcombine.low %v3505, %v3513
        %v3531 = vcombine.high %v3505, %v3513
        %v3533 = vunpack.c.l.s4 1934713408
        %v3534 = vunpack.c.0.s8 %v3533
        %v3535 = vlaneseq
        %v3536 = vshrl.u32 %v3535, 7
        %v3537 = vsub.s32 %v3534, %v3536
        %v3538 = vrot.slane %v3530, %v3537
        %v3540 = vunpack.c.l.s4 1934713408
        %v3541 = vunpack.c.0.s8 %v3540
        %v3542 = vlaneseq
        %v3543 = vshrl.u32 %v3542, 7
        %v3544 = vsub.s32 %v3541, %v3543
        %v3545 = vrot.slane %v3531, %v3544
        %v3546 = vcombine.low %v3521, %v3529
        %v3547 = vcombine.high %v3521, %v3529
        %v3549 = vunpack.c.l.s4 1934713408
        %v3550 = vunpack.c.0.s8 %v3549
        %v3551 = vlaneseq
        %v3552 = vshrl.u32 %v3551, 7
        %v3553 = vsub.s32 %v3550, %v3552
        %v3554 = vrot.slane %v3546, %v3553
        %v3556 = vunpack.c.l.s4 1934713408
        %v3557 = vunpack.c.0.s8 %v3556
        %v3558 = vlaneseq
        %v3559 = vshrl.u32 %v3558, 7
        %v3560 = vsub.s32 %v3557, %v3559
        %v3561 = vrot.slane %v3547, %v3560
        %v3562 = vcombine.low %v3538, %v3554
        %v3563 = vcombine.high %v3538, %v3554
        %v3564 = vcombine.low %v3545, %v3561
        %v3565 = vcombine.high %v3545, %v3561
        %3567 = vrot.lane.b32.xlu0 %v3563, 32
        %v3568 = vpop.permute.xlu0 %3567
        %3571 = vrot.lane.b32.xlu0 %v3564, 64
        %v3572 = vpop.permute.xlu0 %3571
        %3575 = vrot.lane.b32.xlu0 %v3565, 96
        %v3576 = vpop.permute.xlu0 %3575
        %v3578 = vsel %vm1588, %v3562, %v3568
        %v3579 = vsel %vm2156, %v3578, %v3572
        %v3580 = vsel %vm2158, %v3579, %v3576
        %v3581 = vpack.c.bf16 %v3580, %v3580
        %v3582 = vld [vmem:[#allocation16] sm:$0xf]
        %v3583 = vld [vmem:[#allocation16 + $0x4] sm:$0xf]
        %v3584 = vld [vmem:[#allocation16 + $0x8] sm:$0xf]
        %v3585 = vld [vmem:[#allocation16 + $0xc] sm:$0xf]
        %v3586 = vld [vmem:[#allocation16 + $0x10] sm:$0xf]
        %v3587 = vld [vmem:[#allocation16 + $0x14] sm:$0xf]
        %v3588 = vld [vmem:[#allocation16 + $0x18] sm:$0xf]
        %v3589 = vld [vmem:[#allocation16 + $0x1c] sm:$0xf]
        %v3590 = vld [vmem:[#allocation16 + $0x20] sm:$0xf]
        %v3591 = vld [vmem:[#allocation16 + $0x24] sm:$0xf]
        %v3592 = vld [vmem:[#allocation16 + $0x28] sm:$0xf]
        %v3593 = vld [vmem:[#allocation16 + $0x2c] sm:$0xf]
        %v3594 = vld [vmem:[#allocation16 + $0x30] sm:$0xf]
        %v3595 = vld [vmem:[#allocation16 + $0x34] sm:$0xf]
        %v3596 = vld [vmem:[#allocation16 + $0x38] sm:$0xf]
        %v3597 = vld [vmem:[#allocation16 + $0x3c] sm:$0xf]
        %v3598 = vld [vmem:[%s13] sm:$0x1]
        %v3600 = vlaneseq
        %v3601 = vshrl.u32 %v3600, 7
        %v3602 = vsub.s32 0, %v3601
        %v3603 = vrot.slane %v3598, %v3602
        %v3621 = vunpack.c.l.b16 %v3582
        %v3622 = vunpack.c.l.b16 %v3583
        %v3623 = vunpack.c.l.b16 %v3584
        %v3624 = vunpack.c.l.b16 %v3585
        %v3625 = vunpack.c.l.b16 %v3586
        %v3626 = vunpack.c.l.b16 %v3587
        %v3627 = vunpack.c.l.b16 %v3588
        %v3628 = vunpack.c.l.b16 %v3589
        %v3629 = vunpack.c.l.b16 %v3590
        %v3630 = vunpack.c.l.b16 %v3591
        %v3631 = vunpack.c.l.b16 %v3592
        %v3632 = vunpack.c.l.b16 %v3593
        %v3633 = vunpack.c.l.b16 %v3594
        %v3634 = vunpack.c.l.b16 %v3595
        %v3635 = vunpack.c.l.b16 %v3596
        %v3636 = vunpack.c.l.b16 %v3597
        %v3637 = vpack.c.b16 %v3622, %v3621
        %v3638 = vpack.c.b16 %v3624, %v3623
        %v3639 = vpack.c.b16 %v3626, %v3625
        %v3640 = vpack.c.b16 %v3628, %v3627
        %v3641 = vpack.c.b16 %v3630, %v3629
        %v3642 = vpack.c.b16 %v3632, %v3631
        %v3643 = vpack.c.b16 %v3634, %v3633
        %v3644 = vpack.c.b16 %v3636, %v3635
        %3653 = vmatprep.subr.bf16.mxu0 0
        %3654 = vmatpush1.bf16.msra.mxu0 %v3637
        %3655 = vmatprep.subr.bf16.mxu0 0
        %3656 = vmatpush1.bf16.msra.mxu0 %v3638
        %3657 = vmatprep.subr.bf16.mxu0 0
        %3658 = vmatpush1.bf16.msra.mxu0 %v3639
        %3659 = vmatprep.subr.bf16.mxu0 0
        %3660 = vmatpush1.bf16.msra.mxu0 %v3640
        %3661 = vmatprep.subr.bf16.mxu0 0
        %3662 = vmatpush1.bf16.msra.mxu0 %v3641
        %3663 = vmatprep.subr.bf16.mxu0 0
        %3664 = vmatpush1.bf16.msra.mxu0 %v3642
        %3665 = vmatprep.subr.bf16.mxu0 0
        %3666 = vmatpush1.bf16.msra.mxu0 %v3643
        %3667 = vmatprep.subr.bf16.mxu0 0
        %3668 = vmatpush1.bf16.msra.mxu0 %v3644
        %3669 = vmatprep.subr.bf16.mxu0 0
        %3670 = vmatpush1.bf16.msra.mxu0 0
        %3671 = vmatprep.subr.bf16.mxu0 0
        %3672 = vmatpush1.bf16.msra.mxu0 0
        %3673 = vmatprep.subr.bf16.mxu0 0
        %3674 = vmatpush1.bf16.msra.mxu0 0
        %3675 = vmatprep.subr.bf16.mxu0 0
        %3676 = vmatpush1.bf16.msra.mxu0 0
        %3677 = vmatprep.subr.bf16.mxu0 0
        %3678 = vmatpush1.bf16.msra.mxu0 0
        %3679 = vmatprep.subr.bf16.mxu0 0
        %3680 = vmatpush1.bf16.msra.mxu0 0
        %3681 = vmatprep.subr.bf16.mxu0 0
        %3682 = vmatpush1.bf16.msra.mxu0 0
        %3683 = vmatprep.subr.bf16.mxu0 0
        %3684 = vmatpush1.bf16.msra.mxu0 0
        %3685 = vmatprep.mubr.bf16.mxu0 0
        %3686 = vmatmul.mubr.bf16.gmra.mrb[0].mxu0 %v3581
        %v3687 = vpop.f32.mrb[0].mxu0
        %v3688 = vadd.f32 %v3603, %v3687
        %v3689 = vpop.f32.mrb[0].mxu0
        %v3690 = vpop.f32.mrb[0].mxu0
        %v3691 = vpop.f32.mrb[0].mxu0
        %3692 = vdwg.mxu0
        %v3693 = vadd.f32 %v2272, %v3688
        %v3694 = vld [vmem:[%s18 + $0x2] sm:$0x1]
        %v3695 = vld [vmem:[%s19 + $0x2] sm:$0x1]
        %3696 = vadd.xlane.f32.xlu0 %v3693
        %v3697 = vpop.xlane.xlu0 %3696
        %v3698 = vmul.f32 %v3697, %v858
        %v3699 = vsub.f32 %v3693, %v3698
        %v3700 = vmul.f32 %v3699, %v3699
        %3701 = vadd.xlane.f32.xlu0 %v3700
        %v3702 = vpop.xlane.xlu0 %3701
        %v3703 = vmul.f32 %v3702, %v858
        %v3704 = vadd.f32 %v3703, 1e-05
        %v3705 = vrsqrt.pop %v3704
        %v3706 = vmul.f32 %v3699, %v3705
        %v3707 = vlaneseq
        %v3708 = vshrl.u32 %v3707, 7
        %v3709 = vsub.s32 0, %v3708
        %v3710 = vrot.slane %v3694, %v3709
        %v3711 = vmul.f32 %v3706, %v3710
        %v3712 = vlaneseq
        %v3713 = vshrl.u32 %v3712, 7
        %v3714 = vsub.s32 0, %v3713
        %v3715 = vrot.slane %v3695, %v3714
        %v3716 = vadd.f32 %v3711, %v3715
        %v3717 = vpack.c.bf16 %v3716, %v3716
        %v3718 = vld [vmem:[#allocation17] sm:$0xff]
        %v3719 = vld [vmem:[#allocation17 + $0x8] sm:$0xff]
        %v3720 = vld [vmem:[#allocation17 + $0x10] sm:$0xff]
        %v3721 = vld [vmem:[#allocation17 + $0x18] sm:$0xff]
        %v3722 = vld [vmem:[#allocation17 + $0x20] sm:$0xff]
        %v3723 = vld [vmem:[#allocation17 + $0x28] sm:$0xff]
        %v3724 = vld [vmem:[#allocation17 + $0x30] sm:$0xff]
        %v3725 = vld [vmem:[#allocation17 + $0x38] sm:$0xff]
        %v3726 = vld [vmem:[#allocation17 + $0x40] sm:$0xff]
        %v3727 = vld [vmem:[#allocation17 + $0x48] sm:$0xff]
        %v3728 = vld [vmem:[#allocation17 + $0x50] sm:$0xff]
        %v3729 = vld [vmem:[#allocation17 + $0x58] sm:$0xff]
        %v3730 = vld [vmem:[#allocation17 + $0x60] sm:$0xff]
        %v3731 = vld [vmem:[#allocation17 + $0x68] sm:$0xff]
        %v3732 = vld [vmem:[#allocation17 + $0x70] sm:$0xff]
        %v3733 = vld [vmem:[#allocation17 + $0x78] sm:$0xff]
        %v3734 = vld [vmem:[%s15] sm:$0x3]
        %v3736 = vlaneseq
        %v3737 = vshrl.u32 %v3736, 7
        %v3738 = vsub.s32 0, %v3737
        %v3739 = vrot.slane %v3734, %v3738
        %v3740 = vlaneseq
        %v3741 = vshrl.u32 %v3740, 7
        %v3742 = vsub.s32 1, %v3741
        %v3743 = vrot.slane %v3734, %v3742
        %v3762 = vunpack.c.l.b16 %v3718
        %v3763 = vunpack.c.h.b16 %v3718
        %v3764 = vunpack.c.l.b16 %v3719
        %v3765 = vunpack.c.h.b16 %v3719
        %v3766 = vunpack.c.l.b16 %v3720
        %v3767 = vunpack.c.h.b16 %v3720
        %v3768 = vunpack.c.l.b16 %v3721
        %v3769 = vunpack.c.h.b16 %v3721
        %v3770 = vunpack.c.l.b16 %v3722
        %v3771 = vunpack.c.h.b16 %v3722
        %v3772 = vunpack.c.l.b16 %v3723
        %v3773 = vunpack.c.h.b16 %v3723
        %v3774 = vunpack.c.l.b16 %v3724
        %v3775 = vunpack.c.h.b16 %v3724
        %v3776 = vunpack.c.l.b16 %v3725
        %v3777 = vunpack.c.h.b16 %v3725
        %v3778 = vunpack.c.l.b16 %v3726
        %v3779 = vunpack.c.h.b16 %v3726
        %v3780 = vunpack.c.l.b16 %v3727
        %v3781 = vunpack.c.h.b16 %v3727
        %v3782 = vunpack.c.l.b16 %v3728
        %v3783 = vunpack.c.h.b16 %v3728
        %v3784 = vunpack.c.l.b16 %v3729
        %v3785 = vunpack.c.h.b16 %v3729
        %v3786 = vunpack.c.l.b16 %v3730
        %v3787 = vunpack.c.h.b16 %v3730
        %v3788 = vunpack.c.l.b16 %v3731
        %v3789 = vunpack.c.h.b16 %v3731
        %v3790 = vunpack.c.l.b16 %v3732
        %v3791 = vunpack.c.h.b16 %v3732
        %v3792 = vunpack.c.l.b16 %v3733
        %v3793 = vunpack.c.h.b16 %v3733
        %v3794 = vpack.c.b16 %v3764, %v3762
        %v3795 = vpack.c.b16 %v3765, %v3763
        %v3796 = vpack.c.b16 %v3768, %v3766
        %v3797 = vpack.c.b16 %v3769, %v3767
        %v3798 = vpack.c.b16 %v3772, %v3770
        %v3799 = vpack.c.b16 %v3773, %v3771
        %v3800 = vpack.c.b16 %v3776, %v3774
        %v3801 = vpack.c.b16 %v3777, %v3775
        %v3802 = vpack.c.b16 %v3780, %v3778
        %v3803 = vpack.c.b16 %v3781, %v3779
        %v3804 = vpack.c.b16 %v3784, %v3782
        %v3805 = vpack.c.b16 %v3785, %v3783
        %v3806 = vpack.c.b16 %v3788, %v3786
        %v3807 = vpack.c.b16 %v3789, %v3787
        %v3808 = vpack.c.b16 %v3792, %v3790
        %v3809 = vpack.c.b16 %v3793, %v3791
        %3826 = vmatprep.subr.bf16.mxu0 %v3795
        %3827 = vmatpush1.bf16.msra.mxu0 %v3794
        %3828 = vmatprep.subr.bf16.mxu0 %v3797
        %3829 = vmatpush1.bf16.msra.mxu0 %v3796
        %3830 = vmatprep.subr.bf16.mxu0 %v3799
        %3831 = vmatpush1.bf16.msra.mxu0 %v3798
        %3832 = vmatprep.subr.bf16.mxu0 %v3801
        %3833 = vmatpush1.bf16.msra.mxu0 %v3800
        %3834 = vmatprep.subr.bf16.mxu0 %v3803
        %3835 = vmatpush1.bf16.msra.mxu0 %v3802
        %3836 = vmatprep.subr.bf16.mxu0 %v3805
        %3837 = vmatpush1.bf16.msra.mxu0 %v3804
        %3838 = vmatprep.subr.bf16.mxu0 %v3807
        %3839 = vmatpush1.bf16.msra.mxu0 %v3806
        %3840 = vmatprep.subr.bf16.mxu0 %v3809
        %3841 = vmatpush1.bf16.msra.mxu0 %v3808
        %3842 = vmatprep.subr.bf16.mxu0 0
        %3843 = vmatpush1.bf16.msra.mxu0 0
        %3844 = vmatprep.subr.bf16.mxu0 0
        %3845 = vmatpush1.bf16.msra.mxu0 0
        %3846 = vmatprep.subr.bf16.mxu0 0
        %3847 = vmatpush1.bf16.msra.mxu0 0
        %3848 = vmatprep.subr.bf16.mxu0 0
        %3849 = vmatpush1.bf16.msra.mxu0 0
        %3850 = vmatprep.subr.bf16.mxu0 0
        %3851 = vmatpush1.bf16.msra.mxu0 0
        %3852 = vmatprep.subr.bf16.mxu0 0
        %3853 = vmatpush1.bf16.msra.mxu0 0
        %3854 = vmatprep.subr.bf16.mxu0 0
        %3855 = vmatpush1.bf16.msra.mxu0 0
        %3856 = vmatprep.subr.bf16.mxu0 0
        %3857 = vmatpush1.bf16.msra.mxu0 0
        %3858 = vmatprep.mubr.bf16.mxu0 0
        %3859 = vmatmul.mubr.bf16.gmra.mrb[0].mxu0 %v3717
        %v3860 = vpop.f32.mrb[0].mxu0
        %v3861 = vadd.f32 %v3739, %v3860
        %v3862 = vpop.f32.mrb[0].mxu0
        %v3863 = vadd.f32 %v3743, %v3862
        %v3864 = vpop.f32.mrb[0].mxu0
        %v3865 = vpop.f32.mrb[0].mxu0
        %3866 = vdwg.mxu0
        %v3867 = vmax.f32 %v3861, 0.0
        %v3868 = vmax.f32 %v3863, 0.0
        %v3869 = vpack.c.bf16 %v3867, %v3867
        %v3870 = vpack.c.bf16 %v3868, %v3868
        %v3871 = vld [vmem:[#allocation19] sm:$0xf]
        %v3872 = vld [vmem:[#allocation19 + $0x4] sm:$0xf]
        %v3873 = vld [vmem:[#allocation19 + $0x8] sm:$0xf]
        %v3874 = vld [vmem:[#allocation19 + $0xc] sm:$0xf]
        %v3875 = vld [vmem:[#allocation19 + $0x10] sm:$0xf]
        %v3876 = vld [vmem:[#allocation19 + $0x14] sm:$0xf]
        %v3877 = vld [vmem:[#allocation19 + $0x18] sm:$0xf]
        %v3878 = vld [vmem:[#allocation19 + $0x1c] sm:$0xf]
        %v3879 = vld [vmem:[#allocation19 + $0x20] sm:$0xf]
        %v3880 = vld [vmem:[#allocation19 + $0x24] sm:$0xf]
        %v3881 = vld [vmem:[#allocation19 + $0x28] sm:$0xf]
        %v3882 = vld [vmem:[#allocation19 + $0x2c] sm:$0xf]
        %v3883 = vld [vmem:[#allocation19 + $0x30] sm:$0xf]
        %v3884 = vld [vmem:[#allocation19 + $0x34] sm:$0xf]
        %v3885 = vld [vmem:[#allocation19 + $0x38] sm:$0xf]
        %v3886 = vld [vmem:[#allocation19 + $0x3c] sm:$0xf]
        %v3887 = vld [vmem:[#allocation19 + $0x40] sm:$0xf]
        %v3888 = vld [vmem:[#allocation19 + $0x44] sm:$0xf]
        %v3889 = vld [vmem:[#allocation19 + $0x48] sm:$0xf]
        %v3890 = vld [vmem:[#allocation19 + $0x4c] sm:$0xf]
        %v3891 = vld [vmem:[#allocation19 + $0x50] sm:$0xf]
        %v3892 = vld [vmem:[#allocation19 + $0x54] sm:$0xf]
        %v3893 = vld [vmem:[#allocation19 + $0x58] sm:$0xf]
        %v3894 = vld [vmem:[#allocation19 + $0x5c] sm:$0xf]
        %v3895 = vld [vmem:[#allocation19 + $0x60] sm:$0xf]
        %v3896 = vld [vmem:[#allocation19 + $0x64] sm:$0xf]
        %v3897 = vld [vmem:[#allocation19 + $0x68] sm:$0xf]
        %v3898 = vld [vmem:[#allocation19 + $0x6c] sm:$0xf]
        %v3899 = vld [vmem:[#allocation19 + $0x70] sm:$0xf]
        %v3900 = vld [vmem:[#allocation19 + $0x74] sm:$0xf]
        %v3901 = vld [vmem:[#allocation19 + $0x78] sm:$0xf]
        %v3902 = vld [vmem:[#allocation19 + $0x7c] sm:$0xf]
        %v3903 = vld [vmem:[%s17] sm:$0x1]
        %v3905 = vlaneseq
        %v3906 = vshrl.u32 %v3905, 7
        %v3907 = vsub.s32 0, %v3906
        %v3908 = vrot.slane %v3903, %v3907
        %v3942 = vunpack.c.l.b16 %v3871
        %v3943 = vunpack.c.l.b16 %v3872
        %v3944 = vunpack.c.l.b16 %v3873
        %v3945 = vunpack.c.l.b16 %v3874
        %v3946 = vunpack.c.l.b16 %v3875
        %v3947 = vunpack.c.l.b16 %v3876
        %v3948 = vunpack.c.l.b16 %v3877
        %v3949 = vunpack.c.l.b16 %v3878
        %v3950 = vunpack.c.l.b16 %v3879
        %v3951 = vunpack.c.l.b16 %v3880
        %v3952 = vunpack.c.l.b16 %v3881
        %v3953 = vunpack.c.l.b16 %v3882
        %v3954 = vunpack.c.l.b16 %v3883
        %v3955 = vunpack.c.l.b16 %v3884
        %v3956 = vunpack.c.l.b16 %v3885
        %v3957 = vunpack.c.l.b16 %v3886
        %v3958 = vunpack.c.l.b16 %v3887
        %v3959 = vunpack.c.l.b16 %v3888
        %v3960 = vunpack.c.l.b16 %v3889
        %v3961 = vunpack.c.l.b16 %v3890
        %v3962 = vunpack.c.l.b16 %v3891
        %v3963 = vunpack.c.l.b16 %v3892
        %v3964 = vunpack.c.l.b16 %v3893
        %v3965 = vunpack.c.l.b16 %v3894
        %v3966 = vunpack.c.l.b16 %v3895
        %v3967 = vunpack.c.l.b16 %v3896
        %v3968 = vunpack.c.l.b16 %v3897
        %v3969 = vunpack.c.l.b16 %v3898
        %v3970 = vunpack.c.l.b16 %v3899
        %v3971 = vunpack.c.l.b16 %v3900
        %v3972 = vunpack.c.l.b16 %v3901
        %v3973 = vunpack.c.l.b16 %v3902
        %v3974 = vpack.c.b16 %v3943, %v3942
        %v3975 = vpack.c.b16 %v3945, %v3944
        %v3976 = vpack.c.b16 %v3947, %v3946
        %v3977 = vpack.c.b16 %v3949, %v3948
        %v3978 = vpack.c.b16 %v3951, %v3950
        %v3979 = vpack.c.b16 %v3953, %v3952
        %v3980 = vpack.c.b16 %v3955, %v3954
        %v3981 = vpack.c.b16 %v3957, %v3956
        %v3982 = vpack.c.b16 %v3959, %v3958
        %v3983 = vpack.c.b16 %v3961, %v3960
        %v3984 = vpack.c.b16 %v3963, %v3962
        %v3985 = vpack.c.b16 %v3965, %v3964
        %v3986 = vpack.c.b16 %v3967, %v3966
        %v3987 = vpack.c.b16 %v3969, %v3968
        %v3988 = vpack.c.b16 %v3971, %v3970
        %v3989 = vpack.c.b16 %v3973, %v3972
        %4006 = vmatprep.subr.bf16.mxu0 0
        %4007 = vmatpush1.bf16.msra.mxu0 %v3974
        %4008 = vmatprep.subr.bf16.mxu0 0
        %4009 = vmatpush1.bf16.msra.mxu0 %v3975
        %4010 = vmatprep.subr.bf16.mxu0 0
        %4011 = vmatpush1.bf16.msra.mxu0 %v3976
        %4012 = vmatprep.subr.bf16.mxu0 0
        %4013 = vmatpush1.bf16.msra.mxu0 %v3977
        %4014 = vmatprep.subr.bf16.mxu0 0
        %4015 = vmatpush1.bf16.msra.mxu0 %v3978
        %4016 = vmatprep.subr.bf16.mxu0 0
        %4017 = vmatpush1.bf16.msra.mxu0 %v3979
        %4018 = vmatprep.subr.bf16.mxu0 0
        %4019 = vmatpush1.bf16.msra.mxu0 %v3980
        %4020 = vmatprep.subr.bf16.mxu0 0
        %4021 = vmatpush1.bf16.msra.mxu0 %v3981
        %4022 = vmatprep.subr.bf16.mxu0 0
        %4023 = vmatpush1.bf16.msra.mxu0 %v3982
        %4024 = vmatprep.subr.bf16.mxu0 0
        %4025 = vmatpush1.bf16.msra.mxu0 %v3983
        %4026 = vmatprep.subr.bf16.mxu0 0
        %4027 = vmatpush1.bf16.msra.mxu0 %v3984
        %4028 = vmatprep.subr.bf16.mxu0 0
        %4029 = vmatpush1.bf16.msra.mxu0 %v3985
        %4030 = vmatprep.subr.bf16.mxu0 0
        %4031 = vmatpush1.bf16.msra.mxu0 %v3986
        %4032 = vmatprep.subr.bf16.mxu0 0
        %4033 = vmatpush1.bf16.msra.mxu0 %v3987
        %4034 = vmatprep.subr.bf16.mxu0 0
        %4035 = vmatpush1.bf16.msra.mxu0 %v3988
        %4036 = vmatprep.subr.bf16.mxu0 0
        %4037 = vmatpush1.bf16.msra.mxu0 %v3989
        %4038 = vmatprep.mubr.bf16.mxu0 %v3870
        %4039 = vmatmul.mubr.bf16.gmra.mrb[0].mxu0 %v3869
        %v4040 = vpop.f32.mrb[0].mxu0
        %v4041 = vadd.f32 %v3908, %v4040
        %v4042 = vpop.f32.mrb[0].mxu0
        %v4043 = vpop.f32.mrb[0].mxu0
        %v4044 = vpop.f32.mrb[0].mxu0
        %4045 = vdwg.mxu0
        %v4046 = vadd.f32 %v3693, %v4041
        %4047 = vst [vmem:[%s850] sm:$0xff] %v4046
        %s4048 = sand.u32 %s494, 1
        %s4049 = scalar_lea.sflag [#allocation4], %s4048
        %s4050 = sand.u32 %s494, 1
        %s4051 = smul.addr %s4050, 8
        %s4052 = scalar_lea.vmem [#allocation20], %s4051
        // Predicated region
        $region145: #{tpu_custom_call.1} parent=99 // pred_check
          %p4053 = pneg %p504
        $region146: #{tpu_custom_call.1} parent=99 // pred_check_branch
          %4055 = sbr.rel (%p4053) target = $region148
        $region147: #{tpu_custom_call.1} parent=99 // pred_region
          %s4057 = ssub.s32 128, 128
          %4058 = vsyncadd %s4049, %s4057
          %s4059 = smul.addr %s46, 128
          %s4060 = scalar_lea.hbm %s20, %s4059
          %s4062 = sshll.u32 %s4052, 4
          %s4063 = int_to_ptr.vmem [resolvable:$true] %s4062
          %4065 = dma.vmem_to_hbm [thread:$0]  %s4063, 128, %s4060, %s4049
        $region148: #{tpu_custom_call.1} parent=99 // pred_fallthru
          _
      $region100: #{tpu_custom_call.1} parent=5 // pred_fallthru
        _
      %p4066 = scmp.le.s32.totalorder 2, %s41
      // Predicated region
      $region149: #{tpu_custom_call.1} parent=5 // pred_check
        %p4067 = pneg %p4066
      $region150: #{tpu_custom_call.1} parent=5 // pred_check_branch
        %4069 = sbr.rel (%p4067) target = $region152
      $region151: #{tpu_custom_call.1} parent=5 // pred_region
        %s4070 = ssub.s32 %s41, 2
        // Predicated region
        $region153: #{tpu_custom_call.1} parent=151 // pred_check
          %p4071 = pneg %p510
        $region154: #{tpu_custom_call.1} parent=151 // pred_check_branch
          %4073 = sbr.rel (%p4071) target = $region156
        $region155: #{tpu_custom_call.1} parent=151 // pred_region
          %s4074 = sand.u32 %s495, 1
          %s4075 = scalar_lea.sflag [#allocation4], %s4074
          %s4076 = sand.u32 %s495, 1
          %s4077 = smul.addr %s4076, 8
          %s4078 = scalar_lea.vmem [#allocation20], %s4077
          %4079 = dma.done %s4075, 128
        $region156: #{tpu_custom_call.1} parent=151 // pred_fallthru
          _
      $region152: #{tpu_custom_call.1} parent=5 // pred_fallthru
        _
    $region6: #{tpu_custom_call.1} parent=1 // loop_footer
      %s45 = sadd.s32 1, %s41
    $region7: #{tpu_custom_call.1} parent=1 // loop_footer_branch
      %40 = sbr.rel target = $region3
    $region8: #{tpu_custom_call.1} parent=1 // loop_exit
      _
    %4080 = vsyncpa [#allocation3], 1
    %s4081 = scalar_lea.sflag [#allocation3], 1
    %4082 = vsyncpa %s4081, 1
    %4083 = vsyncpa [#allocation6], 1
    %s4084 = scalar_lea.sflag [#allocation6], 1
    %4085 = vsyncpa %s4084, 1
    %4086 = vsyncpa [#allocation9], 1
    %s4087 = scalar_lea.sflag [#allocation9], 1
    %4088 = vsyncpa %s4087, 1
    %4089 = vsyncpa [#allocation12], 1
    %4090 = vsyncpa [#allocation15], 1
    %4091 = vsyncpa [#allocation18], 1
    %4092 = vsyncpa [#allocation4], 1
    %s4093 = scalar_lea.sflag [#allocation4], 1
    %4094 = vsyncpa %s4093, 1

</llo_original>
